<compile_context>
chip_gen: v7x
topology: tpu7x:2x2x1
jax: 0.10.0
libtpu: 0.0.40
codegen_flags: <defaults>
</compile_context>

<pallas_src>
import functools

import jax
import jax.numpy as jnp
from jax import lax
from jax.experimental import pallas as pl
from jax.experimental.pallas import tpu as pltpu


def nar_kernel(x_ref, w1_ref, b1_ref, w2_ref, b2_ref,
               wih_ref, whh_ref, bi_ref, bhn_ref, wo_ref, bo_ref,
               out_ref, *, seq_len, batch, embed):
    f32 = jnp.float32
    bf16 = jnp.bfloat16
    E = embed

    x = x_ref[0]                                    # (N, E) bf16, N = seq_len*batch

    # --- reasoning_layers: Linear(E,2E) -> ReLU -> Linear(2E,E) -> Tanh ---
    h1 = jnp.maximum(
        jnp.dot(x, w1_ref[...], preferred_element_type=f32) + b1_ref[...], 0.0)
    reasoned = jnp.tanh(
        jnp.dot(h1.astype(bf16), w2_ref[...], preferred_element_type=f32)
        + b2_ref[...])
    r_b = reasoned.astype(bf16)

    # --- GRU input-side gate projections: ONE fused (N,E)x(E,3E) matmul ---
    # bi_ref already holds [(b_ir+b_hr) | (b_iz+b_hz) | b_in] (folded in wrapper).
    gates = jnp.dot(r_b, wih_ref[...], preferred_element_type=f32) + bi_ref[...]

    # Hoist recurrent weights / bias out of the time loop (loaded once).
    whh = whh_ref[...]                              # (E, 3E) bf16, cols [r|z|n]
    bhn = bhn_ref[...]                              # (1, E) f32

    h = jnp.zeros((batch, E), f32)                  # vreg-resident hidden state
    hs = []

    # --- GRU recurrence: static unroll over the short fixed seq_len ---
    for t in range(seq_len):
        lo = t * batch                              # batch is a multiple of 8 -> aligned
        g_t = gates[lo:lo + batch, :]               # (Bp, 3E), tile-aligned slice
        # Single fused recurrent matmul per step (bf16 MXU, f32 accumulation).
        hg = jnp.dot(h.astype(bf16), whh, preferred_element_type=f32)  # (Bp, 3E)
        r = jax.nn.sigmoid(g_t[:, 0:E] + hg[:, 0:E])
        z = jax.nn.sigmoid(g_t[:, E:2 * E] + hg[:, E:2 * E])
        n = jnp.tanh(g_t[:, 2 * E:3 * E] + r * (hg[:, 2 * E:3 * E] + bhn))
        h = (1.0 - z) * n + z * h
        hs.append(h)

    # --- output_layer: single fused Linear(E, E) over all timesteps ---
    gru_out = jnp.concatenate(hs, axis=0)           # (N, E) f32, 8-row aligned pieces
    out = (jnp.dot(gru_out.astype(bf16), wo_ref[...],
                   preferred_element_type=f32) + bo_ref[...])
    out_ref[0] = out.astype(out_ref.dtype)


def _const_spec(a):
    nd = a.ndim
    return pl.BlockSpec(a.shape, lambda c, _nd=nd: (0,) * _nd)


def _default_num_chunks(batch):
    """2-way batch sharding only where a second TensorCore exists (v7x) AND
    each chunk would still carry >= 8 real batch rows (full sublane groups)."""
    try:
        kind = jax.devices()[0].device_kind.lower()
    except Exception:
        kind = ""
    if "v7" in kind and batch % 2 == 0 and (batch // 2) >= 8:
        return 2
    return 1


def nar_forward(x, params, *, num_chunks=None):
    B, S, E = x.shape
    f32, bf16 = jnp.float32, jnp.bfloat16

    if num_chunks is None:
        num_chunks = _default_num_chunks(B)

    # Per-chunk batch padded up to a multiple of 8 sublanes so every
    # per-timestep slice / MXU LHS is tile-aligned.
    Bc = -(-B // num_chunks)
    Bp = -(-Bc // 8) * 8
    B_pad = num_chunks * Bp
    N = S * Bp

    if B_pad != B:
        x = jnp.pad(x, ((0, B_pad - B), (0, 0), (0, 0)))

    # --- weights: (in, out) layout, bf16 for MXU-fed matmuls, f32 biases ---
    w1 = params["w1"].T.astype(bf16)                # (E, 2E)
    b1 = params["b1"][None, :].astype(f32)          # (1, 2E)
    w2 = params["w2"].T.astype(bf16)                # (2E, E)
    b2 = params["b2"][None, :].astype(f32)          # (1, E)

    # GRU: PyTorch weight_ih/weight_hh are (3E, E) row-blocks [r; z; n];
    # transposing gives the fused (E, 3E) column-block form [r | z | n].
    wih_f = params["wih"].T.astype(bf16)            # (E, 3E)
    whh_f = params["whh"].T.astype(bf16)            # (E, 3E) -- bf16 MXU recurrence
    bih = params["bih"].astype(f32)
    bhh = params["bhh"].astype(f32)
    # Fold hidden-side r/z biases into the input-side biases; keep b_hn apart
    # (it lives inside the r * (h@W_hn + b_hn) term).
    bi_f = jnp.concatenate([bih[:2 * E] + bhh[:2 * E], bih[2 * E:]])[None, :]  # (1, 3E)
    bhn = bhh[2 * E:][None, :]                      # (1, E)

    wo = params["wo"].T.astype(bf16)                # (E, E)
    bo = params["bo"][None, :].astype(f32)          # (1, E)

    # --- activations: (B_pad,S,E) -> (num_chunks, S*Bp, E), row = t*Bp + b ---
    xs = x.reshape(num_chunks, Bp, S, E)
    xs = jnp.transpose(xs, (0, 2, 1, 3)).reshape(num_chunks, N, E).astype(bf16)

    kernel = functools.partial(nar_kernel, seq_len=S, batch=Bp, embed=E)

    # NOTE: constant weight specs could be single-buffered to save VMEM
    # (pipeline_mode=pl.Buffered(1)); irrelevant at these sizes / grid=(1,).
    out = pl.pallas_call(
        kernel,
        out_shape=jax.ShapeDtypeStruct((num_chunks, N, E), f32),
        grid_spec=pltpu.PrefetchScalarGridSpec(
            num_scalar_prefetch=0,
            grid=(num_chunks,),
            in_specs=[
                pl.BlockSpec((1, N, E), lambda c: (c, 0, 0)),
                _const_spec(w1), _const_spec(b1),
                _const_spec(w2), _const_spec(b2),
                _const_spec(wih_f), _const_spec(whh_f),
                _const_spec(bi_f), _const_spec(bhn),
                _const_spec(wo), _const_spec(bo),
            ],
            out_specs=pl.BlockSpec((1, N, E), lambda c: (c, 0, 0)),
        ),
        compiler_params=pltpu.CompilerParams(
            dimension_semantics=("parallel",)),
    )(xs, w1, b1, w2, b2, wih_f, whh_f, bi_f, bhn, wo, bo)

    # --- back to (B, S, E): drop batch padding rows ---
    out = out.reshape(num_chunks, S, Bp, E)
    out = jnp.transpose(out, (0, 2, 1, 3)).reshape(B_pad, S, E)
    return out[:B]


def nar_reference(x, params):
    """Pure-JAX f32 reference mirroring the PyTorch NAR.forward."""
    B, S, E = x.shape
    h1 = jnp.maximum(x @ params["w1"].T + params["b1"], 0.0)
    reasoned = jnp.tanh(h1 @ params["w2"].T + params["b2"])

    def gru_step(h, xt):
        gx = xt @ params["wih"].T + params["bih"]
        gh = h @ params["whh"].T + params["bhh"]
        r = jax.nn.sigmoid(gx[:, :E] + gh[:, :E])
        z = jax.nn.sigmoid(gx[:, E:2 * E] + gh[:, E:2 * E])
        n = jnp.tanh(gx[:, 2 * E:] + r * gh[:, 2 * E:])
        hn = (1.0 - z) * n + z * h
        return hn, hn

    _, outs = lax.scan(gru_step, jnp.zeros((B, E), jnp.float32),
                       jnp.swapaxes(reasoned, 0, 1))
    gru_out = jnp.swapaxes(outs, 0, 1)
    return gru_out @ params["wo"].T + params["bo"]


def make_params(key, E):
    ks = jax.random.split(key, 10)
    s = 0.1
    return {
        # reasoning_layers
        "w1": s * jax.random.normal(ks[0], (2 * E, E), jnp.float32),
        "b1": s * jax.random.normal(ks[1], (2 * E,), jnp.float32),
        "w2": s * jax.random.normal(ks[2], (E, 2 * E), jnp.float32),
        "b2": s * jax.random.normal(ks[3], (E,), jnp.float32),
        # GRU (PyTorch layout: weight_ih (3E,E), weight_hh (3E,E), gate order r,z,n)
        "wih": s * jax.random.normal(ks[4], (3 * E, E), jnp.float32),
        "whh": s * jax.random.normal(ks[5], (3 * E, E), jnp.float32),
        "bih": s * jax.random.normal(ks[6], (3 * E,), jnp.float32),
        "bhh": s * jax.random.normal(ks[7], (3 * E,), jnp.float32),
        # output_layer
        "wo": s * jax.random.normal(ks[8], (E, E), jnp.float32),
        "bo": s * jax.random.normal(ks[9], (E,), jnp.float32),
    }


if __name__ == "__main__":
    # Small shapes consistent with NAR(embed_dim=256); E is a multiple of 128
    # so every load/store is lane-dense.
    B, S, E = 2, 8, 256
    key = jax.random.PRNGKey(0)
    kx, kp = jax.random.split(key)
    x = jax.random.normal(kx, (B, S, E), jnp.float32)
    params = make_params(kp, E)

    out = jax.block_until_ready(jax.jit(nar_forward)(x, params))
    ref = jax.block_until_ready(nar_reference(x, params))

    assert out.shape == (B, S, E)
    err = float(jnp.max(jnp.abs(out - ref)))
    # bf16 MXU inputs (f32 accumulation) on all matmuls, including the
    # recurrent path => small, bounded deviation from the pure-f32 reference.
    assert err < 1e-1, f"mismatch vs reference: max abs err = {err}"
    print("KERNEL_OK")
</pallas_src>

<mosaic_0001>
module attributes {stable_mosaic.version = 11 : i64} {
  func.func @nar_kernel(%arg0: i32, %arg1: memref<1x64x256xbf16, #tpu.memory_space<vmem>>, %arg2: memref<256x512xbf16, #tpu.memory_space<vmem>>, %arg3: memref<1x512xf32, #tpu.memory_space<vmem>>, %arg4: memref<512x256xbf16, #tpu.memory_space<vmem>>, %arg5: memref<1x256xf32, #tpu.memory_space<vmem>>, %arg6: memref<256x768xbf16, #tpu.memory_space<vmem>>, %arg7: memref<256x768xbf16, #tpu.memory_space<vmem>>, %arg8: memref<1x768xf32, #tpu.memory_space<vmem>>, %arg9: memref<1x256xf32, #tpu.memory_space<vmem>>, %arg10: memref<256x256xbf16, #tpu.memory_space<vmem>>, %arg11: memref<1x256xf32, #tpu.memory_space<vmem>>, %arg12: memref<1x64x256xf32, #tpu.memory_space<vmem>>) attributes {dimension_semantics = [#tpu.dimension_semantics<parallel>], iteration_bounds = array<i64: 1>, scalar_prefetch = 0 : i64, scratch_operands = 0 : i64, tpu.core_type = #tpu.core_type<tc>, window_params = [{transform_indices = @transform_0, window_bounds = array<i64: 1, 64, 256>}, {pipeline_mode = #tpu.pipeline_mode<synchronous>, transform_indices = @transform_1, window_bounds = array<i64: 256, 512>}, {pipeline_mode = #tpu.pipeline_mode<synchronous>, transform_indices = @transform_2, window_bounds = array<i64: 1, 512>}, {pipeline_mode = #tpu.pipeline_mode<synchronous>, transform_indices = @transform_3, window_bounds = array<i64: 512, 256>}, {pipeline_mode = #tpu.pipeline_mode<synchronous>, transform_indices = @transform_4, window_bounds = array<i64: 1, 256>}, {pipeline_mode = #tpu.pipeline_mode<synchronous>, transform_indices = @transform_5, window_bounds = array<i64: 256, 768>}, {pipeline_mode = #tpu.pipeline_mode<synchronous>, transform_indices = @transform_6, window_bounds = array<i64: 256, 768>}, {pipeline_mode = #tpu.pipeline_mode<synchronous>, transform_indices = @transform_7, window_bounds = array<i64: 1, 768>}, {pipeline_mode = #tpu.pipeline_mode<synchronous>, transform_indices = @transform_8, window_bounds = array<i64: 1, 256>}, {pipeline_mode = #tpu.pipeline_mode<synchronous>, transform_indices = @transform_9, window_bounds = array<i64: 256, 256>}, {pipeline_mode = #tpu.pipeline_mode<synchronous>, transform_indices = @transform_10, window_bounds = array<i64: 1, 256>}, {transform_indices = @transform_11, window_bounds = array<i64: 1, 64, 256>}]} {
    %c0 = arith.constant 0 : index
    %c0_0 = arith.constant 0 : index
    %c0_1 = arith.constant 0 : index
    %0 = vector.load %arg1[%c0, %c0_0, %c0_1] : memref<1x64x256xbf16, #tpu.memory_space<vmem>>, vector<1x64x256xbf16>
    %1 = vector.shape_cast %0 : vector<1x64x256xbf16> to vector<64x256xbf16>
    %c0_2 = arith.constant 0 : index
    %c0_3 = arith.constant 0 : index
    %2 = vector.load %arg2[%c0_2, %c0_3] : memref<256x512xbf16, #tpu.memory_space<vmem>>, vector<256x512xbf16>
    %cst = arith.constant dense<0.000000e+00> : vector<64x512xf32>
    %3 = tpu.matmul %1, %2, %cst {dimension_numbers = #tpu.dot_dimension_numbers<[1], [0], [0], [1], [0, 0, 1, 1], [], []>} : vector<64x256xbf16>, vector<256x512xbf16>, vector<64x512xf32> -> vector<64x512xf32>
    %c0_4 = arith.constant 0 : index
    %c0_5 = arith.constant 0 : index
    %4 = vector.load %arg3[%c0_4, %c0_5] : memref<1x512xf32, #tpu.memory_space<vmem>>, vector<1x512xf32>
    %5 = vector.broadcast %4 : vector<1x512xf32> to vector<64x512xf32>
    %6 = arith.addf %3, %5 : vector<64x512xf32>
    %cst_6 = arith.constant 0.000000e+00 : f32
    %7 = vector.broadcast %cst_6 : f32 to vector<64x512xf32>
    %8 = arith.maximumf %6, %7 : vector<64x512xf32>
    %9 = arith.truncf %8 : vector<64x512xf32> to vector<64x512xbf16>
    %c0_7 = arith.constant 0 : index
    %c0_8 = arith.constant 0 : index
    %10 = vector.load %arg4[%c0_7, %c0_8] : memref<512x256xbf16, #tpu.memory_space<vmem>>, vector<512x256xbf16>
    %cst_9 = arith.constant dense<0.000000e+00> : vector<64x256xf32>
    %11 = tpu.matmul %9, %10, %cst_9 {dimension_numbers = #tpu.dot_dimension_numbers<[1], [0], [0], [1], [0, 0, 1, 1], [], []>} : vector<64x512xbf16>, vector<512x256xbf16>, vector<64x256xf32> -> vector<64x256xf32>
    %c0_10 = arith.constant 0 : index
    %c0_11 = arith.constant 0 : index
    %12 = vector.load %arg5[%c0_10, %c0_11] : memref<1x256xf32, #tpu.memory_space<vmem>>, vector<1x256xf32>
    %13 = vector.broadcast %12 : vector<1x256xf32> to vector<64x256xf32>
    %14 = arith.addf %11, %13 : vector<64x256xf32>
    %15 = math.tanh %14 : vector<64x256xf32>
    %16 = arith.truncf %15 : vector<64x256xf32> to vector<64x256xbf16>
    %c0_12 = arith.constant 0 : index
    %c0_13 = arith.constant 0 : index
    %17 = vector.load %arg6[%c0_12, %c0_13] : memref<256x768xbf16, #tpu.memory_space<vmem>>, vector<256x768xbf16>
    %cst_14 = arith.constant dense<0.000000e+00> : vector<64x768xf32>
    %18 = tpu.matmul %16, %17, %cst_14 {dimension_numbers = #tpu.dot_dimension_numbers<[1], [0], [0], [1], [0, 0, 1, 1], [], []>} : vector<64x256xbf16>, vector<256x768xbf16>, vector<64x768xf32> -> vector<64x768xf32>
    %c0_15 = arith.constant 0 : index
    %c0_16 = arith.constant 0 : index
    %19 = vector.load %arg8[%c0_15, %c0_16] : memref<1x768xf32, #tpu.memory_space<vmem>>, vector<1x768xf32>
    %20 = vector.broadcast %19 : vector<1x768xf32> to vector<64x768xf32>
    %21 = arith.addf %18, %20 : vector<64x768xf32>
    %c0_17 = arith.constant 0 : index
    %c0_18 = arith.constant 0 : index
    %22 = vector.load %arg7[%c0_17, %c0_18] : memref<256x768xbf16, #tpu.memory_space<vmem>>, vector<256x768xbf16>
    %c0_19 = arith.constant 0 : index
    %c0_20 = arith.constant 0 : index
    %23 = vector.load %arg9[%c0_19, %c0_20] : memref<1x256xf32, #tpu.memory_space<vmem>>, vector<1x256xf32>
    %cst_21 = arith.constant 0.000000e+00 : f32
    %24 = vector.broadcast %cst_21 : f32 to vector<8x256xf32>
    %25 = vector.extract_strided_slice %21 {offsets = [0, 0], sizes = [8, 768], strides = [1, 1]} : vector<64x768xf32> to vector<8x768xf32>
    %26 = arith.truncf %24 : vector<8x256xf32> to vector<8x256xbf16>
    %cst_22 = arith.constant dense<0.000000e+00> : vector<8x768xf32>
    %27 = tpu.matmul %26, %22, %cst_22 {dimension_numbers = #tpu.dot_dimension_numbers<[1], [0], [0], [1], [0, 0, 1, 1], [], []>} : vector<8x256xbf16>, vector<256x768xbf16>, vector<8x768xf32> -> vector<8x768xf32>
    %28 = vector.extract_strided_slice %25 {offsets = [0, 0], sizes = [8, 256], strides = [1, 1]} : vector<8x768xf32> to vector<8x256xf32>
    %29 = vector.extract_strided_slice %27 {offsets = [0, 0], sizes = [8, 256], strides = [1, 1]} : vector<8x768xf32> to vector<8x256xf32>
    %30 = arith.addf %28, %29 : vector<8x256xf32>
    %31 = arith.negf %30 : vector<8x256xf32>
    %32 = math.exp %31 : vector<8x256xf32>
    %cst_23 = arith.constant 1.000000e+00 : f32
    %33 = vector.broadcast %cst_23 : f32 to vector<8x256xf32>
    %34 = arith.addf %33, %32 : vector<8x256xf32>
    %35 = arith.divf %33, %34 : vector<8x256xf32>
    %36 = vector.extract_strided_slice %25 {offsets = [0, 256], sizes = [8, 256], strides = [1, 1]} : vector<8x768xf32> to vector<8x256xf32>
    %37 = vector.extract_strided_slice %27 {offsets = [0, 256], sizes = [8, 256], strides = [1, 1]} : vector<8x768xf32> to vector<8x256xf32>
    %38 = arith.addf %36, %37 : vector<8x256xf32>
    %39 = arith.negf %38 : vector<8x256xf32>
    %40 = math.exp %39 : vector<8x256xf32>
    %cst_24 = arith.constant 1.000000e+00 : f32
    %41 = vector.broadcast %cst_24 : f32 to vector<8x256xf32>
    %42 = arith.addf %41, %40 : vector<8x256xf32>
    %43 = arith.divf %41, %42 : vector<8x256xf32>
    %44 = vector.extract_strided_slice %25 {offsets = [0, 512], sizes = [8, 256], strides = [1, 1]} : vector<8x768xf32> to vector<8x256xf32>
    %45 = vector.extract_strided_slice %27 {offsets = [0, 512], sizes = [8, 256], strides = [1, 1]} : vector<8x768xf32> to vector<8x256xf32>
    %46 = vector.broadcast %23 : vector<1x256xf32> to vector<8x256xf32>
    %47 = arith.addf %45, %46 : vector<8x256xf32>
    %48 = arith.mulf %35, %47 : vector<8x256xf32>
    %49 = arith.addf %44, %48 : vector<8x256xf32>
    %50 = math.tanh %49 : vector<8x256xf32>
    %cst_25 = arith.constant 1.000000e+00 : f32
    %51 = vector.broadcast %cst_25 : f32 to vector<8x256xf32>
    %52 = arith.subf %51, %43 : vector<8x256xf32>
    %53 = arith.mulf %52, %50 : vector<8x256xf32>
    %54 = arith.mulf %43, %24 : vector<8x256xf32>
    %55 = arith.addf %53, %54 : vector<8x256xf32>
    %56 = vector.extract_strided_slice %21 {offsets = [8, 0], sizes = [8, 768], strides = [1, 1]} : vector<64x768xf32> to vector<8x768xf32>
    %57 = arith.truncf %55 : vector<8x256xf32> to vector<8x256xbf16>
    %cst_26 = arith.constant dense<0.000000e+00> : vector<8x768xf32>
    %58 = tpu.matmul %57, %22, %cst_26 {dimension_numbers = #tpu.dot_dimension_numbers<[1], [0], [0], [1], [0, 0, 1, 1], [], []>} : vector<8x256xbf16>, vector<256x768xbf16>, vector<8x768xf32> -> vector<8x768xf32>
    %59 = vector.extract_strided_slice %56 {offsets = [0, 0], sizes = [8, 256], strides = [1, 1]} : vector<8x768xf32> to vector<8x256xf32>
    %60 = vector.extract_strided_slice %58 {offsets = [0, 0], sizes = [8, 256], strides = [1, 1]} : vector<8x768xf32> to vector<8x256xf32>
    %61 = arith.addf %59, %60 : vector<8x256xf32>
    %62 = arith.negf %61 : vector<8x256xf32>
    %63 = math.exp %62 : vector<8x256xf32>
    %cst_27 = arith.constant 1.000000e+00 : f32
    %64 = vector.broadcast %cst_27 : f32 to vector<8x256xf32>
    %65 = arith.addf %64, %63 : vector<8x256xf32>
    %66 = arith.divf %64, %65 : vector<8x256xf32>
    %67 = vector.extract_strided_slice %56 {offsets = [0, 256], sizes = [8, 256], strides = [1, 1]} : vector<8x768xf32> to vector<8x256xf32>
    %68 = vector.extract_strided_slice %58 {offsets = [0, 256], sizes = [8, 256], strides = [1, 1]} : vector<8x768xf32> to vector<8x256xf32>
    %69 = arith.addf %67, %68 : vector<8x256xf32>
    %70 = arith.negf %69 : vector<8x256xf32>
    %71 = math.exp %70 : vector<8x256xf32>
    %cst_28 = arith.constant 1.000000e+00 : f32
    %72 = vector.broadcast %cst_28 : f32 to vector<8x256xf32>
    %73 = arith.addf %72, %71 : vector<8x256xf32>
    %74 = arith.divf %72, %73 : vector<8x256xf32>
    %75 = vector.extract_strided_slice %56 {offsets = [0, 512], sizes = [8, 256], strides = [1, 1]} : vector<8x768xf32> to vector<8x256xf32>
    %76 = vector.extract_strided_slice %58 {offsets = [0, 512], sizes = [8, 256], strides = [1, 1]} : vector<8x768xf32> to vector<8x256xf32>
    %77 = vector.broadcast %23 : vector<1x256xf32> to vector<8x256xf32>
    %78 = arith.addf %76, %77 : vector<8x256xf32>
    %79 = arith.mulf %66, %78 : vector<8x256xf32>
    %80 = arith.addf %75, %79 : vector<8x256xf32>
    %81 = math.tanh %80 : vector<8x256xf32>
    %cst_29 = arith.constant 1.000000e+00 : f32
    %82 = vector.broadcast %cst_29 : f32 to vector<8x256xf32>
    %83 = arith.subf %82, %74 : vector<8x256xf32>
    %84 = arith.mulf %83, %81 : vector<8x256xf32>
    %85 = arith.mulf %74, %55 : vector<8x256xf32>
    %86 = arith.addf %84, %85 : vector<8x256xf32>
    %87 = vector.extract_strided_slice %21 {offsets = [16, 0], sizes = [8, 768], strides = [1, 1]} : vector<64x768xf32> to vector<8x768xf32>
    %88 = arith.truncf %86 : vector<8x256xf32> to vector<8x256xbf16>
    %cst_30 = arith.constant dense<0.000000e+00> : vector<8x768xf32>
    %89 = tpu.matmul %88, %22, %cst_30 {dimension_numbers = #tpu.dot_dimension_numbers<[1], [0], [0], [1], [0, 0, 1, 1], [], []>} : vector<8x256xbf16>, vector<256x768xbf16>, vector<8x768xf32> -> vector<8x768xf32>
    %90 = vector.extract_strided_slice %87 {offsets = [0, 0], sizes = [8, 256], strides = [1, 1]} : vector<8x768xf32> to vector<8x256xf32>
    %91 = vector.extract_strided_slice %89 {offsets = [0, 0], sizes = [8, 256], strides = [1, 1]} : vector<8x768xf32> to vector<8x256xf32>
    %92 = arith.addf %90, %91 : vector<8x256xf32>
    %93 = arith.negf %92 : vector<8x256xf32>
    %94 = math.exp %93 : vector<8x256xf32>
    %cst_31 = arith.constant 1.000000e+00 : f32
    %95 = vector.broadcast %cst_31 : f32 to vector<8x256xf32>
    %96 = arith.addf %95, %94 : vector<8x256xf32>
    %97 = arith.divf %95, %96 : vector<8x256xf32>
    %98 = vector.extract_strided_slice %87 {offsets = [0, 256], sizes = [8, 256], strides = [1, 1]} : vector<8x768xf32> to vector<8x256xf32>
    %99 = vector.extract_strided_slice %89 {offsets = [0, 256], sizes = [8, 256], strides = [1, 1]} : vector<8x768xf32> to vector<8x256xf32>
    %100 = arith.addf %98, %99 : vector<8x256xf32>
    %101 = arith.negf %100 : vector<8x256xf32>
    %102 = math.exp %101 : vector<8x256xf32>
    %cst_32 = arith.constant 1.000000e+00 : f32
    %103 = vector.broadcast %cst_32 : f32 to vector<8x256xf32>
    %104 = arith.addf %103, %102 : vector<8x256xf32>
    %105 = arith.divf %103, %104 : vector<8x256xf32>
    %106 = vector.extract_strided_slice %87 {offsets = [0, 512], sizes = [8, 256], strides = [1, 1]} : vector<8x768xf32> to vector<8x256xf32>
    %107 = vector.extract_strided_slice %89 {offsets = [0, 512], sizes = [8, 256], strides = [1, 1]} : vector<8x768xf32> to vector<8x256xf32>
    %108 = vector.broadcast %23 : vector<1x256xf32> to vector<8x256xf32>
    %109 = arith.addf %107, %108 : vector<8x256xf32>
    %110 = arith.mulf %97, %109 : vector<8x256xf32>
    %111 = arith.addf %106, %110 : vector<8x256xf32>
    %112 = math.tanh %111 : vector<8x256xf32>
    %cst_33 = arith.constant 1.000000e+00 : f32
    %113 = vector.broadcast %cst_33 : f32 to vector<8x256xf32>
    %114 = arith.subf %113, %105 : vector<8x256xf32>
    %115 = arith.mulf %114, %112 : vector<8x256xf32>
    %116 = arith.mulf %105, %86 : vector<8x256xf32>
    %117 = arith.addf %115, %116 : vector<8x256xf32>
    %118 = vector.extract_strided_slice %21 {offsets = [24, 0], sizes = [8, 768], strides = [1, 1]} : vector<64x768xf32> to vector<8x768xf32>
    %119 = arith.truncf %117 : vector<8x256xf32> to vector<8x256xbf16>
    %cst_34 = arith.constant dense<0.000000e+00> : vector<8x768xf32>
    %120 = tpu.matmul %119, %22, %cst_34 {dimension_numbers = #tpu.dot_dimension_numbers<[1], [0], [0], [1], [0, 0, 1, 1], [], []>} : vector<8x256xbf16>, vector<256x768xbf16>, vector<8x768xf32> -> vector<8x768xf32>
    %121 = vector.extract_strided_slice %118 {offsets = [0, 0], sizes = [8, 256], strides = [1, 1]} : vector<8x768xf32> to vector<8x256xf32>
    %122 = vector.extract_strided_slice %120 {offsets = [0, 0], sizes = [8, 256], strides = [1, 1]} : vector<8x768xf32> to vector<8x256xf32>
    %123 = arith.addf %121, %122 : vector<8x256xf32>
    %124 = arith.negf %123 : vector<8x256xf32>
    %125 = math.exp %124 : vector<8x256xf32>
    %cst_35 = arith.constant 1.000000e+00 : f32
    %126 = vector.broadcast %cst_35 : f32 to vector<8x256xf32>
    %127 = arith.addf %126, %125 : vector<8x256xf32>
    %128 = arith.divf %126, %127 : vector<8x256xf32>
    %129 = vector.extract_strided_slice %118 {offsets = [0, 256], sizes = [8, 256], strides = [1, 1]} : vector<8x768xf32> to vector<8x256xf32>
    %130 = vector.extract_strided_slice %120 {offsets = [0, 256], sizes = [8, 256], strides = [1, 1]} : vector<8x768xf32> to vector<8x256xf32>
    %131 = arith.addf %129, %130 : vector<8x256xf32>
    %132 = arith.negf %131 : vector<8x256xf32>
    %133 = math.exp %132 : vector<8x256xf32>
    %cst_36 = arith.constant 1.000000e+00 : f32
    %134 = vector.broadcast %cst_36 : f32 to vector<8x256xf32>
    %135 = arith.addf %134, %133 : vector<8x256xf32>
    %136 = arith.divf %134, %135 : vector<8x256xf32>
    %137 = vector.extract_strided_slice %118 {offsets = [0, 512], sizes = [8, 256], strides = [1, 1]} : vector<8x768xf32> to vector<8x256xf32>
    %138 = vector.extract_strided_slice %120 {offsets = [0, 512], sizes = [8, 256], strides = [1, 1]} : vector<8x768xf32> to vector<8x256xf32>
    %139 = vector.broadcast %23 : vector<1x256xf32> to vector<8x256xf32>
    %140 = arith.addf %138, %139 : vector<8x256xf32>
    %141 = arith.mulf %128, %140 : vector<8x256xf32>
    %142 = arith.addf %137, %141 : vector<8x256xf32>
    %143 = math.tanh %142 : vector<8x256xf32>
    %cst_37 = arith.constant 1.000000e+00 : f32
    %144 = vector.broadcast %cst_37 : f32 to vector<8x256xf32>
    %145 = arith.subf %144, %136 : vector<8x256xf32>
    %146 = arith.mulf %145, %143 : vector<8x256xf32>
    %147 = arith.mulf %136, %117 : vector<8x256xf32>
    %148 = arith.addf %146, %147 : vector<8x256xf32>
    %149 = vector.extract_strided_slice %21 {offsets = [32, 0], sizes = [8, 768], strides = [1, 1]} : vector<64x768xf32> to vector<8x768xf32>
    %150 = arith.truncf %148 : vector<8x256xf32> to vector<8x256xbf16>
    %cst_38 = arith.constant dense<0.000000e+00> : vector<8x768xf32>
    %151 = tpu.matmul %150, %22, %cst_38 {dimension_numbers = #tpu.dot_dimension_numbers<[1], [0], [0], [1], [0, 0, 1, 1], [], []>} : vector<8x256xbf16>, vector<256x768xbf16>, vector<8x768xf32> -> vector<8x768xf32>
    %152 = vector.extract_strided_slice %149 {offsets = [0, 0], sizes = [8, 256], strides = [1, 1]} : vector<8x768xf32> to vector<8x256xf32>
    %153 = vector.extract_strided_slice %151 {offsets = [0, 0], sizes = [8, 256], strides = [1, 1]} : vector<8x768xf32> to vector<8x256xf32>
    %154 = arith.addf %152, %153 : vector<8x256xf32>
    %155 = arith.negf %154 : vector<8x256xf32>
    %156 = math.exp %155 : vector<8x256xf32>
    %cst_39 = arith.constant 1.000000e+00 : f32
    %157 = vector.broadcast %cst_39 : f32 to vector<8x256xf32>
    %158 = arith.addf %157, %156 : vector<8x256xf32>
    %159 = arith.divf %157, %158 : vector<8x256xf32>
    %160 = vector.extract_strided_slice %149 {offsets = [0, 256], sizes = [8, 256], strides = [1, 1]} : vector<8x768xf32> to vector<8x256xf32>
    %161 = vector.extract_strided_slice %151 {offsets = [0, 256], sizes = [8, 256], strides = [1, 1]} : vector<8x768xf32> to vector<8x256xf32>
    %162 = arith.addf %160, %161 : vector<8x256xf32>
    %163 = arith.negf %162 : vector<8x256xf32>
    %164 = math.exp %163 : vector<8x256xf32>
    %cst_40 = arith.constant 1.000000e+00 : f32
    %165 = vector.broadcast %cst_40 : f32 to vector<8x256xf32>
    %166 = arith.addf %165, %164 : vector<8x256xf32>
    %167 = arith.divf %165, %166 : vector<8x256xf32>
    %168 = vector.extract_strided_slice %149 {offsets = [0, 512], sizes = [8, 256], strides = [1, 1]} : vector<8x768xf32> to vector<8x256xf32>
    %169 = vector.extract_strided_slice %151 {offsets = [0, 512], sizes = [8, 256], strides = [1, 1]} : vector<8x768xf32> to vector<8x256xf32>
    %170 = vector.broadcast %23 : vector<1x256xf32> to vector<8x256xf32>
    %171 = arith.addf %169, %170 : vector<8x256xf32>
    %172 = arith.mulf %159, %171 : vector<8x256xf32>
    %173 = arith.addf %168, %172 : vector<8x256xf32>
    %174 = math.tanh %173 : vector<8x256xf32>
    %cst_41 = arith.constant 1.000000e+00 : f32
    %175 = vector.broadcast %cst_41 : f32 to vector<8x256xf32>
    %176 = arith.subf %175, %167 : vector<8x256xf32>
    %177 = arith.mulf %176, %174 : vector<8x256xf32>
    %178 = arith.mulf %167, %148 : vector<8x256xf32>
    %179 = arith.addf %177, %178 : vector<8x256xf32>
    %180 = vector.extract_strided_slice %21 {offsets = [40, 0], sizes = [8, 768], strides = [1, 1]} : vector<64x768xf32> to vector<8x768xf32>
    %181 = arith.truncf %179 : vector<8x256xf32> to vector<8x256xbf16>
    %cst_42 = arith.constant dense<0.000000e+00> : vector<8x768xf32>
    %182 = tpu.matmul %181, %22, %cst_42 {dimension_numbers = #tpu.dot_dimension_numbers<[1], [0], [0], [1], [0, 0, 1, 1], [], []>} : vector<8x256xbf16>, vector<256x768xbf16>, vector<8x768xf32> -> vector<8x768xf32>
    %183 = vector.extract_strided_slice %180 {offsets = [0, 0], sizes = [8, 256], strides = [1, 1]} : vector<8x768xf32> to vector<8x256xf32>
    %184 = vector.extract_strided_slice %182 {offsets = [0, 0], sizes = [8, 256], strides = [1, 1]} : vector<8x768xf32> to vector<8x256xf32>
    %185 = arith.addf %183, %184 : vector<8x256xf32>
    %186 = arith.negf %185 : vector<8x256xf32>
    %187 = math.exp %186 : vector<8x256xf32>
    %cst_43 = arith.constant 1.000000e+00 : f32
    %188 = vector.broadcast %cst_43 : f32 to vector<8x256xf32>
    %189 = arith.addf %188, %187 : vector<8x256xf32>
    %190 = arith.divf %188, %189 : vector<8x256xf32>
    %191 = vector.extract_strided_slice %180 {offsets = [0, 256], sizes = [8, 256], strides = [1, 1]} : vector<8x768xf32> to vector<8x256xf32>
    %192 = vector.extract_strided_slice %182 {offsets = [0, 256], sizes = [8, 256], strides = [1, 1]} : vector<8x768xf32> to vector<8x256xf32>
    %193 = arith.addf %191, %192 : vector<8x256xf32>
    %194 = arith.negf %193 : vector<8x256xf32>
    %195 = math.exp %194 : vector<8x256xf32>
    %cst_44 = arith.constant 1.000000e+00 : f32
    %196 = vector.broadcast %cst_44 : f32 to vector<8x256xf32>
    %197 = arith.addf %196, %195 : vector<8x256xf32>
    %198 = arith.divf %196, %197 : vector<8x256xf32>
    %199 = vector.extract_strided_slice %180 {offsets = [0, 512], sizes = [8, 256], strides = [1, 1]} : vector<8x768xf32> to vector<8x256xf32>
    %200 = vector.extract_strided_slice %182 {offsets = [0, 512], sizes = [8, 256], strides = [1, 1]} : vector<8x768xf32> to vector<8x256xf32>
    %201 = vector.broadcast %23 : vector<1x256xf32> to vector<8x256xf32>
    %202 = arith.addf %200, %201 : vector<8x256xf32>
    %203 = arith.mulf %190, %202 : vector<8x256xf32>
    %204 = arith.addf %199, %203 : vector<8x256xf32>
    %205 = math.tanh %204 : vector<8x256xf32>
    %cst_45 = arith.constant 1.000000e+00 : f32
    %206 = vector.broadcast %cst_45 : f32 to vector<8x256xf32>
    %207 = arith.subf %206, %198 : vector<8x256xf32>
    %208 = arith.mulf %207, %205 : vector<8x256xf32>
    %209 = arith.mulf %198, %179 : vector<8x256xf32>
    %210 = arith.addf %208, %209 : vector<8x256xf32>
    %211 = vector.extract_strided_slice %21 {offsets = [48, 0], sizes = [8, 768], strides = [1, 1]} : vector<64x768xf32> to vector<8x768xf32>
    %212 = arith.truncf %210 : vector<8x256xf32> to vector<8x256xbf16>
    %cst_46 = arith.constant dense<0.000000e+00> : vector<8x768xf32>
    %213 = tpu.matmul %212, %22, %cst_46 {dimension_numbers = #tpu.dot_dimension_numbers<[1], [0], [0], [1], [0, 0, 1, 1], [], []>} : vector<8x256xbf16>, vector<256x768xbf16>, vector<8x768xf32> -> vector<8x768xf32>
    %214 = vector.extract_strided_slice %211 {offsets = [0, 0], sizes = [8, 256], strides = [1, 1]} : vector<8x768xf32> to vector<8x256xf32>
    %215 = vector.extract_strided_slice %213 {offsets = [0, 0], sizes = [8, 256], strides = [1, 1]} : vector<8x768xf32> to vector<8x256xf32>
    %216 = arith.addf %214, %215 : vector<8x256xf32>
    %217 = arith.negf %216 : vector<8x256xf32>
    %218 = math.exp %217 : vector<8x256xf32>
    %cst_47 = arith.constant 1.000000e+00 : f32
    %219 = vector.broadcast %cst_47 : f32 to vector<8x256xf32>
    %220 = arith.addf %219, %218 : vector<8x256xf32>
    %221 = arith.divf %219, %220 : vector<8x256xf32>
    %222 = vector.extract_strided_slice %211 {offsets = [0, 256], sizes = [8, 256], strides = [1, 1]} : vector<8x768xf32> to vector<8x256xf32>
    %223 = vector.extract_strided_slice %213 {offsets = [0, 256], sizes = [8, 256], strides = [1, 1]} : vector<8x768xf32> to vector<8x256xf32>
    %224 = arith.addf %222, %223 : vector<8x256xf32>
    %225 = arith.negf %224 : vector<8x256xf32>
    %226 = math.exp %225 : vector<8x256xf32>
    %cst_48 = arith.constant 1.000000e+00 : f32
    %227 = vector.broadcast %cst_48 : f32 to vector<8x256xf32>
    %228 = arith.addf %227, %226 : vector<8x256xf32>
    %229 = arith.divf %227, %228 : vector<8x256xf32>
    %230 = vector.extract_strided_slice %211 {offsets = [0, 512], sizes = [8, 256], strides = [1, 1]} : vector<8x768xf32> to vector<8x256xf32>
    %231 = vector.extract_strided_slice %213 {offsets = [0, 512], sizes = [8, 256], strides = [1, 1]} : vector<8x768xf32> to vector<8x256xf32>
    %232 = vector.broadcast %23 : vector<1x256xf32> to vector<8x256xf32>
    %233 = arith.addf %231, %232 : vector<8x256xf32>
    %234 = arith.mulf %221, %233 : vector<8x256xf32>
    %235 = arith.addf %230, %234 : vector<8x256xf32>
    %236 = math.tanh %235 : vector<8x256xf32>
    %cst_49 = arith.constant 1.000000e+00 : f32
    %237 = vector.broadcast %cst_49 : f32 to vector<8x256xf32>
    %238 = arith.subf %237, %229 : vector<8x256xf32>
    %239 = arith.mulf %238, %236 : vector<8x256xf32>
    %240 = arith.mulf %229, %210 : vector<8x256xf32>
    %241 = arith.addf %239, %240 : vector<8x256xf32>
    %242 = vector.extract_strided_slice %21 {offsets = [56, 0], sizes = [8, 768], strides = [1, 1]} : vector<64x768xf32> to vector<8x768xf32>
    %243 = arith.truncf %241 : vector<8x256xf32> to vector<8x256xbf16>
    %cst_50 = arith.constant dense<0.000000e+00> : vector<8x768xf32>
    %244 = tpu.matmul %243, %22, %cst_50 {dimension_numbers = #tpu.dot_dimension_numbers<[1], [0], [0], [1], [0, 0, 1, 1], [], []>} : vector<8x256xbf16>, vector<256x768xbf16>, vector<8x768xf32> -> vector<8x768xf32>
    %245 = vector.extract_strided_slice %242 {offsets = [0, 0], sizes = [8, 256], strides = [1, 1]} : vector<8x768xf32> to vector<8x256xf32>
    %246 = vector.extract_strided_slice %244 {offsets = [0, 0], sizes = [8, 256], strides = [1, 1]} : vector<8x768xf32> to vector<8x256xf32>
    %247 = arith.addf %245, %246 : vector<8x256xf32>
    %248 = arith.negf %247 : vector<8x256xf32>
    %249 = math.exp %248 : vector<8x256xf32>
    %cst_51 = arith.constant 1.000000e+00 : f32
    %250 = vector.broadcast %cst_51 : f32 to vector<8x256xf32>
    %251 = arith.addf %250, %249 : vector<8x256xf32>
    %252 = arith.divf %250, %251 : vector<8x256xf32>
    %253 = vector.extract_strided_slice %242 {offsets = [0, 256], sizes = [8, 256], strides = [1, 1]} : vector<8x768xf32> to vector<8x256xf32>
    %254 = vector.extract_strided_slice %244 {offsets = [0, 256], sizes = [8, 256], strides = [1, 1]} : vector<8x768xf32> to vector<8x256xf32>
    %255 = arith.addf %253, %254 : vector<8x256xf32>
    %256 = arith.negf %255 : vector<8x256xf32>
    %257 = math.exp %256 : vector<8x256xf32>
    %cst_52 = arith.constant 1.000000e+00 : f32
    %258 = vector.broadcast %cst_52 : f32 to vector<8x256xf32>
    %259 = arith.addf %258, %257 : vector<8x256xf32>
    %260 = arith.divf %258, %259 : vector<8x256xf32>
    %261 = vector.extract_strided_slice %242 {offsets = [0, 512], sizes = [8, 256], strides = [1, 1]} : vector<8x768xf32> to vector<8x256xf32>
    %262 = vector.extract_strided_slice %244 {offsets = [0, 512], sizes = [8, 256], strides = [1, 1]} : vector<8x768xf32> to vector<8x256xf32>
    %263 = vector.broadcast %23 : vector<1x256xf32> to vector<8x256xf32>
    %264 = arith.addf %262, %263 : vector<8x256xf32>
    %265 = arith.mulf %252, %264 : vector<8x256xf32>
    %266 = arith.addf %261, %265 : vector<8x256xf32>
    %267 = math.tanh %266 : vector<8x256xf32>
    %cst_53 = arith.constant 1.000000e+00 : f32
    %268 = vector.broadcast %cst_53 : f32 to vector<8x256xf32>
    %269 = arith.subf %268, %260 : vector<8x256xf32>
    %270 = arith.mulf %269, %267 : vector<8x256xf32>
    %271 = arith.mulf %260, %241 : vector<8x256xf32>
    %272 = arith.addf %270, %271 : vector<8x256xf32>
    %273 = tpu.concatenate %55, %86, %117, %148, %179, %210, %241, %272 in 0 : vector<8x256xf32>, vector<8x256xf32>, vector<8x256xf32>, vector<8x256xf32>, vector<8x256xf32>, vector<8x256xf32>, vector<8x256xf32>, vector<8x256xf32> -> vector<64x256xf32>
    %274 = arith.truncf %273 : vector<64x256xf32> to vector<64x256xbf16>
    %c0_54 = arith.constant 0 : index
    %c0_55 = arith.constant 0 : index
    %275 = vector.load %arg10[%c0_54, %c0_55] : memref<256x256xbf16, #tpu.memory_space<vmem>>, vector<256x256xbf16>
    %cst_56 = arith.constant dense<0.000000e+00> : vector<64x256xf32>
    %276 = tpu.matmul %274, %275, %cst_56 {dimension_numbers = #tpu.dot_dimension_numbers<[1], [0], [0], [1], [0, 0, 1, 1], [], []>} : vector<64x256xbf16>, vector<256x256xbf16>, vector<64x256xf32> -> vector<64x256xf32>
    %c0_57 = arith.constant 0 : index
    %c0_58 = arith.constant 0 : index
    %277 = vector.load %arg11[%c0_57, %c0_58] : memref<1x256xf32, #tpu.memory_space<vmem>>, vector<1x256xf32>
    %278 = vector.broadcast %277 : vector<1x256xf32> to vector<64x256xf32>
    %279 = arith.addf %276, %278 : vector<64x256xf32>
    %c0_59 = arith.constant 0 : index
    %c0_60 = arith.constant 0 : index
    %c0_61 = arith.constant 0 : index
    %280 = vector.load %arg12[%c0_59, %c0_60, %c0_61] : memref<1x64x256xf32, #tpu.memory_space<vmem>>, vector<1x64x256xf32>
    %281 = vector.shape_cast %280 : vector<1x64x256xf32> to vector<64x256xf32>
    %282 = vector.shape_cast %279 : vector<64x256xf32> to vector<1x64x256xf32>
    tpu.vector_store %arg12[%c0_59, %c0_60, %c0_61], %282 {strides = array<i32>} : memref<1x64x256xf32, #tpu.memory_space<vmem>>, vector<1x64x256xf32>,
    return
  }
  func.func @transform_0(%arg0: i32) -> (i32, i32, i32) {
    %c0_i32 = arith.constant 0 : i32
    %c0_i32_0 = arith.constant 0 : i32
    %c0_i32_1 = arith.constant 0 : i32
    return %arg0, %c0_i32, %c0_i32_0 : i32, i32, i32
  }
  func.func @transform_1(%arg0: i32) -> (i32, i32) {
    %c0_i32 = arith.constant 0 : i32
    %c0_i32_0 = arith.constant 0 : i32
    %c0_i32_1 = arith.constant 0 : i32
    return %c0_i32, %c0_i32_0 : i32, i32
  }
  func.func @transform_2(%arg0: i32) -> (i32, i32) {
    %c0_i32 = arith.constant 0 : i32
    %c0_i32_0 = arith.constant 0 : i32
    %c0_i32_1 = arith.constant 0 : i32
    return %c0_i32, %c0_i32_0 : i32, i32
  }
  func.func @transform_3(%arg0: i32) -> (i32, i32) {
    %c0_i32 = arith.constant 0 : i32
    %c0_i32_0 = arith.constant 0 : i32
    %c0_i32_1 = arith.constant 0 : i32
    return %c0_i32, %c0_i32_0 : i32, i32
  }
  func.func @transform_4(%arg0: i32) -> (i32, i32) {
    %c0_i32 = arith.constant 0 : i32
    %c0_i32_0 = arith.constant 0 : i32
    %c0_i32_1 = arith.constant 0 : i32
    return %c0_i32, %c0_i32_0 : i32, i32
  }
  func.func @transform_5(%arg0: i32) -> (i32, i32) {
    %c0_i32 = arith.constant 0 : i32
    %c0_i32_0 = arith.constant 0 : i32
    %c0_i32_1 = arith.constant 0 : i32
    return %c0_i32, %c0_i32_0 : i32, i32
  }
  func.func @transform_6(%arg0: i32) -> (i32, i32) {
    %c0_i32 = arith.constant 0 : i32
    %c0_i32_0 = arith.constant 0 : i32
    %c0_i32_1 = arith.constant 0 : i32
    return %c0_i32, %c0_i32_0 : i32, i32
  }
  func.func @transform_7(%arg0: i32) -> (i32, i32) {
    %c0_i32 = arith.constant 0 : i32
    %c0_i32_0 = arith.constant 0 : i32
    %c0_i32_1 = arith.constant 0 : i32
    return %c0_i32, %c0_i32_0 : i32, i32
  }
  func.func @transform_8(%arg0: i32) -> (i32, i32) {
    %c0_i32 = arith.constant 0 : i32
    %c0_i32_0 = arith.constant 0 : i32
    %c0_i32_1 = arith.constant 0 : i32
    return %c0_i32, %c0_i32_0 : i32, i32
  }
  func.func @transform_9(%arg0: i32) -> (i32, i32) {
    %c0_i32 = arith.constant 0 : i32
    %c0_i32_0 = arith.constant 0 : i32
    %c0_i32_1 = arith.constant 0 : i32
    return %c0_i32, %c0_i32_0 : i32, i32
  }
  func.func @transform_10(%arg0: i32) -> (i32, i32) {
    %c0_i32 = arith.constant 0 : i32
    %c0_i32_0 = arith.constant 0 : i32
    %c0_i32_1 = arith.constant 0 : i32
    return %c0_i32, %c0_i32_0 : i32, i32
  }
  func.func @transform_11(%arg0: i32) -> (i32, i32, i32) {
    %c0_i32 = arith.constant 0 : i32
    %c0_i32_0 = arith.constant 0 : i32
    %c0_i32_1 = arith.constant 0 : i32
    return %arg0, %c0_i32, %c0_i32_0 : i32, i32, i32
  }
}

</mosaic_0001>

<llo_original>
// kernel: nar_forward.1
$region0: #{nar_forward.1}
  #allocation0 [shape = 'u32[]', space=smem, size = 0x4, offset = 0x4, fixed_abs, tag = 'smem constant byte address 0x4 - core index']
  #allocation1 [shape = 'u32[144,128]{1,0:T(1,128)}', space=vmem, size = 0x12000, scoped, tag = 'internal scratch']
  %s0 = inlined_call_operand.vmem [shape: bf16[1,64,256], index: 0, kind: input, shape index: {}]
  %s1 = inlined_call_operand.vmem [shape: bf16[256,512], index: 1, kind: input, shape index: {}]
  %s2 = inlined_call_operand.vmem [shape: f32[1,512], index: 2, kind: input, shape index: {}]
  %s3 = inlined_call_operand.vmem [shape: bf16[512,256], index: 3, kind: input, shape index: {}]
  %s4 = inlined_call_operand.vmem [shape: f32[1,256], index: 4, kind: input, shape index: {}]
  %s5 = inlined_call_operand.vmem [shape: bf16[256,768], index: 5, kind: input, shape index: {}]
  %s6 = inlined_call_operand.vmem [shape: bf16[256,768], index: 6, kind: input, shape index: {}]
  %s7 = inlined_call_operand.vmem [shape: f32[1,768], index: 7, kind: input, shape index: {}]
  %s8 = inlined_call_operand.vmem [shape: f32[1,256], index: 8, kind: input, shape index: {}]
  %s9 = inlined_call_operand.vmem [shape: bf16[256,256], index: 9, kind: input, shape index: {}]
  %s10 = inlined_call_operand.vmem [shape: f32[1,256], index: 10, kind: input, shape index: {}]
  %s11 = inlined_call_operand.vmem [shape: f32[1,64,256], index: 11, kind: output, shape index: {}]
  %s12 = sld [smem:[#allocation0]]
  $region54: #{nar_forward.1} parent=0
    _
  %s14 = ssub.s32 1, %s12
  %s15 = scalar_select 0, %s14, %s12
  // Predicated region
  $region2: #{nar_forward.1} parent=0 // pred_check
    _
  $region3: #{nar_forward.1} parent=0 // pred_check_branch
    %17 = sbr.rel (0) target = $region5
  $region4: #{nar_forward.1} parent=0 // pred_region
    _
  $region5: #{nar_forward.1} parent=0 // pred_fallthru
    _
  // Predicated region
  $region6: #{nar_forward.1} parent=0 // pred_check
    _
  $region7: #{nar_forward.1} parent=0 // pred_check_branch
    %19 = sbr.rel (0) target = $region9
  $region8: #{nar_forward.1} parent=0 // pred_region
    _
  $region9: #{nar_forward.1} parent=0 // pred_fallthru
    _
  // Predicated region
  $region10: #{nar_forward.1} parent=0 // pred_check
    _
  $region11: #{nar_forward.1} parent=0 // pred_check_branch
    %21 = sbr.rel (0) target = $region13
  $region12: #{nar_forward.1} parent=0 // pred_region
    _
  $region13: #{nar_forward.1} parent=0 // pred_fallthru
    _
  // Predicated region
  $region14: #{nar_forward.1} parent=0 // pred_check
    _
  $region15: #{nar_forward.1} parent=0 // pred_check_branch
    %23 = sbr.rel (0) target = $region17
  $region16: #{nar_forward.1} parent=0 // pred_region
    _
  $region17: #{nar_forward.1} parent=0 // pred_fallthru
    _
  // Predicated region
  $region18: #{nar_forward.1} parent=0 // pred_check
    _
  $region19: #{nar_forward.1} parent=0 // pred_check_branch
    %25 = sbr.rel (0) target = $region21
  $region20: #{nar_forward.1} parent=0 // pred_region
    _
  $region21: #{nar_forward.1} parent=0 // pred_fallthru
    _
  // Predicated region
  $region22: #{nar_forward.1} parent=0 // pred_check
    _
  $region23: #{nar_forward.1} parent=0 // pred_check_branch
    %27 = sbr.rel (0) target = $region25
  $region24: #{nar_forward.1} parent=0 // pred_region
    _
  $region25: #{nar_forward.1} parent=0 // pred_fallthru
    _
  // Predicated region
  $region26: #{nar_forward.1} parent=0 // pred_check
    _
  $region27: #{nar_forward.1} parent=0 // pred_check_branch
    %29 = sbr.rel (0) target = $region29
  $region28: #{nar_forward.1} parent=0 // pred_region
    _
  $region29: #{nar_forward.1} parent=0 // pred_fallthru
    _
  // Predicated region
  $region30: #{nar_forward.1} parent=0 // pred_check
    _
  $region31: #{nar_forward.1} parent=0 // pred_check_branch
    %31 = sbr.rel (0) target = $region33
  $region32: #{nar_forward.1} parent=0 // pred_region
    _
  $region33: #{nar_forward.1} parent=0 // pred_fallthru
    _
  // Predicated region
  $region34: #{nar_forward.1} parent=0 // pred_check
    _
  $region35: #{nar_forward.1} parent=0 // pred_check_branch
    %33 = sbr.rel (0) target = $region37
  $region36: #{nar_forward.1} parent=0 // pred_region
    _
  $region37: #{nar_forward.1} parent=0 // pred_fallthru
    _
  // Predicated region
  $region38: #{nar_forward.1} parent=0 // pred_check
    _
  $region39: #{nar_forward.1} parent=0 // pred_check_branch
    %35 = sbr.rel (0) target = $region41
  $region40: #{nar_forward.1} parent=0 // pred_region
    _
  $region41: #{nar_forward.1} parent=0 // pred_fallthru
    _
  // Predicated region
  $region42: #{nar_forward.1} parent=0 // pred_check
    _
  $region43: #{nar_forward.1} parent=0 // pred_check_branch
    %37 = sbr.rel (0) target = $region45
  $region44: #{nar_forward.1} parent=0 // pred_region
    _
  $region45: #{nar_forward.1} parent=0 // pred_fallthru
    _
  %v39 = vld [vmem:[%s0] sm:$0xff]
  %v40 = vld [vmem:[%s0 + $0x8] sm:$0xff]
  %v41 = vld [vmem:[%s0 + $0x10] sm:$0xff]
  %v42 = vld [vmem:[%s0 + $0x18] sm:$0xff]
  %v43 = vld [vmem:[%s0 + $0x20] sm:$0xff]
  %v44 = vld [vmem:[%s0 + $0x28] sm:$0xff]
  %v45 = vld [vmem:[%s0 + $0x30] sm:$0xff]
  %v46 = vld [vmem:[%s0 + $0x38] sm:$0xff]
  %v47 = vld [vmem:[%s1] sm:$0xff]
  %v48 = vld [vmem:[%s1 + $0x8] sm:$0xff]
  %v49 = vld [vmem:[%s1 + $0x10] sm:$0xff]
  %v50 = vld [vmem:[%s1 + $0x18] sm:$0xff]
  %v51 = vld [vmem:[%s1 + $0x20] sm:$0xff]
  %v52 = vld [vmem:[%s1 + $0x28] sm:$0xff]
  %v53 = vld [vmem:[%s1 + $0x30] sm:$0xff]
  %v54 = vld [vmem:[%s1 + $0x38] sm:$0xff]
  %v55 = vld [vmem:[%s1 + $0x40] sm:$0xff]
  %v56 = vld [vmem:[%s1 + $0x48] sm:$0xff]
  %v57 = vld [vmem:[%s1 + $0x50] sm:$0xff]
  %v58 = vld [vmem:[%s1 + $0x58] sm:$0xff]
  %v59 = vld [vmem:[%s1 + $0x60] sm:$0xff]
  %v60 = vld [vmem:[%s1 + $0x68] sm:$0xff]
  %v61 = vld [vmem:[%s1 + $0x70] sm:$0xff]
  %v62 = vld [vmem:[%s1 + $0x78] sm:$0xff]
  %v63 = vld [vmem:[%s1 + $0x80] sm:$0xff]
  %v64 = vld [vmem:[%s1 + $0x88] sm:$0xff]
  %v65 = vld [vmem:[%s1 + $0x90] sm:$0xff]
  %v66 = vld [vmem:[%s1 + $0x98] sm:$0xff]
  %v67 = vld [vmem:[%s1 + $0xa0] sm:$0xff]
  %v68 = vld [vmem:[%s1 + $0xa8] sm:$0xff]
  %v69 = vld [vmem:[%s1 + $0xb0] sm:$0xff]
  %v70 = vld [vmem:[%s1 + $0xb8] sm:$0xff]
  %v71 = vld [vmem:[%s1 + $0xc0] sm:$0xff]
  %v72 = vld [vmem:[%s1 + $0xc8] sm:$0xff]
  %v73 = vld [vmem:[%s1 + $0xd0] sm:$0xff]
  %v74 = vld [vmem:[%s1 + $0xd8] sm:$0xff]
  %v75 = vld [vmem:[%s1 + $0xe0] sm:$0xff]
  %v76 = vld [vmem:[%s1 + $0xe8] sm:$0xff]
  %v77 = vld [vmem:[%s1 + $0xf0] sm:$0xff]
  %v78 = vld [vmem:[%s1 + $0xf8] sm:$0xff]
  %v79 = vld [vmem:[%s1 + $0x100] sm:$0xff]
  %v80 = vld [vmem:[%s1 + $0x108] sm:$0xff]
  %v81 = vld [vmem:[%s1 + $0x110] sm:$0xff]
  %v82 = vld [vmem:[%s1 + $0x118] sm:$0xff]
  %v83 = vld [vmem:[%s1 + $0x120] sm:$0xff]
  %v84 = vld [vmem:[%s1 + $0x128] sm:$0xff]
  %v85 = vld [vmem:[%s1 + $0x130] sm:$0xff]
  %v86 = vld [vmem:[%s1 + $0x138] sm:$0xff]
  %v87 = vld [vmem:[%s1 + $0x140] sm:$0xff]
  %v88 = vld [vmem:[%s1 + $0x148] sm:$0xff]
  %v89 = vld [vmem:[%s1 + $0x150] sm:$0xff]
  %v90 = vld [vmem:[%s1 + $0x158] sm:$0xff]
  %v91 = vld [vmem:[%s1 + $0x160] sm:$0xff]
  %v92 = vld [vmem:[%s1 + $0x168] sm:$0xff]
  %v93 = vld [vmem:[%s1 + $0x170] sm:$0xff]
  %v94 = vld [vmem:[%s1 + $0x178] sm:$0xff]
  %v95 = vld [vmem:[%s1 + $0x180] sm:$0xff]
  %v96 = vld [vmem:[%s1 + $0x188] sm:$0xff]
  %v97 = vld [vmem:[%s1 + $0x190] sm:$0xff]
  %v98 = vld [vmem:[%s1 + $0x198] sm:$0xff]
  %v99 = vld [vmem:[%s1 + $0x1a0] sm:$0xff]
  %v100 = vld [vmem:[%s1 + $0x1a8] sm:$0xff]
  %v101 = vld [vmem:[%s1 + $0x1b0] sm:$0xff]
  %v102 = vld [vmem:[%s1 + $0x1b8] sm:$0xff]
  %v103 = vld [vmem:[%s1 + $0x1c0] sm:$0xff]
  %v104 = vld [vmem:[%s1 + $0x1c8] sm:$0xff]
  %v105 = vld [vmem:[%s1 + $0x1d0] sm:$0xff]
  %v106 = vld [vmem:[%s1 + $0x1d8] sm:$0xff]
  %v107 = vld [vmem:[%s1 + $0x1e0] sm:$0xff]
  %v108 = vld [vmem:[%s1 + $0x1e8] sm:$0xff]
  %v109 = vld [vmem:[%s1 + $0x1f0] sm:$0xff]
  %v110 = vld [vmem:[%s1 + $0x1f8] sm:$0xff]
  %v111 = vld [vmem:[%s2] sm:$0xf]
  %v113 = vlaneseq
  %v114 = vshrl.u32 %v113, 7
  %v115 = vsub.s32 0, %v114
  %v116 = vrot.slane %v111, %v115
  %v117 = vlaneseq
  %v118 = vshrl.u32 %v117, 7
  %v119 = vsub.s32 1, %v118
  %v120 = vrot.slane %v111, %v119
  %v121 = vlaneseq
  %v122 = vshrl.u32 %v121, 7
  %v123 = vsub.s32 2, %v122
  %v124 = vrot.slane %v111, %v123
  %v125 = vlaneseq
  %v126 = vshrl.u32 %v125, 7
  %v127 = vsub.s32 3, %v126
  %v128 = vrot.slane %v111, %v127
  %v141 = vunpack.c.l.b16 %v39
  %v142 = vunpack.c.h.b16 %v39
  %v143 = vunpack.c.l.b16 %v40
  %v144 = vunpack.c.h.b16 %v40
  %v145 = vunpack.c.l.b16 %v41
  %v146 = vunpack.c.h.b16 %v41
  %v147 = vunpack.c.l.b16 %v42
  %v148 = vunpack.c.h.b16 %v42
  %v149 = vunpack.c.l.b16 %v43
  %v150 = vunpack.c.h.b16 %v43
  %v151 = vunpack.c.l.b16 %v44
  %v152 = vunpack.c.h.b16 %v44
  %v153 = vunpack.c.l.b16 %v45
  %v154 = vunpack.c.h.b16 %v45
  %v155 = vunpack.c.l.b16 %v46
  %v156 = vunpack.c.h.b16 %v46
  %v157 = vpack.c.b16 %v143, %v141
  %v158 = vpack.c.b16 %v144, %v142
  %v159 = vpack.c.b16 %v147, %v145
  %v160 = vpack.c.b16 %v148, %v146
  %v161 = vpack.c.b16 %v151, %v149
  %v162 = vpack.c.b16 %v152, %v150
  %v163 = vpack.c.b16 %v155, %v153
  %v164 = vpack.c.b16 %v156, %v154
  %v237 = vunpack.c.l.b16 %v47
  %v238 = vunpack.c.h.b16 %v47
  %v239 = vunpack.c.l.b16 %v48
  %v240 = vunpack.c.h.b16 %v48
  %v241 = vunpack.c.l.b16 %v49
  %v242 = vunpack.c.h.b16 %v49
  %v243 = vunpack.c.l.b16 %v50
  %v244 = vunpack.c.h.b16 %v50
  %v245 = vunpack.c.l.b16 %v51
  %v246 = vunpack.c.h.b16 %v51
  %v247 = vunpack.c.l.b16 %v52
  %v248 = vunpack.c.h.b16 %v52
  %v249 = vunpack.c.l.b16 %v53
  %v250 = vunpack.c.h.b16 %v53
  %v251 = vunpack.c.l.b16 %v54
  %v252 = vunpack.c.h.b16 %v54
  %v253 = vunpack.c.l.b16 %v55
  %v254 = vunpack.c.h.b16 %v55
  %v255 = vunpack.c.l.b16 %v56
  %v256 = vunpack.c.h.b16 %v56
  %v257 = vunpack.c.l.b16 %v57
  %v258 = vunpack.c.h.b16 %v57
  %v259 = vunpack.c.l.b16 %v58
  %v260 = vunpack.c.h.b16 %v58
  %v261 = vunpack.c.l.b16 %v59
  %v262 = vunpack.c.h.b16 %v59
  %v263 = vunpack.c.l.b16 %v60
  %v264 = vunpack.c.h.b16 %v60
  %v265 = vunpack.c.l.b16 %v61
  %v266 = vunpack.c.h.b16 %v61
  %v267 = vunpack.c.l.b16 %v62
  %v268 = vunpack.c.h.b16 %v62
  %v269 = vunpack.c.l.b16 %v63
  %v270 = vunpack.c.h.b16 %v63
  %v271 = vunpack.c.l.b16 %v64
  %v272 = vunpack.c.h.b16 %v64
  %v273 = vunpack.c.l.b16 %v65
  %v274 = vunpack.c.h.b16 %v65
  %v275 = vunpack.c.l.b16 %v66
  %v276 = vunpack.c.h.b16 %v66
  %v277 = vunpack.c.l.b16 %v67
  %v278 = vunpack.c.h.b16 %v67
  %v279 = vunpack.c.l.b16 %v68
  %v280 = vunpack.c.h.b16 %v68
  %v281 = vunpack.c.l.b16 %v69
  %v282 = vunpack.c.h.b16 %v69
  %v283 = vunpack.c.l.b16 %v70
  %v284 = vunpack.c.h.b16 %v70
  %v285 = vunpack.c.l.b16 %v71
  %v286 = vunpack.c.h.b16 %v71
  %v287 = vunpack.c.l.b16 %v72
  %v288 = vunpack.c.h.b16 %v72
  %v289 = vunpack.c.l.b16 %v73
  %v290 = vunpack.c.h.b16 %v73
  %v291 = vunpack.c.l.b16 %v74
  %v292 = vunpack.c.h.b16 %v74
  %v293 = vunpack.c.l.b16 %v75
  %v294 = vunpack.c.h.b16 %v75
  %v295 = vunpack.c.l.b16 %v76
  %v296 = vunpack.c.h.b16 %v76
  %v297 = vunpack.c.l.b16 %v77
  %v298 = vunpack.c.h.b16 %v77
  %v299 = vunpack.c.l.b16 %v78
  %v300 = vunpack.c.h.b16 %v78
  %v301 = vunpack.c.l.b16 %v79
  %v302 = vunpack.c.h.b16 %v79
  %v303 = vunpack.c.l.b16 %v80
  %v304 = vunpack.c.h.b16 %v80
  %v305 = vunpack.c.l.b16 %v81
  %v306 = vunpack.c.h.b16 %v81
  %v307 = vunpack.c.l.b16 %v82
  %v308 = vunpack.c.h.b16 %v82
  %v309 = vunpack.c.l.b16 %v83
  %v310 = vunpack.c.h.b16 %v83
  %v311 = vunpack.c.l.b16 %v84
  %v312 = vunpack.c.h.b16 %v84
  %v313 = vunpack.c.l.b16 %v85
  %v314 = vunpack.c.h.b16 %v85
  %v315 = vunpack.c.l.b16 %v86
  %v316 = vunpack.c.h.b16 %v86
  %v317 = vunpack.c.l.b16 %v87
  %v318 = vunpack.c.h.b16 %v87
  %v319 = vunpack.c.l.b16 %v88
  %v320 = vunpack.c.h.b16 %v88
  %v321 = vunpack.c.l.b16 %v89
  %v322 = vunpack.c.h.b16 %v89
  %v323 = vunpack.c.l.b16 %v90
  %v324 = vunpack.c.h.b16 %v90
  %v325 = vunpack.c.l.b16 %v91
  %v326 = vunpack.c.h.b16 %v91
  %v327 = vunpack.c.l.b16 %v92
  %v328 = vunpack.c.h.b16 %v92
  %v329 = vunpack.c.l.b16 %v93
  %v330 = vunpack.c.h.b16 %v93
  %v331 = vunpack.c.l.b16 %v94
  %v332 = vunpack.c.h.b16 %v94
  %v333 = vunpack.c.l.b16 %v95
  %v334 = vunpack.c.h.b16 %v95
  %v335 = vunpack.c.l.b16 %v96
  %v336 = vunpack.c.h.b16 %v96
  %v337 = vunpack.c.l.b16 %v97
  %v338 = vunpack.c.h.b16 %v97
  %v339 = vunpack.c.l.b16 %v98
  %v340 = vunpack.c.h.b16 %v98
  %v341 = vunpack.c.l.b16 %v99
  %v342 = vunpack.c.h.b16 %v99
  %v343 = vunpack.c.l.b16 %v100
  %v344 = vunpack.c.h.b16 %v100
  %v345 = vunpack.c.l.b16 %v101
  %v346 = vunpack.c.h.b16 %v101
  %v347 = vunpack.c.l.b16 %v102
  %v348 = vunpack.c.h.b16 %v102
  %v349 = vunpack.c.l.b16 %v103
  %v350 = vunpack.c.h.b16 %v103
  %v351 = vunpack.c.l.b16 %v104
  %v352 = vunpack.c.h.b16 %v104
  %v353 = vunpack.c.l.b16 %v105
  %v354 = vunpack.c.h.b16 %v105
  %v355 = vunpack.c.l.b16 %v106
  %v356 = vunpack.c.h.b16 %v106
  %v357 = vunpack.c.l.b16 %v107
  %v358 = vunpack.c.h.b16 %v107
  %v359 = vunpack.c.l.b16 %v108
  %v360 = vunpack.c.h.b16 %v108
  %v361 = vunpack.c.l.b16 %v109
  %v362 = vunpack.c.h.b16 %v109
  %v363 = vunpack.c.l.b16 %v110
  %v364 = vunpack.c.h.b16 %v110
  %v365 = vpack.c.b16 %v241, %v237
  %v366 = vpack.c.b16 %v242, %v238
  %v367 = vpack.c.b16 %v243, %v239
  %v368 = vpack.c.b16 %v244, %v240
  %v369 = vpack.c.b16 %v249, %v245
  %v370 = vpack.c.b16 %v250, %v246
  %v371 = vpack.c.b16 %v251, %v247
  %v372 = vpack.c.b16 %v252, %v248
  %v373 = vpack.c.b16 %v257, %v253
  %v374 = vpack.c.b16 %v258, %v254
  %v375 = vpack.c.b16 %v259, %v255
  %v376 = vpack.c.b16 %v260, %v256
  %v377 = vpack.c.b16 %v265, %v261
  %v378 = vpack.c.b16 %v266, %v262
  %v379 = vpack.c.b16 %v267, %v263
  %v380 = vpack.c.b16 %v268, %v264
  %v381 = vpack.c.b16 %v273, %v269
  %v382 = vpack.c.b16 %v274, %v270
  %v383 = vpack.c.b16 %v275, %v271
  %v384 = vpack.c.b16 %v276, %v272
  %v385 = vpack.c.b16 %v281, %v277
  %v386 = vpack.c.b16 %v282, %v278
  %v387 = vpack.c.b16 %v283, %v279
  %v388 = vpack.c.b16 %v284, %v280
  %v389 = vpack.c.b16 %v289, %v285
  %v390 = vpack.c.b16 %v290, %v286
  %v391 = vpack.c.b16 %v291, %v287
  %v392 = vpack.c.b16 %v292, %v288
  %v393 = vpack.c.b16 %v297, %v293
  %v394 = vpack.c.b16 %v298, %v294
  %v395 = vpack.c.b16 %v299, %v295
  %v396 = vpack.c.b16 %v300, %v296
  %v397 = vpack.c.b16 %v305, %v301
  %v398 = vpack.c.b16 %v306, %v302
  %v399 = vpack.c.b16 %v307, %v303
  %v400 = vpack.c.b16 %v308, %v304
  %v401 = vpack.c.b16 %v313, %v309
  %v402 = vpack.c.b16 %v314, %v310
  %v403 = vpack.c.b16 %v315, %v311
  %v404 = vpack.c.b16 %v316, %v312
  %v405 = vpack.c.b16 %v321, %v317
  %v406 = vpack.c.b16 %v322, %v318
  %v407 = vpack.c.b16 %v323, %v319
  %v408 = vpack.c.b16 %v324, %v320
  %v409 = vpack.c.b16 %v329, %v325
  %v410 = vpack.c.b16 %v330, %v326
  %v411 = vpack.c.b16 %v331, %v327
  %v412 = vpack.c.b16 %v332, %v328
  %v413 = vpack.c.b16 %v337, %v333
  %v414 = vpack.c.b16 %v338, %v334
  %v415 = vpack.c.b16 %v339, %v335
  %v416 = vpack.c.b16 %v340, %v336
  %v417 = vpack.c.b16 %v345, %v341
  %v418 = vpack.c.b16 %v346, %v342
  %v419 = vpack.c.b16 %v347, %v343
  %v420 = vpack.c.b16 %v348, %v344
  %v421 = vpack.c.b16 %v353, %v349
  %v422 = vpack.c.b16 %v354, %v350
  %v423 = vpack.c.b16 %v355, %v351
  %v424 = vpack.c.b16 %v356, %v352
  %v425 = vpack.c.b16 %v361, %v357
  %v426 = vpack.c.b16 %v362, %v358
  %v427 = vpack.c.b16 %v363, %v359
  %v428 = vpack.c.b16 %v364, %v360
  %493 = vmatprep.subr.bf16.mxu0 %v366
  %494 = vmatpush1.bf16.msra.mxu0 %v365
  %495 = vmatprep.subr.bf16.mxu0 %v370
  %496 = vmatpush1.bf16.msra.mxu0 %v369
  %497 = vmatprep.subr.bf16.mxu0 %v374
  %498 = vmatpush1.bf16.msra.mxu0 %v373
  %499 = vmatprep.subr.bf16.mxu0 %v378
  %500 = vmatpush1.bf16.msra.mxu0 %v377
  %501 = vmatprep.subr.bf16.mxu0 %v382
  %502 = vmatpush1.bf16.msra.mxu0 %v381
  %503 = vmatprep.subr.bf16.mxu0 %v386
  %504 = vmatpush1.bf16.msra.mxu0 %v385
  %505 = vmatprep.subr.bf16.mxu0 %v390
  %506 = vmatpush1.bf16.msra.mxu0 %v389
  %507 = vmatprep.subr.bf16.mxu0 %v394
  %508 = vmatpush1.bf16.msra.mxu0 %v393
  %509 = vmatprep.subr.bf16.mxu0 %v398
  %510 = vmatpush1.bf16.msra.mxu0 %v397
  %511 = vmatprep.subr.bf16.mxu0 %v402
  %512 = vmatpush1.bf16.msra.mxu0 %v401
  %513 = vmatprep.subr.bf16.mxu0 %v406
  %514 = vmatpush1.bf16.msra.mxu0 %v405
  %515 = vmatprep.subr.bf16.mxu0 %v410
  %516 = vmatpush1.bf16.msra.mxu0 %v409
  %517 = vmatprep.subr.bf16.mxu0 %v414
  %518 = vmatpush1.bf16.msra.mxu0 %v413
  %519 = vmatprep.subr.bf16.mxu0 %v418
  %520 = vmatpush1.bf16.msra.mxu0 %v417
  %521 = vmatprep.subr.bf16.mxu0 %v422
  %522 = vmatpush1.bf16.msra.mxu0 %v421
  %523 = vmatprep.subr.bf16.mxu0 %v426
  %524 = vmatpush1.bf16.msra.mxu0 %v425
  %525 = vmatprep.mubr.bf16.mxu0 %v158
  %526 = vmatmul.mubr.bf16.gmra.mrb[0].mxu0 %v157
  %v527 = vpop.f32.mrb[0].mxu0
  %v528 = vadd.f32 %v116, %v527
  %v529 = vpop.f32.mrb[0].mxu0
  %v530 = vadd.f32 %v120, %v529
  %v531 = vpop.f32.mrb[0].mxu0
  %v532 = vadd.f32 %v116, %v531
  %v533 = vpop.f32.mrb[0].mxu0
  %v534 = vadd.f32 %v120, %v533
  %535 = vmatprep.mubr.bf16.mxu0 %v160
  %536 = vmatmul.mubr.bf16.gmra.mrb[0].mxu0 %v159
  %v537 = vpop.f32.mrb[0].mxu0
  %v538 = vadd.f32 %v116, %v537
  %v539 = vpop.f32.mrb[0].mxu0
  %v540 = vadd.f32 %v120, %v539
  %v541 = vpop.f32.mrb[0].mxu0
  %v542 = vadd.f32 %v116, %v541
  %v543 = vpop.f32.mrb[0].mxu0
  %v544 = vadd.f32 %v120, %v543
  %545 = vmatprep.mubr.bf16.mxu0 %v162
  %546 = vmatmul.mubr.bf16.gmra.mrb[0].mxu0 %v161
  %v547 = vpop.f32.mrb[0].mxu0
  %v548 = vadd.f32 %v116, %v547
  %v549 = vpop.f32.mrb[0].mxu0
  %v550 = vadd.f32 %v120, %v549
  %v551 = vpop.f32.mrb[0].mxu0
  %v552 = vadd.f32 %v116, %v551
  %v553 = vpop.f32.mrb[0].mxu0
  %v554 = vadd.f32 %v120, %v553
  %555 = vmatprep.mubr.bf16.mxu0 %v164
  %556 = vmatmul.mubr.bf16.gmra.mrb[0].mxu0 %v163
  %v557 = vpop.f32.mrb[0].mxu0
  %v558 = vadd.f32 %v116, %v557
  %v559 = vpop.f32.mrb[0].mxu0
  %v560 = vadd.f32 %v120, %v559
  %v561 = vpop.f32.mrb[0].mxu0
  %v562 = vadd.f32 %v116, %v561
  %v563 = vpop.f32.mrb[0].mxu0
  %v564 = vadd.f32 %v120, %v563
  %565 = vdwg.mxu0
  %566 = vmatprep.subr.bf16.mxu0 %v368
  %567 = vmatpush1.bf16.msra.mxu0 %v367
  %568 = vmatprep.subr.bf16.mxu0 %v372
  %569 = vmatpush1.bf16.msra.mxu0 %v371
  %570 = vmatprep.subr.bf16.mxu0 %v376
  %571 = vmatpush1.bf16.msra.mxu0 %v375
  %572 = vmatprep.subr.bf16.mxu0 %v380
  %573 = vmatpush1.bf16.msra.mxu0 %v379
  %574 = vmatprep.subr.bf16.mxu0 %v384
  %575 = vmatpush1.bf16.msra.mxu0 %v383
  %576 = vmatprep.subr.bf16.mxu0 %v388
  %577 = vmatpush1.bf16.msra.mxu0 %v387
  %578 = vmatprep.subr.bf16.mxu0 %v392
  %579 = vmatpush1.bf16.msra.mxu0 %v391
  %580 = vmatprep.subr.bf16.mxu0 %v396
  %581 = vmatpush1.bf16.msra.mxu0 %v395
  %582 = vmatprep.subr.bf16.mxu0 %v400
  %583 = vmatpush1.bf16.msra.mxu0 %v399
  %584 = vmatprep.subr.bf16.mxu0 %v404
  %585 = vmatpush1.bf16.msra.mxu0 %v403
  %586 = vmatprep.subr.bf16.mxu0 %v408
  %587 = vmatpush1.bf16.msra.mxu0 %v407
  %588 = vmatprep.subr.bf16.mxu0 %v412
  %589 = vmatpush1.bf16.msra.mxu0 %v411
  %590 = vmatprep.subr.bf16.mxu0 %v416
  %591 = vmatpush1.bf16.msra.mxu0 %v415
  %592 = vmatprep.subr.bf16.mxu0 %v420
  %593 = vmatpush1.bf16.msra.mxu0 %v419
  %594 = vmatprep.subr.bf16.mxu0 %v424
  %595 = vmatpush1.bf16.msra.mxu0 %v423
  %596 = vmatprep.subr.bf16.mxu0 %v428
  %597 = vmatpush1.bf16.msra.mxu0 %v427
  %598 = vmatprep.mubr.bf16.mxu0 %v158
  %599 = vmatmul.mubr.bf16.gmra.mrb[0].mxu0 %v157
  %v600 = vpop.f32.mrb[0].mxu0
  %v601 = vadd.f32 %v124, %v600
  %v602 = vpop.f32.mrb[0].mxu0
  %v603 = vadd.f32 %v128, %v602
  %v604 = vpop.f32.mrb[0].mxu0
  %v605 = vadd.f32 %v124, %v604
  %v606 = vpop.f32.mrb[0].mxu0
  %v607 = vadd.f32 %v128, %v606
  %608 = vmatprep.mubr.bf16.mxu0 %v160
  %609 = vmatmul.mubr.bf16.gmra.mrb[0].mxu0 %v159
  %v610 = vpop.f32.mrb[0].mxu0
  %v611 = vadd.f32 %v124, %v610
  %v612 = vpop.f32.mrb[0].mxu0
  %v613 = vadd.f32 %v128, %v612
  %v614 = vpop.f32.mrb[0].mxu0
  %v615 = vadd.f32 %v124, %v614
  %v616 = vpop.f32.mrb[0].mxu0
  %v617 = vadd.f32 %v128, %v616
  %618 = vmatprep.mubr.bf16.mxu0 %v162
  %619 = vmatmul.mubr.bf16.gmra.mrb[0].mxu0 %v161
  %v620 = vpop.f32.mrb[0].mxu0
  %v621 = vadd.f32 %v124, %v620
  %v622 = vpop.f32.mrb[0].mxu0
  %v623 = vadd.f32 %v128, %v622
  %v624 = vpop.f32.mrb[0].mxu0
  %v625 = vadd.f32 %v124, %v624
  %v626 = vpop.f32.mrb[0].mxu0
  %v627 = vadd.f32 %v128, %v626
  %628 = vmatprep.mubr.bf16.mxu0 %v164
  %629 = vmatmul.mubr.bf16.gmra.mrb[0].mxu0 %v163
  %v630 = vpop.f32.mrb[0].mxu0
  %v631 = vadd.f32 %v124, %v630
  %v632 = vpop.f32.mrb[0].mxu0
  %v633 = vadd.f32 %v128, %v632
  %v634 = vpop.f32.mrb[0].mxu0
  %v635 = vadd.f32 %v124, %v634
  %v636 = vpop.f32.mrb[0].mxu0
  %v637 = vadd.f32 %v128, %v636
  %638 = vdwg.mxu0
  %v639 = vmax.f32 %v528, 0.0
  %v640 = vmax.f32 %v530, 0.0
  %v641 = vmax.f32 %v601, 0.0
  %v642 = vmax.f32 %v603, 0.0
  %v643 = vmax.f32 %v532, 0.0
  %v644 = vmax.f32 %v534, 0.0
  %v645 = vmax.f32 %v605, 0.0
  %v646 = vmax.f32 %v607, 0.0
  %v647 = vmax.f32 %v538, 0.0
  %v648 = vmax.f32 %v540, 0.0
  %v649 = vmax.f32 %v611, 0.0
  %v650 = vmax.f32 %v613, 0.0
  %v651 = vmax.f32 %v542, 0.0
  %v652 = vmax.f32 %v544, 0.0
  %v653 = vmax.f32 %v615, 0.0
  %v654 = vmax.f32 %v617, 0.0
  %v655 = vmax.f32 %v548, 0.0
  %v656 = vmax.f32 %v550, 0.0
  %v657 = vmax.f32 %v621, 0.0
  %v658 = vmax.f32 %v623, 0.0
  %v659 = vmax.f32 %v552, 0.0
  %v660 = vmax.f32 %v554, 0.0
  %v661 = vmax.f32 %v625, 0.0
  %v662 = vmax.f32 %v627, 0.0
  %v663 = vmax.f32 %v558, 0.0
  %v664 = vmax.f32 %v560, 0.0
  %v665 = vmax.f32 %v631, 0.0
  %v666 = vmax.f32 %v633, 0.0
  %v667 = vmax.f32 %v562, 0.0
  %v668 = vmax.f32 %v564, 0.0
  %v669 = vmax.f32 %v635, 0.0
  %v670 = vmax.f32 %v637, 0.0
  %v671 = vpack.c.bf16 %v643, %v639
  %v672 = vpack.c.bf16 %v644, %v640
  %v673 = vpack.c.bf16 %v645, %v641
  %v674 = vpack.c.bf16 %v646, %v642
  %v675 = vpack.c.bf16 %v651, %v647
  %v676 = vpack.c.bf16 %v652, %v648
  %v677 = vpack.c.bf16 %v653, %v649
  %v678 = vpack.c.bf16 %v654, %v650
  %v679 = vpack.c.bf16 %v659, %v655
  %v680 = vpack.c.bf16 %v660, %v656
  %v681 = vpack.c.bf16 %v661, %v657
  %v682 = vpack.c.bf16 %v662, %v658
  %v683 = vpack.c.bf16 %v667, %v663
  %v684 = vpack.c.bf16 %v668, %v664
  %v685 = vpack.c.bf16 %v669, %v665
  %v686 = vpack.c.bf16 %v670, %v666
  %v687 = vld [vmem:[%s3] sm:$0xff]
  %v688 = vld [vmem:[%s3 + $0x8] sm:$0xff]
  %v689 = vld [vmem:[%s3 + $0x10] sm:$0xff]
  %v690 = vld [vmem:[%s3 + $0x18] sm:$0xff]
  %v691 = vld [vmem:[%s3 + $0x20] sm:$0xff]
  %v692 = vld [vmem:[%s3 + $0x28] sm:$0xff]
  %v693 = vld [vmem:[%s3 + $0x30] sm:$0xff]
  %v694 = vld [vmem:[%s3 + $0x38] sm:$0xff]
  %v695 = vld [vmem:[%s3 + $0x40] sm:$0xff]
  %v696 = vld [vmem:[%s3 + $0x48] sm:$0xff]
  %v697 = vld [vmem:[%s3 + $0x50] sm:$0xff]
  %v698 = vld [vmem:[%s3 + $0x58] sm:$0xff]
  %v699 = vld [vmem:[%s3 + $0x60] sm:$0xff]
  %v700 = vld [vmem:[%s3 + $0x68] sm:$0xff]
  %v701 = vld [vmem:[%s3 + $0x70] sm:$0xff]
  %v702 = vld [vmem:[%s3 + $0x78] sm:$0xff]
  %v703 = vld [vmem:[%s3 + $0x80] sm:$0xff]
  %v704 = vld [vmem:[%s3 + $0x88] sm:$0xff]
  %v705 = vld [vmem:[%s3 + $0x90] sm:$0xff]
  %v706 = vld [vmem:[%s3 + $0x98] sm:$0xff]
  %v707 = vld [vmem:[%s3 + $0xa0] sm:$0xff]
  %v708 = vld [vmem:[%s3 + $0xa8] sm:$0xff]
  %v709 = vld [vmem:[%s3 + $0xb0] sm:$0xff]
  %v710 = vld [vmem:[%s3 + $0xb8] sm:$0xff]
  %v711 = vld [vmem:[%s3 + $0xc0] sm:$0xff]
  %v712 = vld [vmem:[%s3 + $0xc8] sm:$0xff]
  %v713 = vld [vmem:[%s3 + $0xd0] sm:$0xff]
  %v714 = vld [vmem:[%s3 + $0xd8] sm:$0xff]
  %v715 = vld [vmem:[%s3 + $0xe0] sm:$0xff]
  %v716 = vld [vmem:[%s3 + $0xe8] sm:$0xff]
  %v717 = vld [vmem:[%s3 + $0xf0] sm:$0xff]
  %v718 = vld [vmem:[%s3 + $0xf8] sm:$0xff]
  %v719 = vld [vmem:[%s3 + $0x100] sm:$0xff]
  %v720 = vld [vmem:[%s3 + $0x108] sm:$0xff]
  %v721 = vld [vmem:[%s3 + $0x110] sm:$0xff]
  %v722 = vld [vmem:[%s3 + $0x118] sm:$0xff]
  %v723 = vld [vmem:[%s3 + $0x120] sm:$0xff]
  %v724 = vld [vmem:[%s3 + $0x128] sm:$0xff]
  %v725 = vld [vmem:[%s3 + $0x130] sm:$0xff]
  %v726 = vld [vmem:[%s3 + $0x138] sm:$0xff]
  %v727 = vld [vmem:[%s3 + $0x140] sm:$0xff]
  %v728 = vld [vmem:[%s3 + $0x148] sm:$0xff]
  %v729 = vld [vmem:[%s3 + $0x150] sm:$0xff]
  %v730 = vld [vmem:[%s3 + $0x158] sm:$0xff]
  %v731 = vld [vmem:[%s3 + $0x160] sm:$0xff]
  %v732 = vld [vmem:[%s3 + $0x168] sm:$0xff]
  %v733 = vld [vmem:[%s3 + $0x170] sm:$0xff]
  %v734 = vld [vmem:[%s3 + $0x178] sm:$0xff]
  %v735 = vld [vmem:[%s3 + $0x180] sm:$0xff]
  %v736 = vld [vmem:[%s3 + $0x188] sm:$0xff]
  %v737 = vld [vmem:[%s3 + $0x190] sm:$0xff]
  %v738 = vld [vmem:[%s3 + $0x198] sm:$0xff]
  %v739 = vld [vmem:[%s3 + $0x1a0] sm:$0xff]
  %v740 = vld [vmem:[%s3 + $0x1a8] sm:$0xff]
  %v741 = vld [vmem:[%s3 + $0x1b0] sm:$0xff]
  %v742 = vld [vmem:[%s3 + $0x1b8] sm:$0xff]
  %v743 = vld [vmem:[%s3 + $0x1c0] sm:$0xff]
  %v744 = vld [vmem:[%s3 + $0x1c8] sm:$0xff]
  %v745 = vld [vmem:[%s3 + $0x1d0] sm:$0xff]
  %v746 = vld [vmem:[%s3 + $0x1d8] sm:$0xff]
  %v747 = vld [vmem:[%s3 + $0x1e0] sm:$0xff]
  %v748 = vld [vmem:[%s3 + $0x1e8] sm:$0xff]
  %v749 = vld [vmem:[%s3 + $0x1f0] sm:$0xff]
  %v750 = vld [vmem:[%s3 + $0x1f8] sm:$0xff]
  %v751 = vld [vmem:[%s4] sm:$0x3]
  %v753 = vlaneseq
  %v754 = vshrl.u32 %v753, 7
  %v755 = vsub.s32 0, %v754
  %v756 = vrot.slane %v751, %v755
  %v757 = vlaneseq
  %v758 = vshrl.u32 %v757, 7
  %v759 = vsub.s32 1, %v758
  %v760 = vrot.slane %v751, %v759
  %v827 = vunpack.c.l.b16 %v687
  %v828 = vunpack.c.h.b16 %v687
  %v829 = vunpack.c.l.b16 %v688
  %v830 = vunpack.c.h.b16 %v688
  %v831 = vunpack.c.l.b16 %v689
  %v832 = vunpack.c.h.b16 %v689
  %v833 = vunpack.c.l.b16 %v690
  %v834 = vunpack.c.h.b16 %v690
  %v835 = vunpack.c.l.b16 %v691
  %v836 = vunpack.c.h.b16 %v691
  %v837 = vunpack.c.l.b16 %v692
  %v838 = vunpack.c.h.b16 %v692
  %v839 = vunpack.c.l.b16 %v693
  %v840 = vunpack.c.h.b16 %v693
  %v841 = vunpack.c.l.b16 %v694
  %v842 = vunpack.c.h.b16 %v694
  %v843 = vunpack.c.l.b16 %v695
  %v844 = vunpack.c.h.b16 %v695
  %v845 = vunpack.c.l.b16 %v696
  %v846 = vunpack.c.h.b16 %v696
  %v847 = vunpack.c.l.b16 %v697
  %v848 = vunpack.c.h.b16 %v697
  %v849 = vunpack.c.l.b16 %v698
  %v850 = vunpack.c.h.b16 %v698
  %v851 = vunpack.c.l.b16 %v699
  %v852 = vunpack.c.h.b16 %v699
  %v853 = vunpack.c.l.b16 %v700
  %v854 = vunpack.c.h.b16 %v700
  %v855 = vunpack.c.l.b16 %v701
  %v856 = vunpack.c.h.b16 %v701
  %v857 = vunpack.c.l.b16 %v702
  %v858 = vunpack.c.h.b16 %v702
  %v859 = vunpack.c.l.b16 %v703
  %v860 = vunpack.c.h.b16 %v703
  %v861 = vunpack.c.l.b16 %v704
  %v862 = vunpack.c.h.b16 %v704
  %v863 = vunpack.c.l.b16 %v705
  %v864 = vunpack.c.h.b16 %v705
  %v865 = vunpack.c.l.b16 %v706
  %v866 = vunpack.c.h.b16 %v706
  %v867 = vunpack.c.l.b16 %v707
  %v868 = vunpack.c.h.b16 %v707
  %v869 = vunpack.c.l.b16 %v708
  %v870 = vunpack.c.h.b16 %v708
  %v871 = vunpack.c.l.b16 %v709
  %v872 = vunpack.c.h.b16 %v709
  %v873 = vunpack.c.l.b16 %v710
  %v874 = vunpack.c.h.b16 %v710
  %v875 = vunpack.c.l.b16 %v711
  %v876 = vunpack.c.h.b16 %v711
  %v877 = vunpack.c.l.b16 %v712
  %v878 = vunpack.c.h.b16 %v712
  %v879 = vunpack.c.l.b16 %v713
  %v880 = vunpack.c.h.b16 %v713
  %v881 = vunpack.c.l.b16 %v714
  %v882 = vunpack.c.h.b16 %v714
  %v883 = vunpack.c.l.b16 %v715
  %v884 = vunpack.c.h.b16 %v715
  %v885 = vunpack.c.l.b16 %v716
  %v886 = vunpack.c.h.b16 %v716
  %v887 = vunpack.c.l.b16 %v717
  %v888 = vunpack.c.h.b16 %v717
  %v889 = vunpack.c.l.b16 %v718
  %v890 = vunpack.c.h.b16 %v718
  %v891 = vunpack.c.l.b16 %v719
  %v892 = vunpack.c.h.b16 %v719
  %v893 = vunpack.c.l.b16 %v720
  %v894 = vunpack.c.h.b16 %v720
  %v895 = vunpack.c.l.b16 %v721
  %v896 = vunpack.c.h.b16 %v721
  %v897 = vunpack.c.l.b16 %v722
  %v898 = vunpack.c.h.b16 %v722
  %v899 = vunpack.c.l.b16 %v723
  %v900 = vunpack.c.h.b16 %v723
  %v901 = vunpack.c.l.b16 %v724
  %v902 = vunpack.c.h.b16 %v724
  %v903 = vunpack.c.l.b16 %v725
  %v904 = vunpack.c.h.b16 %v725
  %v905 = vunpack.c.l.b16 %v726
  %v906 = vunpack.c.h.b16 %v726
  %v907 = vunpack.c.l.b16 %v727
  %v908 = vunpack.c.h.b16 %v727
  %v909 = vunpack.c.l.b16 %v728
  %v910 = vunpack.c.h.b16 %v728
  %v911 = vunpack.c.l.b16 %v729
  %v912 = vunpack.c.h.b16 %v729
  %v913 = vunpack.c.l.b16 %v730
  %v914 = vunpack.c.h.b16 %v730
  %v915 = vunpack.c.l.b16 %v731
  %v916 = vunpack.c.h.b16 %v731
  %v917 = vunpack.c.l.b16 %v732
  %v918 = vunpack.c.h.b16 %v732
  %v919 = vunpack.c.l.b16 %v733
  %v920 = vunpack.c.h.b16 %v733
  %v921 = vunpack.c.l.b16 %v734
  %v922 = vunpack.c.h.b16 %v734
  %v923 = vunpack.c.l.b16 %v735
  %v924 = vunpack.c.h.b16 %v735
  %v925 = vunpack.c.l.b16 %v736
  %v926 = vunpack.c.h.b16 %v736
  %v927 = vunpack.c.l.b16 %v737
  %v928 = vunpack.c.h.b16 %v737
  %v929 = vunpack.c.l.b16 %v738
  %v930 = vunpack.c.h.b16 %v738
  %v931 = vunpack.c.l.b16 %v739
  %v932 = vunpack.c.h.b16 %v739
  %v933 = vunpack.c.l.b16 %v740
  %v934 = vunpack.c.h.b16 %v740
  %v935 = vunpack.c.l.b16 %v741
  %v936 = vunpack.c.h.b16 %v741
  %v937 = vunpack.c.l.b16 %v742
  %v938 = vunpack.c.h.b16 %v742
  %v939 = vunpack.c.l.b16 %v743
  %v940 = vunpack.c.h.b16 %v743
  %v941 = vunpack.c.l.b16 %v744
  %v942 = vunpack.c.h.b16 %v744
  %v943 = vunpack.c.l.b16 %v745
  %v944 = vunpack.c.h.b16 %v745
  %v945 = vunpack.c.l.b16 %v746
  %v946 = vunpack.c.h.b16 %v746
  %v947 = vunpack.c.l.b16 %v747
  %v948 = vunpack.c.h.b16 %v747
  %v949 = vunpack.c.l.b16 %v748
  %v950 = vunpack.c.h.b16 %v748
  %v951 = vunpack.c.l.b16 %v749
  %v952 = vunpack.c.h.b16 %v749
  %v953 = vunpack.c.l.b16 %v750
  %v954 = vunpack.c.h.b16 %v750
  %v955 = vpack.c.b16 %v829, %v827
  %v956 = vpack.c.b16 %v830, %v828
  %v957 = vpack.c.b16 %v833, %v831
  %v958 = vpack.c.b16 %v834, %v832
  %v959 = vpack.c.b16 %v837, %v835
  %v960 = vpack.c.b16 %v838, %v836
  %v961 = vpack.c.b16 %v841, %v839
  %v962 = vpack.c.b16 %v842, %v840
  %v963 = vpack.c.b16 %v845, %v843
  %v964 = vpack.c.b16 %v846, %v844
  %v965 = vpack.c.b16 %v849, %v847
  %v966 = vpack.c.b16 %v850, %v848
  %v967 = vpack.c.b16 %v853, %v851
  %v968 = vpack.c.b16 %v854, %v852
  %v969 = vpack.c.b16 %v857, %v855
  %v970 = vpack.c.b16 %v858, %v856
  %v971 = vpack.c.b16 %v861, %v859
  %v972 = vpack.c.b16 %v862, %v860
  %v973 = vpack.c.b16 %v865, %v863
  %v974 = vpack.c.b16 %v866, %v864
  %v975 = vpack.c.b16 %v869, %v867
  %v976 = vpack.c.b16 %v870, %v868
  %v977 = vpack.c.b16 %v873, %v871
  %v978 = vpack.c.b16 %v874, %v872
  %v979 = vpack.c.b16 %v877, %v875
  %v980 = vpack.c.b16 %v878, %v876
  %v981 = vpack.c.b16 %v881, %v879
  %v982 = vpack.c.b16 %v882, %v880
  %v983 = vpack.c.b16 %v885, %v883
  %v984 = vpack.c.b16 %v886, %v884
  %v985 = vpack.c.b16 %v889, %v887
  %v986 = vpack.c.b16 %v890, %v888
  %v987 = vpack.c.b16 %v893, %v891
  %v988 = vpack.c.b16 %v894, %v892
  %v989 = vpack.c.b16 %v897, %v895
  %v990 = vpack.c.b16 %v898, %v896
  %v991 = vpack.c.b16 %v901, %v899
  %v992 = vpack.c.b16 %v902, %v900
  %v993 = vpack.c.b16 %v905, %v903
  %v994 = vpack.c.b16 %v906, %v904
  %v995 = vpack.c.b16 %v909, %v907
  %v996 = vpack.c.b16 %v910, %v908
  %v997 = vpack.c.b16 %v913, %v911
  %v998 = vpack.c.b16 %v914, %v912
  %v999 = vpack.c.b16 %v917, %v915
  %v1000 = vpack.c.b16 %v918, %v916
  %v1001 = vpack.c.b16 %v921, %v919
  %v1002 = vpack.c.b16 %v922, %v920
  %v1003 = vpack.c.b16 %v925, %v923
  %v1004 = vpack.c.b16 %v926, %v924
  %v1005 = vpack.c.b16 %v929, %v927
  %v1006 = vpack.c.b16 %v930, %v928
  %v1007 = vpack.c.b16 %v933, %v931
  %v1008 = vpack.c.b16 %v934, %v932
  %v1009 = vpack.c.b16 %v937, %v935
  %v1010 = vpack.c.b16 %v938, %v936
  %v1011 = vpack.c.b16 %v941, %v939
  %v1012 = vpack.c.b16 %v942, %v940
  %v1013 = vpack.c.b16 %v945, %v943
  %v1014 = vpack.c.b16 %v946, %v944
  %v1015 = vpack.c.b16 %v949, %v947
  %v1016 = vpack.c.b16 %v950, %v948
  %v1017 = vpack.c.b16 %v953, %v951
  %v1018 = vpack.c.b16 %v954, %v952
  %1083 = vmatprep.subr.bf16.mxu0 %v956
  %1084 = vmatpush1.bf16.msra.mxu0 %v955
  %1085 = vmatprep.subr.bf16.mxu0 %v958
  %1086 = vmatpush1.bf16.msra.mxu0 %v957
  %1087 = vmatprep.subr.bf16.mxu0 %v960
  %1088 = vmatpush1.bf16.msra.mxu0 %v959
  %1089 = vmatprep.subr.bf16.mxu0 %v962
  %1090 = vmatpush1.bf16.msra.mxu0 %v961
  %1091 = vmatprep.subr.bf16.mxu0 %v964
  %1092 = vmatpush1.bf16.msra.mxu0 %v963
  %1093 = vmatprep.subr.bf16.mxu0 %v966
  %1094 = vmatpush1.bf16.msra.mxu0 %v965
  %1095 = vmatprep.subr.bf16.mxu0 %v968
  %1096 = vmatpush1.bf16.msra.mxu0 %v967
  %1097 = vmatprep.subr.bf16.mxu0 %v970
  %1098 = vmatpush1.bf16.msra.mxu0 %v969
  %1099 = vmatprep.subr.bf16.mxu0 %v972
  %1100 = vmatpush1.bf16.msra.mxu0 %v971
  %1101 = vmatprep.subr.bf16.mxu0 %v974
  %1102 = vmatpush1.bf16.msra.mxu0 %v973
  %1103 = vmatprep.subr.bf16.mxu0 %v976
  %1104 = vmatpush1.bf16.msra.mxu0 %v975
  %1105 = vmatprep.subr.bf16.mxu0 %v978
  %1106 = vmatpush1.bf16.msra.mxu0 %v977
  %1107 = vmatprep.subr.bf16.mxu0 %v980
  %1108 = vmatpush1.bf16.msra.mxu0 %v979
  %1109 = vmatprep.subr.bf16.mxu0 %v982
  %1110 = vmatpush1.bf16.msra.mxu0 %v981
  %1111 = vmatprep.subr.bf16.mxu0 %v984
  %1112 = vmatpush1.bf16.msra.mxu0 %v983
  %1113 = vmatprep.subr.bf16.mxu0 %v986
  %1114 = vmatpush1.bf16.msra.mxu0 %v985
  %1115 = vmatprep.mubr.bf16.mxu0 %v672
  %1116 = vmatmul.mubr.bf16.gmra.mrb[0].mxu0 %v671
  %v1117 = vpop.f32.mrb[0].mxu0
  %v1118 = vadd.f32 %v756, %v1117
  %v1119 = vpop.f32.mrb[0].mxu0
  %v1120 = vadd.f32 %v760, %v1119
  %v1121 = vpop.f32.mrb[0].mxu0
  %v1122 = vadd.f32 %v756, %v1121
  %v1123 = vpop.f32.mrb[0].mxu0
  %v1124 = vadd.f32 %v760, %v1123
  %1125 = vmatprep.mubr.bf16.mxu0 %v676
  %1126 = vmatmul.mubr.bf16.gmra.mrb[0].mxu0 %v675
  %v1127 = vpop.f32.mrb[0].mxu0
  %v1128 = vadd.f32 %v756, %v1127
  %v1129 = vpop.f32.mrb[0].mxu0
  %v1130 = vadd.f32 %v760, %v1129
  %v1131 = vpop.f32.mrb[0].mxu0
  %v1132 = vadd.f32 %v756, %v1131
  %v1133 = vpop.f32.mrb[0].mxu0
  %v1134 = vadd.f32 %v760, %v1133
  %1135 = vmatprep.mubr.bf16.mxu0 %v680
  %1136 = vmatmul.mubr.bf16.gmra.mrb[0].mxu0 %v679
  %v1137 = vpop.f32.mrb[0].mxu0
  %v1138 = vadd.f32 %v756, %v1137
  %v1139 = vpop.f32.mrb[0].mxu0
  %v1140 = vadd.f32 %v760, %v1139
  %v1141 = vpop.f32.mrb[0].mxu0
  %v1142 = vadd.f32 %v756, %v1141
  %v1143 = vpop.f32.mrb[0].mxu0
  %v1144 = vadd.f32 %v760, %v1143
  %1145 = vmatprep.mubr.bf16.mxu0 %v684
  %1146 = vmatmul.mubr.bf16.gmra.mrb[0].mxu0 %v683
  %v1147 = vpop.f32.mrb[0].mxu0
  %v1148 = vadd.f32 %v756, %v1147
  %v1149 = vpop.f32.mrb[0].mxu0
  %v1150 = vadd.f32 %v760, %v1149
  %v1151 = vpop.f32.mrb[0].mxu0
  %v1152 = vadd.f32 %v756, %v1151
  %v1153 = vpop.f32.mrb[0].mxu0
  %v1154 = vadd.f32 %v760, %v1153
  %1155 = vdwg.mxu0
  %1156 = vmatprep.subr.bf16.mxu0 %v988
  %1157 = vmatpush1.bf16.msra.mxu0 %v987
  %1158 = vmatprep.subr.bf16.mxu0 %v990
  %1159 = vmatpush1.bf16.msra.mxu0 %v989
  %1160 = vmatprep.subr.bf16.mxu0 %v992
  %1161 = vmatpush1.bf16.msra.mxu0 %v991
  %1162 = vmatprep.subr.bf16.mxu0 %v994
  %1163 = vmatpush1.bf16.msra.mxu0 %v993
  %1164 = vmatprep.subr.bf16.mxu0 %v996
  %1165 = vmatpush1.bf16.msra.mxu0 %v995
  %1166 = vmatprep.subr.bf16.mxu0 %v998
  %1167 = vmatpush1.bf16.msra.mxu0 %v997
  %1168 = vmatprep.subr.bf16.mxu0 %v1000
  %1169 = vmatpush1.bf16.msra.mxu0 %v999
  %1170 = vmatprep.subr.bf16.mxu0 %v1002
  %1171 = vmatpush1.bf16.msra.mxu0 %v1001
  %1172 = vmatprep.subr.bf16.mxu0 %v1004
  %1173 = vmatpush1.bf16.msra.mxu0 %v1003
  %1174 = vmatprep.subr.bf16.mxu0 %v1006
  %1175 = vmatpush1.bf16.msra.mxu0 %v1005
  %1176 = vmatprep.subr.bf16.mxu0 %v1008
  %1177 = vmatpush1.bf16.msra.mxu0 %v1007
  %1178 = vmatprep.subr.bf16.mxu0 %v1010
  %1179 = vmatpush1.bf16.msra.mxu0 %v1009
  %1180 = vmatprep.subr.bf16.mxu0 %v1012
  %1181 = vmatpush1.bf16.msra.mxu0 %v1011
  %1182 = vmatprep.subr.bf16.mxu0 %v1014
  %1183 = vmatpush1.bf16.msra.mxu0 %v1013
  %1184 = vmatprep.subr.bf16.mxu0 %v1016
  %1185 = vmatpush1.bf16.msra.mxu0 %v1015
  %1186 = vmatprep.subr.bf16.mxu0 %v1018
  %1187 = vmatpush1.bf16.msra.mxu0 %v1017
  %1188 = vmatprep.mubr.bf16.mxu0 %v674
  %1189 = vmatmul.mubr.bf16.gmra.mrb[0].mxu0 %v673
  %v1190 = vpop.f32.mrb[0].mxu0
  %v1191 = vadd.f32 %v1118, %v1190
  %v1192 = vpop.f32.mrb[0].mxu0
  %v1193 = vadd.f32 %v1120, %v1192
  %v1194 = vpop.f32.mrb[0].mxu0
  %v1195 = vadd.f32 %v1122, %v1194
  %v1196 = vpop.f32.mrb[0].mxu0
  %v1197 = vadd.f32 %v1124, %v1196
  %1198 = vmatprep.mubr.bf16.mxu0 %v678
  %1199 = vmatmul.mubr.bf16.gmra.mrb[0].mxu0 %v677
  %v1200 = vpop.f32.mrb[0].mxu0
  %v1201 = vadd.f32 %v1128, %v1200
  %v1202 = vpop.f32.mrb[0].mxu0
  %v1203 = vadd.f32 %v1130, %v1202
  %v1204 = vpop.f32.mrb[0].mxu0
  %v1205 = vadd.f32 %v1132, %v1204
  %v1206 = vpop.f32.mrb[0].mxu0
  %v1207 = vadd.f32 %v1134, %v1206
  %1208 = vmatprep.mubr.bf16.mxu0 %v682
  %1209 = vmatmul.mubr.bf16.gmra.mrb[0].mxu0 %v681
  %v1210 = vpop.f32.mrb[0].mxu0
  %v1211 = vadd.f32 %v1138, %v1210
  %v1212 = vpop.f32.mrb[0].mxu0
  %v1213 = vadd.f32 %v1140, %v1212
  %v1214 = vpop.f32.mrb[0].mxu0
  %v1215 = vadd.f32 %v1142, %v1214
  %v1216 = vpop.f32.mrb[0].mxu0
  %v1217 = vadd.f32 %v1144, %v1216
  %1218 = vmatprep.mubr.bf16.mxu0 %v686
  %1219 = vmatmul.mubr.bf16.gmra.mrb[0].mxu0 %v685
  %v1220 = vpop.f32.mrb[0].mxu0
  %v1221 = vadd.f32 %v1148, %v1220
  %v1222 = vpop.f32.mrb[0].mxu0
  %v1223 = vadd.f32 %v1150, %v1222
  %v1224 = vpop.f32.mrb[0].mxu0
  %v1225 = vadd.f32 %v1152, %v1224
  %v1226 = vpop.f32.mrb[0].mxu0
  %v1227 = vadd.f32 %v1154, %v1226
  %1228 = vdwg.mxu0
  %v1229 = vtanh.pop %v1191
  %v1230 = vtanh.pop %v1193
  %v1231 = vtanh.pop %v1195
  %v1232 = vtanh.pop %v1197
  %v1233 = vtanh.pop %v1201
  %v1234 = vtanh.pop %v1203
  %v1235 = vtanh.pop %v1205
  %v1236 = vtanh.pop %v1207
  %v1237 = vtanh.pop %v1211
  %v1238 = vtanh.pop %v1213
  %v1239 = vtanh.pop %v1215
  %v1240 = vtanh.pop %v1217
  %v1241 = vtanh.pop %v1221
  %v1242 = vtanh.pop %v1223
  %v1243 = vtanh.pop %v1225
  %v1244 = vtanh.pop %v1227
  %v1245 = vpack.c.bf16 %v1231, %v1229
  %v1246 = vpack.c.bf16 %v1232, %v1230
  %v1247 = vpack.c.bf16 %v1235, %v1233
  %v1248 = vpack.c.bf16 %v1236, %v1234
  %v1249 = vpack.c.bf16 %v1239, %v1237
  %v1250 = vpack.c.bf16 %v1240, %v1238
  %v1251 = vpack.c.bf16 %v1243, %v1241
  %v1252 = vpack.c.bf16 %v1244, %v1242
  %v1253 = vld [vmem:[%s5] sm:$0xff]
  %v1254 = vld [vmem:[%s5 + $0x8] sm:$0xff]
  %v1255 = vld [vmem:[%s5 + $0x10] sm:$0xff]
  %v1256 = vld [vmem:[%s5 + $0x18] sm:$0xff]
  %v1257 = vld [vmem:[%s5 + $0x20] sm:$0xff]
  %v1258 = vld [vmem:[%s5 + $0x28] sm:$0xff]
  %v1259 = vld [vmem:[%s5 + $0x30] sm:$0xff]
  %v1260 = vld [vmem:[%s5 + $0x38] sm:$0xff]
  %v1261 = vld [vmem:[%s5 + $0x40] sm:$0xff]
  %v1262 = vld [vmem:[%s5 + $0x48] sm:$0xff]
  %v1263 = vld [vmem:[%s5 + $0x50] sm:$0xff]
  %v1264 = vld [vmem:[%s5 + $0x58] sm:$0xff]
  %v1265 = vld [vmem:[%s5 + $0x60] sm:$0xff]
  %v1266 = vld [vmem:[%s5 + $0x68] sm:$0xff]
  %v1267 = vld [vmem:[%s5 + $0x70] sm:$0xff]
  %v1268 = vld [vmem:[%s5 + $0x78] sm:$0xff]
  %v1269 = vld [vmem:[%s5 + $0x80] sm:$0xff]
  %v1270 = vld [vmem:[%s5 + $0x88] sm:$0xff]
  %v1271 = vld [vmem:[%s5 + $0x90] sm:$0xff]
  %v1272 = vld [vmem:[%s5 + $0x98] sm:$0xff]
  %v1273 = vld [vmem:[%s5 + $0xa0] sm:$0xff]
  %v1274 = vld [vmem:[%s5 + $0xa8] sm:$0xff]
  %v1275 = vld [vmem:[%s5 + $0xb0] sm:$0xff]
  %v1276 = vld [vmem:[%s5 + $0xb8] sm:$0xff]
  %v1277 = vld [vmem:[%s5 + $0xc0] sm:$0xff]
  %v1278 = vld [vmem:[%s5 + $0xc8] sm:$0xff]
  %v1279 = vld [vmem:[%s5 + $0xd0] sm:$0xff]
  %v1280 = vld [vmem:[%s5 + $0xd8] sm:$0xff]
  %v1281 = vld [vmem:[%s5 + $0xe0] sm:$0xff]
  %v1282 = vld [vmem:[%s5 + $0xe8] sm:$0xff]
  %v1283 = vld [vmem:[%s5 + $0xf0] sm:$0xff]
  %v1284 = vld [vmem:[%s5 + $0xf8] sm:$0xff]
  %v1285 = vld [vmem:[%s5 + $0x100] sm:$0xff]
  %v1286 = vld [vmem:[%s5 + $0x108] sm:$0xff]
  %v1287 = vld [vmem:[%s5 + $0x110] sm:$0xff]
  %v1288 = vld [vmem:[%s5 + $0x118] sm:$0xff]
  %v1289 = vld [vmem:[%s5 + $0x120] sm:$0xff]
  %v1290 = vld [vmem:[%s5 + $0x128] sm:$0xff]
  %v1291 = vld [vmem:[%s5 + $0x130] sm:$0xff]
  %v1292 = vld [vmem:[%s5 + $0x138] sm:$0xff]
  %v1293 = vld [vmem:[%s5 + $0x140] sm:$0xff]
  %v1294 = vld [vmem:[%s5 + $0x148] sm:$0xff]
  %v1295 = vld [vmem:[%s5 + $0x150] sm:$0xff]
  %v1296 = vld [vmem:[%s5 + $0x158] sm:$0xff]
  %v1297 = vld [vmem:[%s5 + $0x160] sm:$0xff]
  %v1298 = vld [vmem:[%s5 + $0x168] sm:$0xff]
  %v1299 = vld [vmem:[%s5 + $0x170] sm:$0xff]
  %v1300 = vld [vmem:[%s5 + $0x178] sm:$0xff]
  %v1301 = vld [vmem:[%s5 + $0x180] sm:$0xff]
  %v1302 = vld [vmem:[%s5 + $0x188] sm:$0xff]
  %v1303 = vld [vmem:[%s5 + $0x190] sm:$0xff]
  %v1304 = vld [vmem:[%s5 + $0x198] sm:$0xff]
  %v1305 = vld [vmem:[%s5 + $0x1a0] sm:$0xff]
  %v1306 = vld [vmem:[%s5 + $0x1a8] sm:$0xff]
  %v1307 = vld [vmem:[%s5 + $0x1b0] sm:$0xff]
  %v1308 = vld [vmem:[%s5 + $0x1b8] sm:$0xff]
  %v1309 = vld [vmem:[%s5 + $0x1c0] sm:$0xff]
  %v1310 = vld [vmem:[%s5 + $0x1c8] sm:$0xff]
  %v1311 = vld [vmem:[%s5 + $0x1d0] sm:$0xff]
  %v1312 = vld [vmem:[%s5 + $0x1d8] sm:$0xff]
  %v1313 = vld [vmem:[%s5 + $0x1e0] sm:$0xff]
  %v1314 = vld [vmem:[%s5 + $0x1e8] sm:$0xff]
  %v1315 = vld [vmem:[%s5 + $0x1f0] sm:$0xff]
  %v1316 = vld [vmem:[%s5 + $0x1f8] sm:$0xff]
  %v1317 = vld [vmem:[%s5 + $0x200] sm:$0xff]
  %v1318 = vld [vmem:[%s5 + $0x208] sm:$0xff]
  %v1319 = vld [vmem:[%s5 + $0x210] sm:$0xff]
  %v1320 = vld [vmem:[%s5 + $0x218] sm:$0xff]
  %v1321 = vld [vmem:[%s5 + $0x220] sm:$0xff]
  %v1322 = vld [vmem:[%s5 + $0x228] sm:$0xff]
  %v1323 = vld [vmem:[%s5 + $0x230] sm:$0xff]
  %v1324 = vld [vmem:[%s5 + $0x238] sm:$0xff]
  %v1325 = vld [vmem:[%s5 + $0x240] sm:$0xff]
  %v1326 = vld [vmem:[%s5 + $0x248] sm:$0xff]
  %v1327 = vld [vmem:[%s5 + $0x250] sm:$0xff]
  %v1328 = vld [vmem:[%s5 + $0x258] sm:$0xff]
  %v1329 = vld [vmem:[%s5 + $0x260] sm:$0xff]
  %v1330 = vld [vmem:[%s5 + $0x268] sm:$0xff]
  %v1331 = vld [vmem:[%s5 + $0x270] sm:$0xff]
  %v1332 = vld [vmem:[%s5 + $0x278] sm:$0xff]
  %v1333 = vld [vmem:[%s5 + $0x280] sm:$0xff]
  %v1334 = vld [vmem:[%s5 + $0x288] sm:$0xff]
  %v1335 = vld [vmem:[%s5 + $0x290] sm:$0xff]
  %v1336 = vld [vmem:[%s5 + $0x298] sm:$0xff]
  %v1337 = vld [vmem:[%s5 + $0x2a0] sm:$0xff]
  %v1338 = vld [vmem:[%s5 + $0x2a8] sm:$0xff]
  %v1339 = vld [vmem:[%s5 + $0x2b0] sm:$0xff]
  %v1340 = vld [vmem:[%s5 + $0x2b8] sm:$0xff]
  %v1341 = vld [vmem:[%s5 + $0x2c0] sm:$0xff]
  %v1342 = vld [vmem:[%s5 + $0x2c8] sm:$0xff]
  %v1343 = vld [vmem:[%s5 + $0x2d0] sm:$0xff]
  %v1344 = vld [vmem:[%s5 + $0x2d8] sm:$0xff]
  %v1345 = vld [vmem:[%s5 + $0x2e0] sm:$0xff]
  %v1346 = vld [vmem:[%s5 + $0x2e8] sm:$0xff]
  %v1347 = vld [vmem:[%s5 + $0x2f0] sm:$0xff]
  %v1348 = vld [vmem:[%s5 + $0x2f8] sm:$0xff]
  %v1349 = vld [vmem:[%s7] sm:$0x3f]
  %v1351 = vlaneseq
  %v1352 = vshrl.u32 %v1351, 7
  %v1353 = vsub.s32 0, %v1352
  %v1354 = vrot.slane %v1349, %v1353
  %v1355 = vlaneseq
  %v1356 = vshrl.u32 %v1355, 7
  %v1357 = vsub.s32 1, %v1356
  %v1358 = vrot.slane %v1349, %v1357
  %v1359 = vlaneseq
  %v1360 = vshrl.u32 %v1359, 7
  %v1361 = vsub.s32 2, %v1360
  %v1362 = vrot.slane %v1349, %v1361
  %v1363 = vlaneseq
  %v1364 = vshrl.u32 %v1363, 7
  %v1365 = vsub.s32 3, %v1364
  %v1366 = vrot.slane %v1349, %v1365
  %v1367 = vlaneseq
  %v1368 = vshrl.u32 %v1367, 7
  %v1369 = vsub.s32 4, %v1368
  %v1370 = vrot.slane %v1349, %v1369
  %v1371 = vlaneseq
  %v1372 = vshrl.u32 %v1371, 7
  %v1373 = vsub.s32 5, %v1372
  %v1374 = vrot.slane %v1349, %v1373
  %v1477 = vunpack.c.l.b16 %v1253
  %v1478 = vunpack.c.h.b16 %v1253
  %v1479 = vunpack.c.l.b16 %v1254
  %v1480 = vunpack.c.h.b16 %v1254
  %v1481 = vunpack.c.l.b16 %v1255
  %v1482 = vunpack.c.h.b16 %v1255
  %v1483 = vunpack.c.l.b16 %v1256
  %v1484 = vunpack.c.h.b16 %v1256
  %v1485 = vunpack.c.l.b16 %v1257
  %v1486 = vunpack.c.h.b16 %v1257
  %v1487 = vunpack.c.l.b16 %v1258
  %v1488 = vunpack.c.h.b16 %v1258
  %v1489 = vunpack.c.l.b16 %v1259
  %v1490 = vunpack.c.h.b16 %v1259
  %v1491 = vunpack.c.l.b16 %v1260
  %v1492 = vunpack.c.h.b16 %v1260
  %v1493 = vunpack.c.l.b16 %v1261
  %v1494 = vunpack.c.h.b16 %v1261
  %v1495 = vunpack.c.l.b16 %v1262
  %v1496 = vunpack.c.h.b16 %v1262
  %v1497 = vunpack.c.l.b16 %v1263
  %v1498 = vunpack.c.h.b16 %v1263
  %v1499 = vunpack.c.l.b16 %v1264
  %v1500 = vunpack.c.h.b16 %v1264
  %v1501 = vunpack.c.l.b16 %v1265
  %v1502 = vunpack.c.h.b16 %v1265
  %v1503 = vunpack.c.l.b16 %v1266
  %v1504 = vunpack.c.h.b16 %v1266
  %v1505 = vunpack.c.l.b16 %v1267
  %v1506 = vunpack.c.h.b16 %v1267
  %v1507 = vunpack.c.l.b16 %v1268
  %v1508 = vunpack.c.h.b16 %v1268
  %v1509 = vunpack.c.l.b16 %v1269
  %v1510 = vunpack.c.h.b16 %v1269
  %v1511 = vunpack.c.l.b16 %v1270
  %v1512 = vunpack.c.h.b16 %v1270
  %v1513 = vunpack.c.l.b16 %v1271
  %v1514 = vunpack.c.h.b16 %v1271
  %v1515 = vunpack.c.l.b16 %v1272
  %v1516 = vunpack.c.h.b16 %v1272
  %v1517 = vunpack.c.l.b16 %v1273
  %v1518 = vunpack.c.h.b16 %v1273
  %v1519 = vunpack.c.l.b16 %v1274
  %v1520 = vunpack.c.h.b16 %v1274
  %v1521 = vunpack.c.l.b16 %v1275
  %v1522 = vunpack.c.h.b16 %v1275
  %v1523 = vunpack.c.l.b16 %v1276
  %v1524 = vunpack.c.h.b16 %v1276
  %v1525 = vunpack.c.l.b16 %v1277
  %v1526 = vunpack.c.h.b16 %v1277
  %v1527 = vunpack.c.l.b16 %v1278
  %v1528 = vunpack.c.h.b16 %v1278
  %v1529 = vunpack.c.l.b16 %v1279
  %v1530 = vunpack.c.h.b16 %v1279
  %v1531 = vunpack.c.l.b16 %v1280
  %v1532 = vunpack.c.h.b16 %v1280
  %v1533 = vunpack.c.l.b16 %v1281
  %v1534 = vunpack.c.h.b16 %v1281
  %v1535 = vunpack.c.l.b16 %v1282
  %v1536 = vunpack.c.h.b16 %v1282
  %v1537 = vunpack.c.l.b16 %v1283
  %v1538 = vunpack.c.h.b16 %v1283
  %v1539 = vunpack.c.l.b16 %v1284
  %v1540 = vunpack.c.h.b16 %v1284
  %v1541 = vunpack.c.l.b16 %v1285
  %v1542 = vunpack.c.h.b16 %v1285
  %v1543 = vunpack.c.l.b16 %v1286
  %v1544 = vunpack.c.h.b16 %v1286
  %v1545 = vunpack.c.l.b16 %v1287
  %v1546 = vunpack.c.h.b16 %v1287
  %v1547 = vunpack.c.l.b16 %v1288
  %v1548 = vunpack.c.h.b16 %v1288
  %v1549 = vunpack.c.l.b16 %v1289
  %v1550 = vunpack.c.h.b16 %v1289
  %v1551 = vunpack.c.l.b16 %v1290
  %v1552 = vunpack.c.h.b16 %v1290
  %v1553 = vunpack.c.l.b16 %v1291
  %v1554 = vunpack.c.h.b16 %v1291
  %v1555 = vunpack.c.l.b16 %v1292
  %v1556 = vunpack.c.h.b16 %v1292
  %v1557 = vunpack.c.l.b16 %v1293
  %v1558 = vunpack.c.h.b16 %v1293
  %v1559 = vunpack.c.l.b16 %v1294
  %v1560 = vunpack.c.h.b16 %v1294
  %v1561 = vunpack.c.l.b16 %v1295
  %v1562 = vunpack.c.h.b16 %v1295
  %v1563 = vunpack.c.l.b16 %v1296
  %v1564 = vunpack.c.h.b16 %v1296
  %v1565 = vunpack.c.l.b16 %v1297
  %v1566 = vunpack.c.h.b16 %v1297
  %v1567 = vunpack.c.l.b16 %v1298
  %v1568 = vunpack.c.h.b16 %v1298
  %v1569 = vunpack.c.l.b16 %v1299
  %v1570 = vunpack.c.h.b16 %v1299
  %v1571 = vunpack.c.l.b16 %v1300
  %v1572 = vunpack.c.h.b16 %v1300
  %v1573 = vunpack.c.l.b16 %v1301
  %v1574 = vunpack.c.h.b16 %v1301
  %v1575 = vunpack.c.l.b16 %v1302
  %v1576 = vunpack.c.h.b16 %v1302
  %v1577 = vunpack.c.l.b16 %v1303
  %v1578 = vunpack.c.h.b16 %v1303
  %v1579 = vunpack.c.l.b16 %v1304
  %v1580 = vunpack.c.h.b16 %v1304
  %v1581 = vunpack.c.l.b16 %v1305
  %v1582 = vunpack.c.h.b16 %v1305
  %v1583 = vunpack.c.l.b16 %v1306
  %v1584 = vunpack.c.h.b16 %v1306
  %v1585 = vunpack.c.l.b16 %v1307
  %v1586 = vunpack.c.h.b16 %v1307
  %v1587 = vunpack.c.l.b16 %v1308
  %v1588 = vunpack.c.h.b16 %v1308
  %v1589 = vunpack.c.l.b16 %v1309
  %v1590 = vunpack.c.h.b16 %v1309
  %v1591 = vunpack.c.l.b16 %v1310
  %v1592 = vunpack.c.h.b16 %v1310
  %v1593 = vunpack.c.l.b16 %v1311
  %v1594 = vunpack.c.h.b16 %v1311
  %v1595 = vunpack.c.l.b16 %v1312
  %v1596 = vunpack.c.h.b16 %v1312
  %v1597 = vunpack.c.l.b16 %v1313
  %v1598 = vunpack.c.h.b16 %v1313
  %v1599 = vunpack.c.l.b16 %v1314
  %v1600 = vunpack.c.h.b16 %v1314
  %v1601 = vunpack.c.l.b16 %v1315
  %v1602 = vunpack.c.h.b16 %v1315
  %v1603 = vunpack.c.l.b16 %v1316
  %v1604 = vunpack.c.h.b16 %v1316
  %v1605 = vunpack.c.l.b16 %v1317
  %v1606 = vunpack.c.h.b16 %v1317
  %v1607 = vunpack.c.l.b16 %v1318
  %v1608 = vunpack.c.h.b16 %v1318
  %v1609 = vunpack.c.l.b16 %v1319
  %v1610 = vunpack.c.h.b16 %v1319
  %v1611 = vunpack.c.l.b16 %v1320
  %v1612 = vunpack.c.h.b16 %v1320
  %v1613 = vunpack.c.l.b16 %v1321
  %v1614 = vunpack.c.h.b16 %v1321
  %v1615 = vunpack.c.l.b16 %v1322
  %v1616 = vunpack.c.h.b16 %v1322
  %v1617 = vunpack.c.l.b16 %v1323
  %v1618 = vunpack.c.h.b16 %v1323
  %v1619 = vunpack.c.l.b16 %v1324
  %v1620 = vunpack.c.h.b16 %v1324
  %v1621 = vunpack.c.l.b16 %v1325
  %v1622 = vunpack.c.h.b16 %v1325
  %v1623 = vunpack.c.l.b16 %v1326
  %v1624 = vunpack.c.h.b16 %v1326
  %v1625 = vunpack.c.l.b16 %v1327
  %v1626 = vunpack.c.h.b16 %v1327
  %v1627 = vunpack.c.l.b16 %v1328
  %v1628 = vunpack.c.h.b16 %v1328
  %v1629 = vunpack.c.l.b16 %v1329
  %v1630 = vunpack.c.h.b16 %v1329
  %v1631 = vunpack.c.l.b16 %v1330
  %v1632 = vunpack.c.h.b16 %v1330
  %v1633 = vunpack.c.l.b16 %v1331
  %v1634 = vunpack.c.h.b16 %v1331
  %v1635 = vunpack.c.l.b16 %v1332
  %v1636 = vunpack.c.h.b16 %v1332
  %v1637 = vunpack.c.l.b16 %v1333
  %v1638 = vunpack.c.h.b16 %v1333
  %v1639 = vunpack.c.l.b16 %v1334
  %v1640 = vunpack.c.h.b16 %v1334
  %v1641 = vunpack.c.l.b16 %v1335
  %v1642 = vunpack.c.h.b16 %v1335
  %v1643 = vunpack.c.l.b16 %v1336
  %v1644 = vunpack.c.h.b16 %v1336
  %v1645 = vunpack.c.l.b16 %v1337
  %v1646 = vunpack.c.h.b16 %v1337
  %v1647 = vunpack.c.l.b16 %v1338
  %v1648 = vunpack.c.h.b16 %v1338
  %v1649 = vunpack.c.l.b16 %v1339
  %v1650 = vunpack.c.h.b16 %v1339
  %v1651 = vunpack.c.l.b16 %v1340
  %v1652 = vunpack.c.h.b16 %v1340
  %v1653 = vunpack.c.l.b16 %v1341
  %v1654 = vunpack.c.h.b16 %v1341
  %v1655 = vunpack.c.l.b16 %v1342
  %v1656 = vunpack.c.h.b16 %v1342
  %v1657 = vunpack.c.l.b16 %v1343
  %v1658 = vunpack.c.h.b16 %v1343
  %v1659 = vunpack.c.l.b16 %v1344
  %v1660 = vunpack.c.h.b16 %v1344
  %v1661 = vunpack.c.l.b16 %v1345
  %v1662 = vunpack.c.h.b16 %v1345
  %v1663 = vunpack.c.l.b16 %v1346
  %v1664 = vunpack.c.h.b16 %v1346
  %v1665 = vunpack.c.l.b16 %v1347
  %v1666 = vunpack.c.h.b16 %v1347
  %v1667 = vunpack.c.l.b16 %v1348
  %v1668 = vunpack.c.h.b16 %v1348
  %v1669 = vpack.c.b16 %v1483, %v1477
  %v1670 = vpack.c.b16 %v1484, %v1478
  %v1671 = vpack.c.b16 %v1485, %v1479
  %v1672 = vpack.c.b16 %v1486, %v1480
  %v1673 = vpack.c.b16 %v1487, %v1481
  %v1674 = vpack.c.b16 %v1488, %v1482
  %v1675 = vpack.c.b16 %v1495, %v1489
  %v1676 = vpack.c.b16 %v1496, %v1490
  %v1677 = vpack.c.b16 %v1497, %v1491
  %v1678 = vpack.c.b16 %v1498, %v1492
  %v1679 = vpack.c.b16 %v1499, %v1493
  %v1680 = vpack.c.b16 %v1500, %v1494
  %v1681 = vpack.c.b16 %v1507, %v1501
  %v1682 = vpack.c.b16 %v1508, %v1502
  %v1683 = vpack.c.b16 %v1509, %v1503
  %v1684 = vpack.c.b16 %v1510, %v1504
  %v1685 = vpack.c.b16 %v1511, %v1505
  %v1686 = vpack.c.b16 %v1512, %v1506
  %v1687 = vpack.c.b16 %v1519, %v1513
  %v1688 = vpack.c.b16 %v1520, %v1514
  %v1689 = vpack.c.b16 %v1521, %v1515
  %v1690 = vpack.c.b16 %v1522, %v1516
  %v1691 = vpack.c.b16 %v1523, %v1517
  %v1692 = vpack.c.b16 %v1524, %v1518
  %v1693 = vpack.c.b16 %v1531, %v1525
  %v1694 = vpack.c.b16 %v1532, %v1526
  %v1695 = vpack.c.b16 %v1533, %v1527
  %v1696 = vpack.c.b16 %v1534, %v1528
  %v1697 = vpack.c.b16 %v1535, %v1529
  %v1698 = vpack.c.b16 %v1536, %v1530
  %v1699 = vpack.c.b16 %v1543, %v1537
  %v1700 = vpack.c.b16 %v1544, %v1538
  %v1701 = vpack.c.b16 %v1545, %v1539
  %v1702 = vpack.c.b16 %v1546, %v1540
  %v1703 = vpack.c.b16 %v1547, %v1541
  %v1704 = vpack.c.b16 %v1548, %v1542
  %v1705 = vpack.c.b16 %v1555, %v1549
  %v1706 = vpack.c.b16 %v1556, %v1550
  %v1707 = vpack.c.b16 %v1557, %v1551
  %v1708 = vpack.c.b16 %v1558, %v1552
  %v1709 = vpack.c.b16 %v1559, %v1553
  %v1710 = vpack.c.b16 %v1560, %v1554
  %v1711 = vpack.c.b16 %v1567, %v1561
  %v1712 = vpack.c.b16 %v1568, %v1562
  %v1713 = vpack.c.b16 %v1569, %v1563
  %v1714 = vpack.c.b16 %v1570, %v1564
  %v1715 = vpack.c.b16 %v1571, %v1565
  %v1716 = vpack.c.b16 %v1572, %v1566
  %v1717 = vpack.c.b16 %v1579, %v1573
  %v1718 = vpack.c.b16 %v1580, %v1574
  %v1719 = vpack.c.b16 %v1581, %v1575
  %v1720 = vpack.c.b16 %v1582, %v1576
  %v1721 = vpack.c.b16 %v1583, %v1577
  %v1722 = vpack.c.b16 %v1584, %v1578
  %v1723 = vpack.c.b16 %v1591, %v1585
  %v1724 = vpack.c.b16 %v1592, %v1586
  %v1725 = vpack.c.b16 %v1593, %v1587
  %v1726 = vpack.c.b16 %v1594, %v1588
  %v1727 = vpack.c.b16 %v1595, %v1589
  %v1728 = vpack.c.b16 %v1596, %v1590
  %v1729 = vpack.c.b16 %v1603, %v1597
  %v1730 = vpack.c.b16 %v1604, %v1598
  %v1731 = vpack.c.b16 %v1605, %v1599
  %v1732 = vpack.c.b16 %v1606, %v1600
  %v1733 = vpack.c.b16 %v1607, %v1601
  %v1734 = vpack.c.b16 %v1608, %v1602
  %v1735 = vpack.c.b16 %v1615, %v1609
  %v1736 = vpack.c.b16 %v1616, %v1610
  %v1737 = vpack.c.b16 %v1617, %v1611
  %v1738 = vpack.c.b16 %v1618, %v1612
  %v1739 = vpack.c.b16 %v1619, %v1613
  %v1740 = vpack.c.b16 %v1620, %v1614
  %v1741 = vpack.c.b16 %v1627, %v1621
  %v1742 = vpack.c.b16 %v1628, %v1622
  %v1743 = vpack.c.b16 %v1629, %v1623
  %v1744 = vpack.c.b16 %v1630, %v1624
  %v1745 = vpack.c.b16 %v1631, %v1625
  %v1746 = vpack.c.b16 %v1632, %v1626
  %v1747 = vpack.c.b16 %v1639, %v1633
  %v1748 = vpack.c.b16 %v1640, %v1634
  %v1749 = vpack.c.b16 %v1641, %v1635
  %v1750 = vpack.c.b16 %v1642, %v1636
  %v1751 = vpack.c.b16 %v1643, %v1637
  %v1752 = vpack.c.b16 %v1644, %v1638
  %v1753 = vpack.c.b16 %v1651, %v1645
  %v1754 = vpack.c.b16 %v1652, %v1646
  %v1755 = vpack.c.b16 %v1653, %v1647
  %v1756 = vpack.c.b16 %v1654, %v1648
  %v1757 = vpack.c.b16 %v1655, %v1649
  %v1758 = vpack.c.b16 %v1656, %v1650
  %v1759 = vpack.c.b16 %v1663, %v1657
  %v1760 = vpack.c.b16 %v1664, %v1658
  %v1761 = vpack.c.b16 %v1665, %v1659
  %v1762 = vpack.c.b16 %v1666, %v1660
  %v1763 = vpack.c.b16 %v1667, %v1661
  %v1764 = vpack.c.b16 %v1668, %v1662
  %1861 = vmatprep.subr.bf16.mxu0 %v1670
  %1862 = vmatpush1.bf16.msra.mxu0 %v1669
  %1863 = vmatprep.subr.bf16.mxu0 %v1676
  %1864 = vmatpush1.bf16.msra.mxu0 %v1675
  %1865 = vmatprep.subr.bf16.mxu0 %v1682
  %1866 = vmatpush1.bf16.msra.mxu0 %v1681
  %1867 = vmatprep.subr.bf16.mxu0 %v1688
  %1868 = vmatpush1.bf16.msra.mxu0 %v1687
  %1869 = vmatprep.subr.bf16.mxu0 %v1694
  %1870 = vmatpush1.bf16.msra.mxu0 %v1693
  %1871 = vmatprep.subr.bf16.mxu0 %v1700
  %1872 = vmatpush1.bf16.msra.mxu0 %v1699
  %1873 = vmatprep.subr.bf16.mxu0 %v1706
  %1874 = vmatpush1.bf16.msra.mxu0 %v1705
  %1875 = vmatprep.subr.bf16.mxu0 %v1712
  %1876 = vmatpush1.bf16.msra.mxu0 %v1711
  %1877 = vmatprep.subr.bf16.mxu0 %v1718
  %1878 = vmatpush1.bf16.msra.mxu0 %v1717
  %1879 = vmatprep.subr.bf16.mxu0 %v1724
  %1880 = vmatpush1.bf16.msra.mxu0 %v1723
  %1881 = vmatprep.subr.bf16.mxu0 %v1730
  %1882 = vmatpush1.bf16.msra.mxu0 %v1729
  %1883 = vmatprep.subr.bf16.mxu0 %v1736
  %1884 = vmatpush1.bf16.msra.mxu0 %v1735
  %1885 = vmatprep.subr.bf16.mxu0 %v1742
  %1886 = vmatpush1.bf16.msra.mxu0 %v1741
  %1887 = vmatprep.subr.bf16.mxu0 %v1748
  %1888 = vmatpush1.bf16.msra.mxu0 %v1747
  %1889 = vmatprep.subr.bf16.mxu0 %v1754
  %1890 = vmatpush1.bf16.msra.mxu0 %v1753
  %1891 = vmatprep.subr.bf16.mxu0 %v1760
  %1892 = vmatpush1.bf16.msra.mxu0 %v1759
  %1893 = vmatprep.mubr.bf16.mxu0 %v1246
  %1894 = vmatmul.mubr.bf16.gmra.mrb[0].mxu0 %v1245
  %v1895 = vpop.f32.mrb[0].mxu0
  %v1896 = vadd.f32 %v1354, %v1895
  %v1897 = vpop.f32.mrb[0].mxu0
  %v1898 = vadd.f32 %v1358, %v1897
  %v1899 = vpop.f32.mrb[0].mxu0
  %v1900 = vadd.f32 %v1354, %v1899
  %v1901 = vpop.f32.mrb[0].mxu0
  %v1902 = vadd.f32 %v1358, %v1901
  %1903 = vmatprep.mubr.bf16.mxu0 %v1248
  %1904 = vmatmul.mubr.bf16.gmra.mrb[0].mxu0 %v1247
  %v1905 = vpop.f32.mrb[0].mxu0
  %v1906 = vadd.f32 %v1354, %v1905
  %v1907 = vpop.f32.mrb[0].mxu0
  %v1908 = vadd.f32 %v1358, %v1907
  %v1909 = vpop.f32.mrb[0].mxu0
  %v1910 = vadd.f32 %v1354, %v1909
  %v1911 = vpop.f32.mrb[0].mxu0
  %v1912 = vadd.f32 %v1358, %v1911
  %1913 = vmatprep.mubr.bf16.mxu0 %v1250
  %1914 = vmatmul.mubr.bf16.gmra.mrb[0].mxu0 %v1249
  %v1915 = vpop.f32.mrb[0].mxu0
  %v1916 = vadd.f32 %v1354, %v1915
  %v1917 = vpop.f32.mrb[0].mxu0
  %v1918 = vadd.f32 %v1358, %v1917
  %v1919 = vpop.f32.mrb[0].mxu0
  %v1920 = vadd.f32 %v1354, %v1919
  %v1921 = vpop.f32.mrb[0].mxu0
  %v1922 = vadd.f32 %v1358, %v1921
  %1923 = vmatprep.mubr.bf16.mxu0 %v1252
  %1924 = vmatmul.mubr.bf16.gmra.mrb[0].mxu0 %v1251
  %v1925 = vpop.f32.mrb[0].mxu0
  %v1926 = vadd.f32 %v1354, %v1925
  %v1927 = vpop.f32.mrb[0].mxu0
  %v1928 = vadd.f32 %v1358, %v1927
  %v1929 = vpop.f32.mrb[0].mxu0
  %v1930 = vadd.f32 %v1354, %v1929
  %v1931 = vpop.f32.mrb[0].mxu0
  %v1932 = vadd.f32 %v1358, %v1931
  %1933 = vdwg.mxu0
  %1934 = vmatprep.subr.bf16.mxu0 %v1672
  %1935 = vmatpush1.bf16.msra.mxu0 %v1671
  %1936 = vmatprep.subr.bf16.mxu0 %v1678
  %1937 = vmatpush1.bf16.msra.mxu0 %v1677
  %1938 = vmatprep.subr.bf16.mxu0 %v1684
  %1939 = vmatpush1.bf16.msra.mxu0 %v1683
  %1940 = vmatprep.subr.bf16.mxu0 %v1690
  %1941 = vmatpush1.bf16.msra.mxu0 %v1689
  %1942 = vmatprep.subr.bf16.mxu0 %v1696
  %1943 = vmatpush1.bf16.msra.mxu0 %v1695
  %1944 = vmatprep.subr.bf16.mxu0 %v1702
  %1945 = vmatpush1.bf16.msra.mxu0 %v1701
  %1946 = vmatprep.subr.bf16.mxu0 %v1708
  %1947 = vmatpush1.bf16.msra.mxu0 %v1707
  %1948 = vmatprep.subr.bf16.mxu0 %v1714
  %1949 = vmatpush1.bf16.msra.mxu0 %v1713
  %1950 = vmatprep.subr.bf16.mxu0 %v1720
  %1951 = vmatpush1.bf16.msra.mxu0 %v1719
  %1952 = vmatprep.subr.bf16.mxu0 %v1726
  %1953 = vmatpush1.bf16.msra.mxu0 %v1725
  %1954 = vmatprep.subr.bf16.mxu0 %v1732
  %1955 = vmatpush1.bf16.msra.mxu0 %v1731
  %1956 = vmatprep.subr.bf16.mxu0 %v1738
  %1957 = vmatpush1.bf16.msra.mxu0 %v1737
  %1958 = vmatprep.subr.bf16.mxu0 %v1744
  %1959 = vmatpush1.bf16.msra.mxu0 %v1743
  %1960 = vmatprep.subr.bf16.mxu0 %v1750
  %1961 = vmatpush1.bf16.msra.mxu0 %v1749
  %1962 = vmatprep.subr.bf16.mxu0 %v1756
  %1963 = vmatpush1.bf16.msra.mxu0 %v1755
  %1964 = vmatprep.subr.bf16.mxu0 %v1762
  %1965 = vmatpush1.bf16.msra.mxu0 %v1761
  %1966 = vmatprep.mubr.bf16.mxu0 %v1246
  %1967 = vmatmul.mubr.bf16.gmra.mrb[0].mxu0 %v1245
  %v1968 = vpop.f32.mrb[0].mxu0
  %v1969 = vadd.f32 %v1362, %v1968
  %v1970 = vpop.f32.mrb[0].mxu0
  %v1971 = vadd.f32 %v1366, %v1970
  %v1972 = vpop.f32.mrb[0].mxu0
  %v1973 = vadd.f32 %v1362, %v1972
  %v1974 = vpop.f32.mrb[0].mxu0
  %v1975 = vadd.f32 %v1366, %v1974
  %1976 = vmatprep.mubr.bf16.mxu0 %v1248
  %1977 = vmatmul.mubr.bf16.gmra.mrb[0].mxu0 %v1247
  %v1978 = vpop.f32.mrb[0].mxu0
  %v1979 = vadd.f32 %v1362, %v1978
  %v1980 = vpop.f32.mrb[0].mxu0
  %v1981 = vadd.f32 %v1366, %v1980
  %v1982 = vpop.f32.mrb[0].mxu0
  %v1983 = vadd.f32 %v1362, %v1982
  %v1984 = vpop.f32.mrb[0].mxu0
  %v1985 = vadd.f32 %v1366, %v1984
  %1986 = vmatprep.mubr.bf16.mxu0 %v1250
  %1987 = vmatmul.mubr.bf16.gmra.mrb[0].mxu0 %v1249
  %v1988 = vpop.f32.mrb[0].mxu0
  %v1989 = vadd.f32 %v1362, %v1988
  %v1990 = vpop.f32.mrb[0].mxu0
  %v1991 = vadd.f32 %v1366, %v1990
  %v1992 = vpop.f32.mrb[0].mxu0
  %v1993 = vadd.f32 %v1362, %v1992
  %v1994 = vpop.f32.mrb[0].mxu0
  %v1995 = vadd.f32 %v1366, %v1994
  %1996 = vmatprep.mubr.bf16.mxu0 %v1252
  %1997 = vmatmul.mubr.bf16.gmra.mrb[0].mxu0 %v1251
  %v1998 = vpop.f32.mrb[0].mxu0
  %v1999 = vadd.f32 %v1362, %v1998
  %v2000 = vpop.f32.mrb[0].mxu0
  %v2001 = vadd.f32 %v1366, %v2000
  %v2002 = vpop.f32.mrb[0].mxu0
  %v2003 = vadd.f32 %v1362, %v2002
  %v2004 = vpop.f32.mrb[0].mxu0
  %v2005 = vadd.f32 %v1366, %v2004
  %2006 = vdwg.mxu0
  %2007 = vmatprep.subr.bf16.mxu0 %v1674
  %2008 = vmatpush1.bf16.msra.mxu0 %v1673
  %2009 = vmatprep.subr.bf16.mxu0 %v1680
  %2010 = vmatpush1.bf16.msra.mxu0 %v1679
  %2011 = vmatprep.subr.bf16.mxu0 %v1686
  %2012 = vmatpush1.bf16.msra.mxu0 %v1685
  %2013 = vmatprep.subr.bf16.mxu0 %v1692
  %2014 = vmatpush1.bf16.msra.mxu0 %v1691
  %2015 = vmatprep.subr.bf16.mxu0 %v1698
  %2016 = vmatpush1.bf16.msra.mxu0 %v1697
  %2017 = vmatprep.subr.bf16.mxu0 %v1704
  %2018 = vmatpush1.bf16.msra.mxu0 %v1703
  %2019 = vmatprep.subr.bf16.mxu0 %v1710
  %2020 = vmatpush1.bf16.msra.mxu0 %v1709
  %2021 = vmatprep.subr.bf16.mxu0 %v1716
  %2022 = vmatpush1.bf16.msra.mxu0 %v1715
  %2023 = vmatprep.subr.bf16.mxu0 %v1722
  %2024 = vmatpush1.bf16.msra.mxu0 %v1721
  %2025 = vmatprep.subr.bf16.mxu0 %v1728
  %2026 = vmatpush1.bf16.msra.mxu0 %v1727
  %2027 = vmatprep.subr.bf16.mxu0 %v1734
  %2028 = vmatpush1.bf16.msra.mxu0 %v1733
  %2029 = vmatprep.subr.bf16.mxu0 %v1740
  %2030 = vmatpush1.bf16.msra.mxu0 %v1739
  %2031 = vmatprep.subr.bf16.mxu0 %v1746
  %2032 = vmatpush1.bf16.msra.mxu0 %v1745
  %2033 = vmatprep.subr.bf16.mxu0 %v1752
  %2034 = vmatpush1.bf16.msra.mxu0 %v1751
  %2035 = vmatprep.subr.bf16.mxu0 %v1758
  %2036 = vmatpush1.bf16.msra.mxu0 %v1757
  %2037 = vmatprep.subr.bf16.mxu0 %v1764
  %2038 = vmatpush1.bf16.msra.mxu0 %v1763
  %2039 = vmatprep.mubr.bf16.mxu0 %v1246
  %2040 = vmatmul.mubr.bf16.gmra.mrb[0].mxu0 %v1245
  %v2041 = vpop.f32.mrb[0].mxu0
  %v2042 = vadd.f32 %v1370, %v2041
  %v2043 = vpop.f32.mrb[0].mxu0
  %v2044 = vadd.f32 %v1374, %v2043
  %v2045 = vpop.f32.mrb[0].mxu0
  %v2046 = vadd.f32 %v1370, %v2045
  %v2047 = vpop.f32.mrb[0].mxu0
  %v2048 = vadd.f32 %v1374, %v2047
  %2049 = vmatprep.mubr.bf16.mxu0 %v1248
  %2050 = vmatmul.mubr.bf16.gmra.mrb[0].mxu0 %v1247
  %v2051 = vpop.f32.mrb[0].mxu0
  %v2052 = vadd.f32 %v1370, %v2051
  %v2053 = vpop.f32.mrb[0].mxu0
  %v2054 = vadd.f32 %v1374, %v2053
  %v2055 = vpop.f32.mrb[0].mxu0
  %v2056 = vadd.f32 %v1370, %v2055
  %v2057 = vpop.f32.mrb[0].mxu0
  %v2058 = vadd.f32 %v1374, %v2057
  %2059 = vmatprep.mubr.bf16.mxu0 %v1250
  %2060 = vmatmul.mubr.bf16.gmra.mrb[0].mxu0 %v1249
  %v2061 = vpop.f32.mrb[0].mxu0
  %v2062 = vadd.f32 %v1370, %v2061
  %v2063 = vpop.f32.mrb[0].mxu0
  %v2064 = vadd.f32 %v1374, %v2063
  %v2065 = vpop.f32.mrb[0].mxu0
  %v2066 = vadd.f32 %v1370, %v2065
  %v2067 = vpop.f32.mrb[0].mxu0
  %v2068 = vadd.f32 %v1374, %v2067
  %2069 = vmatprep.mubr.bf16.mxu0 %v1252
  %2070 = vmatmul.mubr.bf16.gmra.mrb[0].mxu0 %v1251
  %v2071 = vpop.f32.mrb[0].mxu0
  %v2072 = vadd.f32 %v1370, %v2071
  %v2073 = vpop.f32.mrb[0].mxu0
  %v2074 = vadd.f32 %v1374, %v2073
  %v2075 = vpop.f32.mrb[0].mxu0
  %v2076 = vadd.f32 %v1370, %v2075
  %v2077 = vpop.f32.mrb[0].mxu0
  %v2078 = vadd.f32 %v1374, %v2077
  %2079 = vdwg.mxu0
  %v2080 = vld [vmem:[%s6] sm:$0xff]
  %v2081 = vld [vmem:[%s6 + $0x8] sm:$0xff]
  %v2082 = vld [vmem:[%s6 + $0x10] sm:$0xff]
  %v2083 = vld [vmem:[%s6 + $0x18] sm:$0xff]
  %v2084 = vld [vmem:[%s6 + $0x20] sm:$0xff]
  %v2085 = vld [vmem:[%s6 + $0x28] sm:$0xff]
  %v2086 = vld [vmem:[%s6 + $0x30] sm:$0xff]
  %v2087 = vld [vmem:[%s6 + $0x38] sm:$0xff]
  %v2088 = vld [vmem:[%s6 + $0x40] sm:$0xff]
  %v2089 = vld [vmem:[%s6 + $0x48] sm:$0xff]
  %v2090 = vld [vmem:[%s6 + $0x50] sm:$0xff]
  %v2091 = vld [vmem:[%s6 + $0x58] sm:$0xff]
  %v2092 = vld [vmem:[%s6 + $0x60] sm:$0xff]
  %v2093 = vld [vmem:[%s6 + $0x68] sm:$0xff]
  %v2094 = vld [vmem:[%s6 + $0x70] sm:$0xff]
  %v2095 = vld [vmem:[%s6 + $0x78] sm:$0xff]
  %v2096 = vld [vmem:[%s6 + $0x80] sm:$0xff]
  %v2097 = vld [vmem:[%s6 + $0x88] sm:$0xff]
  %v2098 = vld [vmem:[%s6 + $0x90] sm:$0xff]
  %v2099 = vld [vmem:[%s6 + $0x98] sm:$0xff]
  %v2100 = vld [vmem:[%s6 + $0xa0] sm:$0xff]
  %v2101 = vld [vmem:[%s6 + $0xa8] sm:$0xff]
  %v2102 = vld [vmem:[%s6 + $0xb0] sm:$0xff]
  %v2103 = vld [vmem:[%s6 + $0xb8] sm:$0xff]
  %v2104 = vld [vmem:[%s6 + $0xc0] sm:$0xff]
  %v2105 = vld [vmem:[%s6 + $0xc8] sm:$0xff]
  %v2106 = vld [vmem:[%s6 + $0xd0] sm:$0xff]
  %v2107 = vld [vmem:[%s6 + $0xd8] sm:$0xff]
  %v2108 = vld [vmem:[%s6 + $0xe0] sm:$0xff]
  %v2109 = vld [vmem:[%s6 + $0xe8] sm:$0xff]
  %v2110 = vld [vmem:[%s6 + $0xf0] sm:$0xff]
  %v2111 = vld [vmem:[%s6 + $0xf8] sm:$0xff]
  %v2112 = vld [vmem:[%s6 + $0x100] sm:$0xff]
  %v2113 = vld [vmem:[%s6 + $0x108] sm:$0xff]
  %v2114 = vld [vmem:[%s6 + $0x110] sm:$0xff]
  %v2115 = vld [vmem:[%s6 + $0x118] sm:$0xff]
  %v2116 = vld [vmem:[%s6 + $0x120] sm:$0xff]
  %v2117 = vld [vmem:[%s6 + $0x128] sm:$0xff]
  %v2118 = vld [vmem:[%s6 + $0x130] sm:$0xff]
  %v2119 = vld [vmem:[%s6 + $0x138] sm:$0xff]
  %v2120 = vld [vmem:[%s6 + $0x140] sm:$0xff]
  %v2121 = vld [vmem:[%s6 + $0x148] sm:$0xff]
  %v2122 = vld [vmem:[%s6 + $0x150] sm:$0xff]
  %v2123 = vld [vmem:[%s6 + $0x158] sm:$0xff]
  %v2124 = vld [vmem:[%s6 + $0x160] sm:$0xff]
  %v2125 = vld [vmem:[%s6 + $0x168] sm:$0xff]
  %v2126 = vld [vmem:[%s6 + $0x170] sm:$0xff]
  %v2127 = vld [vmem:[%s6 + $0x178] sm:$0xff]
  %v2128 = vld [vmem:[%s6 + $0x180] sm:$0xff]
  %v2129 = vld [vmem:[%s6 + $0x188] sm:$0xff]
  %v2130 = vld [vmem:[%s6 + $0x190] sm:$0xff]
  %v2131 = vld [vmem:[%s6 + $0x198] sm:$0xff]
  %v2132 = vld [vmem:[%s6 + $0x1a0] sm:$0xff]
  %v2133 = vld [vmem:[%s6 + $0x1a8] sm:$0xff]
  %v2134 = vld [vmem:[%s6 + $0x1b0] sm:$0xff]
  %v2135 = vld [vmem:[%s6 + $0x1b8] sm:$0xff]
  %v2136 = vld [vmem:[%s6 + $0x1c0] sm:$0xff]
  %v2137 = vld [vmem:[%s6 + $0x1c8] sm:$0xff]
  %v2138 = vld [vmem:[%s6 + $0x1d0] sm:$0xff]
  %v2139 = vld [vmem:[%s6 + $0x1d8] sm:$0xff]
  %v2140 = vld [vmem:[%s6 + $0x1e0] sm:$0xff]
  %v2141 = vld [vmem:[%s6 + $0x1e8] sm:$0xff]
  %v2142 = vld [vmem:[%s6 + $0x1f0] sm:$0xff]
  %v2143 = vld [vmem:[%s6 + $0x1f8] sm:$0xff]
  %v2144 = vld [vmem:[%s6 + $0x200] sm:$0xff]
  %v2145 = vld [vmem:[%s6 + $0x208] sm:$0xff]
  %v2146 = vld [vmem:[%s6 + $0x210] sm:$0xff]
  %v2147 = vld [vmem:[%s6 + $0x218] sm:$0xff]
  %v2148 = vld [vmem:[%s6 + $0x220] sm:$0xff]
  %v2149 = vld [vmem:[%s6 + $0x228] sm:$0xff]
  %v2150 = vld [vmem:[%s6 + $0x230] sm:$0xff]
  %v2151 = vld [vmem:[%s6 + $0x238] sm:$0xff]
  %v2152 = vld [vmem:[%s6 + $0x240] sm:$0xff]
  %v2153 = vld [vmem:[%s6 + $0x248] sm:$0xff]
  %v2154 = vld [vmem:[%s6 + $0x250] sm:$0xff]
  %v2155 = vld [vmem:[%s6 + $0x258] sm:$0xff]
  %v2156 = vld [vmem:[%s6 + $0x260] sm:$0xff]
  %v2157 = vld [vmem:[%s6 + $0x268] sm:$0xff]
  %v2158 = vld [vmem:[%s6 + $0x270] sm:$0xff]
  %v2159 = vld [vmem:[%s6 + $0x278] sm:$0xff]
  %v2160 = vld [vmem:[%s6 + $0x280] sm:$0xff]
  %v2161 = vld [vmem:[%s6 + $0x288] sm:$0xff]
  %v2162 = vld [vmem:[%s6 + $0x290] sm:$0xff]
  %v2163 = vld [vmem:[%s6 + $0x298] sm:$0xff]
  %v2164 = vld [vmem:[%s6 + $0x2a0] sm:$0xff]
  %v2165 = vld [vmem:[%s6 + $0x2a8] sm:$0xff]
  %v2166 = vld [vmem:[%s6 + $0x2b0] sm:$0xff]
  %v2167 = vld [vmem:[%s6 + $0x2b8] sm:$0xff]
  %v2168 = vld [vmem:[%s6 + $0x2c0] sm:$0xff]
  %v2169 = vld [vmem:[%s6 + $0x2c8] sm:$0xff]
  %v2170 = vld [vmem:[%s6 + $0x2d0] sm:$0xff]
  %v2171 = vld [vmem:[%s6 + $0x2d8] sm:$0xff]
  %v2172 = vld [vmem:[%s6 + $0x2e0] sm:$0xff]
  %v2173 = vld [vmem:[%s6 + $0x2e8] sm:$0xff]
  %v2174 = vld [vmem:[%s6 + $0x2f0] sm:$0xff]
  %v2175 = vld [vmem:[%s6 + $0x2f8] sm:$0xff]
  %v2176 = vld [vmem:[%s8] sm:$0x3]
  %v2273 = vunpack.c.l.b16 %v2080
  %v2274 = vunpack.c.h.b16 %v2080
  %v2275 = vunpack.c.l.b16 %v2081
  %v2276 = vunpack.c.h.b16 %v2081
  %v2277 = vunpack.c.l.b16 %v2082
  %v2278 = vunpack.c.h.b16 %v2082
  %v2279 = vunpack.c.l.b16 %v2083
  %v2280 = vunpack.c.h.b16 %v2083
  %v2281 = vunpack.c.l.b16 %v2084
  %v2282 = vunpack.c.h.b16 %v2084
  %v2283 = vunpack.c.l.b16 %v2085
  %v2284 = vunpack.c.h.b16 %v2085
  %v2285 = vunpack.c.l.b16 %v2086
  %v2286 = vunpack.c.h.b16 %v2086
  %v2287 = vunpack.c.l.b16 %v2087
  %v2288 = vunpack.c.h.b16 %v2087
  %v2289 = vunpack.c.l.b16 %v2088
  %v2290 = vunpack.c.h.b16 %v2088
  %v2291 = vunpack.c.l.b16 %v2089
  %v2292 = vunpack.c.h.b16 %v2089
  %v2293 = vunpack.c.l.b16 %v2090
  %v2294 = vunpack.c.h.b16 %v2090
  %v2295 = vunpack.c.l.b16 %v2091
  %v2296 = vunpack.c.h.b16 %v2091
  %v2297 = vunpack.c.l.b16 %v2092
  %v2298 = vunpack.c.h.b16 %v2092
  %v2299 = vunpack.c.l.b16 %v2093
  %v2300 = vunpack.c.h.b16 %v2093
  %v2301 = vunpack.c.l.b16 %v2094
  %v2302 = vunpack.c.h.b16 %v2094
  %v2303 = vunpack.c.l.b16 %v2095
  %v2304 = vunpack.c.h.b16 %v2095
  %v2305 = vunpack.c.l.b16 %v2096
  %v2306 = vunpack.c.h.b16 %v2096
  %v2307 = vunpack.c.l.b16 %v2097
  %v2308 = vunpack.c.h.b16 %v2097
  %v2309 = vunpack.c.l.b16 %v2098
  %v2310 = vunpack.c.h.b16 %v2098
  %v2311 = vunpack.c.l.b16 %v2099
  %v2312 = vunpack.c.h.b16 %v2099
  %v2313 = vunpack.c.l.b16 %v2100
  %v2314 = vunpack.c.h.b16 %v2100
  %v2315 = vunpack.c.l.b16 %v2101
  %v2316 = vunpack.c.h.b16 %v2101
  %v2317 = vunpack.c.l.b16 %v2102
  %v2318 = vunpack.c.h.b16 %v2102
  %v2319 = vunpack.c.l.b16 %v2103
  %v2320 = vunpack.c.h.b16 %v2103
  %v2321 = vunpack.c.l.b16 %v2104
  %v2322 = vunpack.c.h.b16 %v2104
  %v2323 = vunpack.c.l.b16 %v2105
  %v2324 = vunpack.c.h.b16 %v2105
  %v2325 = vunpack.c.l.b16 %v2106
  %v2326 = vunpack.c.h.b16 %v2106
  %v2327 = vunpack.c.l.b16 %v2107
  %v2328 = vunpack.c.h.b16 %v2107
  %v2329 = vunpack.c.l.b16 %v2108
  %v2330 = vunpack.c.h.b16 %v2108
  %v2331 = vunpack.c.l.b16 %v2109
  %v2332 = vunpack.c.h.b16 %v2109
  %v2333 = vunpack.c.l.b16 %v2110
  %v2334 = vunpack.c.h.b16 %v2110
  %v2335 = vunpack.c.l.b16 %v2111
  %v2336 = vunpack.c.h.b16 %v2111
  %v2337 = vunpack.c.l.b16 %v2112
  %v2338 = vunpack.c.h.b16 %v2112
  %v2339 = vunpack.c.l.b16 %v2113
  %v2340 = vunpack.c.h.b16 %v2113
  %v2341 = vunpack.c.l.b16 %v2114
  %v2342 = vunpack.c.h.b16 %v2114
  %v2343 = vunpack.c.l.b16 %v2115
  %v2344 = vunpack.c.h.b16 %v2115
  %v2345 = vunpack.c.l.b16 %v2116
  %v2346 = vunpack.c.h.b16 %v2116
  %v2347 = vunpack.c.l.b16 %v2117
  %v2348 = vunpack.c.h.b16 %v2117
  %v2349 = vunpack.c.l.b16 %v2118
  %v2350 = vunpack.c.h.b16 %v2118
  %v2351 = vunpack.c.l.b16 %v2119
  %v2352 = vunpack.c.h.b16 %v2119
  %v2353 = vunpack.c.l.b16 %v2120
  %v2354 = vunpack.c.h.b16 %v2120
  %v2355 = vunpack.c.l.b16 %v2121
  %v2356 = vunpack.c.h.b16 %v2121
  %v2357 = vunpack.c.l.b16 %v2122
  %v2358 = vunpack.c.h.b16 %v2122
  %v2359 = vunpack.c.l.b16 %v2123
  %v2360 = vunpack.c.h.b16 %v2123
  %v2361 = vunpack.c.l.b16 %v2124
  %v2362 = vunpack.c.h.b16 %v2124
  %v2363 = vunpack.c.l.b16 %v2125
  %v2364 = vunpack.c.h.b16 %v2125
  %v2365 = vunpack.c.l.b16 %v2126
  %v2366 = vunpack.c.h.b16 %v2126
  %v2367 = vunpack.c.l.b16 %v2127
  %v2368 = vunpack.c.h.b16 %v2127
  %v2369 = vunpack.c.l.b16 %v2128
  %v2370 = vunpack.c.h.b16 %v2128
  %v2371 = vunpack.c.l.b16 %v2129
  %v2372 = vunpack.c.h.b16 %v2129
  %v2373 = vunpack.c.l.b16 %v2130
  %v2374 = vunpack.c.h.b16 %v2130
  %v2375 = vunpack.c.l.b16 %v2131
  %v2376 = vunpack.c.h.b16 %v2131
  %v2377 = vunpack.c.l.b16 %v2132
  %v2378 = vunpack.c.h.b16 %v2132
  %v2379 = vunpack.c.l.b16 %v2133
  %v2380 = vunpack.c.h.b16 %v2133
  %v2381 = vunpack.c.l.b16 %v2134
  %v2382 = vunpack.c.h.b16 %v2134
  %v2383 = vunpack.c.l.b16 %v2135
  %v2384 = vunpack.c.h.b16 %v2135
  %v2385 = vunpack.c.l.b16 %v2136
  %v2386 = vunpack.c.h.b16 %v2136
  %v2387 = vunpack.c.l.b16 %v2137
  %v2388 = vunpack.c.h.b16 %v2137
  %v2389 = vunpack.c.l.b16 %v2138
  %v2390 = vunpack.c.h.b16 %v2138
  %v2391 = vunpack.c.l.b16 %v2139
  %v2392 = vunpack.c.h.b16 %v2139
  %v2393 = vunpack.c.l.b16 %v2140
  %v2394 = vunpack.c.h.b16 %v2140
  %v2395 = vunpack.c.l.b16 %v2141
  %v2396 = vunpack.c.h.b16 %v2141
  %v2397 = vunpack.c.l.b16 %v2142
  %v2398 = vunpack.c.h.b16 %v2142
  %v2399 = vunpack.c.l.b16 %v2143
  %v2400 = vunpack.c.h.b16 %v2143
  %v2401 = vunpack.c.l.b16 %v2144
  %v2402 = vunpack.c.h.b16 %v2144
  %v2403 = vunpack.c.l.b16 %v2145
  %v2404 = vunpack.c.h.b16 %v2145
  %v2405 = vunpack.c.l.b16 %v2146
  %v2406 = vunpack.c.h.b16 %v2146
  %v2407 = vunpack.c.l.b16 %v2147
  %v2408 = vunpack.c.h.b16 %v2147
  %v2409 = vunpack.c.l.b16 %v2148
  %v2410 = vunpack.c.h.b16 %v2148
  %v2411 = vunpack.c.l.b16 %v2149
  %v2412 = vunpack.c.h.b16 %v2149
  %v2413 = vunpack.c.l.b16 %v2150
  %v2414 = vunpack.c.h.b16 %v2150
  %v2415 = vunpack.c.l.b16 %v2151
  %v2416 = vunpack.c.h.b16 %v2151
  %v2417 = vunpack.c.l.b16 %v2152
  %v2418 = vunpack.c.h.b16 %v2152
  %v2419 = vunpack.c.l.b16 %v2153
  %v2420 = vunpack.c.h.b16 %v2153
  %v2421 = vunpack.c.l.b16 %v2154
  %v2422 = vunpack.c.h.b16 %v2154
  %v2423 = vunpack.c.l.b16 %v2155
  %v2424 = vunpack.c.h.b16 %v2155
  %v2425 = vunpack.c.l.b16 %v2156
  %v2426 = vunpack.c.h.b16 %v2156
  %v2427 = vunpack.c.l.b16 %v2157
  %v2428 = vunpack.c.h.b16 %v2157
  %v2429 = vunpack.c.l.b16 %v2158
  %v2430 = vunpack.c.h.b16 %v2158
  %v2431 = vunpack.c.l.b16 %v2159
  %v2432 = vunpack.c.h.b16 %v2159
  %v2433 = vunpack.c.l.b16 %v2160
  %v2434 = vunpack.c.h.b16 %v2160
  %v2435 = vunpack.c.l.b16 %v2161
  %v2436 = vunpack.c.h.b16 %v2161
  %v2437 = vunpack.c.l.b16 %v2162
  %v2438 = vunpack.c.h.b16 %v2162
  %v2439 = vunpack.c.l.b16 %v2163
  %v2440 = vunpack.c.h.b16 %v2163
  %v2441 = vunpack.c.l.b16 %v2164
  %v2442 = vunpack.c.h.b16 %v2164
  %v2443 = vunpack.c.l.b16 %v2165
  %v2444 = vunpack.c.h.b16 %v2165
  %v2445 = vunpack.c.l.b16 %v2166
  %v2446 = vunpack.c.h.b16 %v2166
  %v2447 = vunpack.c.l.b16 %v2167
  %v2448 = vunpack.c.h.b16 %v2167
  %v2449 = vunpack.c.l.b16 %v2168
  %v2450 = vunpack.c.h.b16 %v2168
  %v2451 = vunpack.c.l.b16 %v2169
  %v2452 = vunpack.c.h.b16 %v2169
  %v2453 = vunpack.c.l.b16 %v2170
  %v2454 = vunpack.c.h.b16 %v2170
  %v2455 = vunpack.c.l.b16 %v2171
  %v2456 = vunpack.c.h.b16 %v2171
  %v2457 = vunpack.c.l.b16 %v2172
  %v2458 = vunpack.c.h.b16 %v2172
  %v2459 = vunpack.c.l.b16 %v2173
  %v2460 = vunpack.c.h.b16 %v2173
  %v2461 = vunpack.c.l.b16 %v2174
  %v2462 = vunpack.c.h.b16 %v2174
  %v2463 = vunpack.c.l.b16 %v2175
  %v2464 = vunpack.c.h.b16 %v2175
  %v2465 = vpack.c.b16 %v2279, %v2273
  %v2466 = vpack.c.b16 %v2280, %v2274
  %v2467 = vpack.c.b16 %v2281, %v2275
  %v2468 = vpack.c.b16 %v2282, %v2276
  %v2469 = vpack.c.b16 %v2283, %v2277
  %v2470 = vpack.c.b16 %v2284, %v2278
  %v2471 = vpack.c.b16 %v2291, %v2285
  %v2472 = vpack.c.b16 %v2292, %v2286
  %v2473 = vpack.c.b16 %v2293, %v2287
  %v2474 = vpack.c.b16 %v2294, %v2288
  %v2475 = vpack.c.b16 %v2295, %v2289
  %v2476 = vpack.c.b16 %v2296, %v2290
  %v2477 = vpack.c.b16 %v2303, %v2297
  %v2478 = vpack.c.b16 %v2304, %v2298
  %v2479 = vpack.c.b16 %v2305, %v2299
  %v2480 = vpack.c.b16 %v2306, %v2300
  %v2481 = vpack.c.b16 %v2307, %v2301
  %v2482 = vpack.c.b16 %v2308, %v2302
  %v2483 = vpack.c.b16 %v2315, %v2309
  %v2484 = vpack.c.b16 %v2316, %v2310
  %v2485 = vpack.c.b16 %v2317, %v2311
  %v2486 = vpack.c.b16 %v2318, %v2312
  %v2487 = vpack.c.b16 %v2319, %v2313
  %v2488 = vpack.c.b16 %v2320, %v2314
  %v2489 = vpack.c.b16 %v2327, %v2321
  %v2490 = vpack.c.b16 %v2328, %v2322
  %v2491 = vpack.c.b16 %v2329, %v2323
  %v2492 = vpack.c.b16 %v2330, %v2324
  %v2493 = vpack.c.b16 %v2331, %v2325
  %v2494 = vpack.c.b16 %v2332, %v2326
  %v2495 = vpack.c.b16 %v2339, %v2333
  %v2496 = vpack.c.b16 %v2340, %v2334
  %v2497 = vpack.c.b16 %v2341, %v2335
  %v2498 = vpack.c.b16 %v2342, %v2336
  %v2499 = vpack.c.b16 %v2343, %v2337
  %v2500 = vpack.c.b16 %v2344, %v2338
  %v2501 = vpack.c.b16 %v2351, %v2345
  %v2502 = vpack.c.b16 %v2352, %v2346
  %v2503 = vpack.c.b16 %v2353, %v2347
  %v2504 = vpack.c.b16 %v2354, %v2348
  %v2505 = vpack.c.b16 %v2355, %v2349
  %v2506 = vpack.c.b16 %v2356, %v2350
  %v2507 = vpack.c.b16 %v2363, %v2357
  %v2508 = vpack.c.b16 %v2364, %v2358
  %v2509 = vpack.c.b16 %v2365, %v2359
  %v2510 = vpack.c.b16 %v2366, %v2360
  %v2511 = vpack.c.b16 %v2367, %v2361
  %v2512 = vpack.c.b16 %v2368, %v2362
  %v2513 = vpack.c.b16 %v2375, %v2369
  %v2514 = vpack.c.b16 %v2376, %v2370
  %v2515 = vpack.c.b16 %v2377, %v2371
  %v2516 = vpack.c.b16 %v2378, %v2372
  %v2517 = vpack.c.b16 %v2379, %v2373
  %v2518 = vpack.c.b16 %v2380, %v2374
  %v2519 = vpack.c.b16 %v2387, %v2381
  %v2520 = vpack.c.b16 %v2388, %v2382
  %v2521 = vpack.c.b16 %v2389, %v2383
  %v2522 = vpack.c.b16 %v2390, %v2384
  %v2523 = vpack.c.b16 %v2391, %v2385
  %v2524 = vpack.c.b16 %v2392, %v2386
  %v2525 = vpack.c.b16 %v2399, %v2393
  %v2526 = vpack.c.b16 %v2400, %v2394
  %v2527 = vpack.c.b16 %v2401, %v2395
  %v2528 = vpack.c.b16 %v2402, %v2396
  %v2529 = vpack.c.b16 %v2403, %v2397
  %v2530 = vpack.c.b16 %v2404, %v2398
  %v2531 = vpack.c.b16 %v2411, %v2405
  %v2532 = vpack.c.b16 %v2412, %v2406
  %v2533 = vpack.c.b16 %v2413, %v2407
  %v2534 = vpack.c.b16 %v2414, %v2408
  %v2535 = vpack.c.b16 %v2415, %v2409
  %v2536 = vpack.c.b16 %v2416, %v2410
  %v2537 = vpack.c.b16 %v2423, %v2417
  %v2538 = vpack.c.b16 %v2424, %v2418
  %v2539 = vpack.c.b16 %v2425, %v2419
  %v2540 = vpack.c.b16 %v2426, %v2420
  %v2541 = vpack.c.b16 %v2427, %v2421
  %v2542 = vpack.c.b16 %v2428, %v2422
  %v2543 = vpack.c.b16 %v2435, %v2429
  %v2544 = vpack.c.b16 %v2436, %v2430
  %v2545 = vpack.c.b16 %v2437, %v2431
  %v2546 = vpack.c.b16 %v2438, %v2432
  %v2547 = vpack.c.b16 %v2439, %v2433
  %v2548 = vpack.c.b16 %v2440, %v2434
  %v2549 = vpack.c.b16 %v2447, %v2441
  %v2550 = vpack.c.b16 %v2448, %v2442
  %v2551 = vpack.c.b16 %v2449, %v2443
  %v2552 = vpack.c.b16 %v2450, %v2444
  %v2553 = vpack.c.b16 %v2451, %v2445
  %v2554 = vpack.c.b16 %v2452, %v2446
  %v2555 = vpack.c.b16 %v2459, %v2453
  %v2556 = vpack.c.b16 %v2460, %v2454
  %v2557 = vpack.c.b16 %v2461, %v2455
  %v2558 = vpack.c.b16 %v2462, %v2456
  %v2559 = vpack.c.b16 %v2463, %v2457
  %v2560 = vpack.c.b16 %v2464, %v2458
  %2657 = vmatprep.subr.bf16.mxu0 %v2466
  %2658 = vmatpush1.bf16.msra.mxu0 %v2465
  %2659 = vmatprep.subr.bf16.mxu0 %v2472
  %2660 = vmatpush1.bf16.msra.mxu0 %v2471
  %2661 = vmatprep.subr.bf16.mxu0 %v2478
  %2662 = vmatpush1.bf16.msra.mxu0 %v2477
  %2663 = vmatprep.subr.bf16.mxu0 %v2484
  %2664 = vmatpush1.bf16.msra.mxu0 %v2483
  %2665 = vmatprep.subr.bf16.mxu0 %v2490
  %2666 = vmatpush1.bf16.msra.mxu0 %v2489
  %2667 = vmatprep.subr.bf16.mxu0 %v2496
  %2668 = vmatpush1.bf16.msra.mxu0 %v2495
  %2669 = vmatprep.subr.bf16.mxu0 %v2502
  %2670 = vmatpush1.bf16.msra.mxu0 %v2501
  %2671 = vmatprep.subr.bf16.mxu0 %v2508
  %2672 = vmatpush1.bf16.msra.mxu0 %v2507
  %2673 = vmatprep.subr.bf16.mxu0 %v2514
  %2674 = vmatpush1.bf16.msra.mxu0 %v2513
  %2675 = vmatprep.subr.bf16.mxu0 %v2520
  %2676 = vmatpush1.bf16.msra.mxu0 %v2519
  %2677 = vmatprep.subr.bf16.mxu0 %v2526
  %2678 = vmatpush1.bf16.msra.mxu0 %v2525
  %2679 = vmatprep.subr.bf16.mxu0 %v2532
  %2680 = vmatpush1.bf16.msra.mxu0 %v2531
  %2681 = vmatprep.subr.bf16.mxu0 %v2538
  %2682 = vmatpush1.bf16.msra.mxu0 %v2537
  %2683 = vmatprep.subr.bf16.mxu0 %v2544
  %2684 = vmatpush1.bf16.msra.mxu0 %v2543
  %2685 = vmatprep.subr.bf16.mxu0 %v2550
  %2686 = vmatpush1.bf16.msra.mxu0 %v2549
  %2687 = vmatprep.subr.bf16.mxu0 %v2556
  %2688 = vmatpush1.bf16.msra.mxu0 %v2555
  %2689 = vmatprep.mubr.bf16.mxu0 0
  %2690 = vmatmul.mubr.bf16.gmra.mrb[0].mxu0 0
  %v2691 = vpop.f32.mrb[0].mxu0
  %v2692 = vadd.f32 0.0, %v2691
  %v2693 = vpop.f32.mrb[0].mxu0
  %v2694 = vadd.f32 0.0, %v2693
  %v2695 = vpop.f32.mrb[0].mxu0
  %v2696 = vpop.f32.mrb[0].mxu0
  %2697 = vdwg.mxu0
  %2698 = vmatprep.subr.bf16.mxu0 %v2468
  %2699 = vmatpush1.bf16.msra.mxu0 %v2467
  %2700 = vmatprep.subr.bf16.mxu0 %v2474
  %2701 = vmatpush1.bf16.msra.mxu0 %v2473
  %2702 = vmatprep.subr.bf16.mxu0 %v2480
  %2703 = vmatpush1.bf16.msra.mxu0 %v2479
  %2704 = vmatprep.subr.bf16.mxu0 %v2486
  %2705 = vmatpush1.bf16.msra.mxu0 %v2485
  %2706 = vmatprep.subr.bf16.mxu0 %v2492
  %2707 = vmatpush1.bf16.msra.mxu0 %v2491
  %2708 = vmatprep.subr.bf16.mxu0 %v2498
  %2709 = vmatpush1.bf16.msra.mxu0 %v2497
  %2710 = vmatprep.subr.bf16.mxu0 %v2504
  %2711 = vmatpush1.bf16.msra.mxu0 %v2503
  %2712 = vmatprep.subr.bf16.mxu0 %v2510
  %2713 = vmatpush1.bf16.msra.mxu0 %v2509
  %2714 = vmatprep.subr.bf16.mxu0 %v2516
  %2715 = vmatpush1.bf16.msra.mxu0 %v2515
  %2716 = vmatprep.subr.bf16.mxu0 %v2522
  %2717 = vmatpush1.bf16.msra.mxu0 %v2521
  %2718 = vmatprep.subr.bf16.mxu0 %v2528
  %2719 = vmatpush1.bf16.msra.mxu0 %v2527
  %2720 = vmatprep.subr.bf16.mxu0 %v2534
  %2721 = vmatpush1.bf16.msra.mxu0 %v2533
  %2722 = vmatprep.subr.bf16.mxu0 %v2540
  %2723 = vmatpush1.bf16.msra.mxu0 %v2539
  %2724 = vmatprep.subr.bf16.mxu0 %v2546
  %2725 = vmatpush1.bf16.msra.mxu0 %v2545
  %2726 = vmatprep.subr.bf16.mxu0 %v2552
  %2727 = vmatpush1.bf16.msra.mxu0 %v2551
  %2728 = vmatprep.subr.bf16.mxu0 %v2558
  %2729 = vmatpush1.bf16.msra.mxu0 %v2557
  %2730 = vmatprep.mubr.bf16.mxu0 0
  %2731 = vmatmul.mubr.bf16.gmra.mrb[0].mxu0 0
  %v2732 = vpop.f32.mrb[0].mxu0
  %v2733 = vadd.f32 0.0, %v2732
  %v2734 = vpop.f32.mrb[0].mxu0
  %v2735 = vadd.f32 0.0, %v2734
  %v2736 = vpop.f32.mrb[0].mxu0
  %v2737 = vpop.f32.mrb[0].mxu0
  %2738 = vdwg.mxu0
  %2739 = vmatprep.subr.bf16.mxu0 %v2470
  %2740 = vmatpush1.bf16.msra.mxu0 %v2469
  %2741 = vmatprep.subr.bf16.mxu0 %v2476
  %2742 = vmatpush1.bf16.msra.mxu0 %v2475
  %2743 = vmatprep.subr.bf16.mxu0 %v2482
  %2744 = vmatpush1.bf16.msra.mxu0 %v2481
  %2745 = vmatprep.subr.bf16.mxu0 %v2488
  %2746 = vmatpush1.bf16.msra.mxu0 %v2487
  %2747 = vmatprep.subr.bf16.mxu0 %v2494
  %2748 = vmatpush1.bf16.msra.mxu0 %v2493
  %2749 = vmatprep.subr.bf16.mxu0 %v2500
  %2750 = vmatpush1.bf16.msra.mxu0 %v2499
  %2751 = vmatprep.subr.bf16.mxu0 %v2506
  %2752 = vmatpush1.bf16.msra.mxu0 %v2505
  %2753 = vmatprep.subr.bf16.mxu0 %v2512
  %2754 = vmatpush1.bf16.msra.mxu0 %v2511
  %2755 = vmatprep.subr.bf16.mxu0 %v2518
  %2756 = vmatpush1.bf16.msra.mxu0 %v2517
  %2757 = vmatprep.subr.bf16.mxu0 %v2524
  %2758 = vmatpush1.bf16.msra.mxu0 %v2523
  %2759 = vmatprep.subr.bf16.mxu0 %v2530
  %2760 = vmatpush1.bf16.msra.mxu0 %v2529
  %2761 = vmatprep.subr.bf16.mxu0 %v2536
  %2762 = vmatpush1.bf16.msra.mxu0 %v2535
  %2763 = vmatprep.subr.bf16.mxu0 %v2542
  %2764 = vmatpush1.bf16.msra.mxu0 %v2541
  %2765 = vmatprep.subr.bf16.mxu0 %v2548
  %2766 = vmatpush1.bf16.msra.mxu0 %v2547
  %2767 = vmatprep.subr.bf16.mxu0 %v2554
  %2768 = vmatpush1.bf16.msra.mxu0 %v2553
  %2769 = vmatprep.subr.bf16.mxu0 %v2560
  %2770 = vmatpush1.bf16.msra.mxu0 %v2559
  %2771 = vmatprep.mubr.bf16.mxu0 0
  %2772 = vmatmul.mubr.bf16.gmra.mrb[0].mxu0 0
  %v2773 = vpop.f32.mrb[0].mxu0
  %v2774 = vadd.f32 0.0, %v2773
  %v2775 = vpop.f32.mrb[0].mxu0
  %v2776 = vadd.f32 0.0, %v2775
  %v2777 = vpop.f32.mrb[0].mxu0
  %v2778 = vpop.f32.mrb[0].mxu0
  %2779 = vdwg.mxu0
  %v2780 = vadd.f32 %v1896, %v2692
  %v2781 = vadd.f32 %v1898, %v2694
  %v2782 = vxor.u32 %v2780, 2147483648
  %v2783 = vxor.u32 %v2781, 2147483648
  %v2784 = vmul.f32 %v2782, 1.442695
  %v2785 = vpow.pop %v2784
  %v2786 = vmul.f32 %v2783, 1.442695
  %v2787 = vpow.pop %v2786
  %v2788 = vadd.f32 %v2785, 1.0
  %v2789 = vadd.f32 %v2787, 1.0
  %v2790 = vrcp.pop %v2788
  %v2791 = vmul.f32 1.0, %v2790
  %v2792 = vrcp.pop %v2789
  %v2793 = vmul.f32 1.0, %v2792
  %v2794 = vadd.f32 %v1969, %v2733
  %v2795 = vadd.f32 %v1971, %v2735
  %v2796 = vxor.u32 %v2794, 2147483648
  %v2797 = vxor.u32 %v2795, 2147483648
  %v2798 = vmul.f32 %v2796, 1.442695
  %v2799 = vpow.pop %v2798
  %v2800 = vmul.f32 %v2797, 1.442695
  %v2801 = vpow.pop %v2800
  %v2802 = vadd.f32 %v2799, 1.0
  %v2803 = vadd.f32 %v2801, 1.0
  %v2804 = vrcp.pop %v2802
  %v2805 = vmul.f32 1.0, %v2804
  %v2806 = vrcp.pop %v2803
  %v2807 = vmul.f32 1.0, %v2806
  %v2809 = vlaneseq
  %v2810 = vshrl.u32 %v2809, 7
  %v2811 = vsub.s32 0, %v2810
  %v2812 = vrot.slane %v2176, %v2811
  %v2813 = vlaneseq
  %v2814 = vshrl.u32 %v2813, 7
  %v2815 = vsub.s32 1, %v2814
  %v2816 = vrot.slane %v2176, %v2815
  %v2819 = vadd.f32 %v2774, %v2812
  %v2820 = vadd.f32 %v2776, %v2816
  %v2821 = vmul.f32 %v2791, %v2819
  %v2822 = vmul.f32 %v2793, %v2820
  %v2823 = vadd.f32 %v2042, %v2821
  %v2824 = vadd.f32 %v2044, %v2822
  %v2825 = vtanh.pop %v2823
  %v2826 = vtanh.pop %v2824
  %v2827 = vsub.f32 1.0, %v2805
  %v2828 = vsub.f32 1.0, %v2807
  %v2829 = vmul.f32 %v2827, %v2825
  %v2830 = vmul.f32 %v2828, %v2826
  %v2831 = vmul.f32 %v2805, 0.0
  %v2832 = vmul.f32 %v2807, 0.0
  %v2833 = vadd.f32 %v2829, %v2831
  %v2834 = vadd.f32 %v2830, %v2832
  %v2835 = vpack.c.bf16 %v2833, %v2833
  %v2836 = vpack.c.bf16 %v2834, %v2834
  %2837 = vmatprep.subr.bf16.mxu0 %v2466
  %2838 = vmatpush1.bf16.msra.mxu0 %v2465
  %2839 = vmatprep.subr.bf16.mxu0 %v2472
  %2840 = vmatpush1.bf16.msra.mxu0 %v2471
  %2841 = vmatprep.subr.bf16.mxu0 %v2478
  %2842 = vmatpush1.bf16.msra.mxu0 %v2477
  %2843 = vmatprep.subr.bf16.mxu0 %v2484
  %2844 = vmatpush1.bf16.msra.mxu0 %v2483
  %2845 = vmatprep.subr.bf16.mxu0 %v2490
  %2846 = vmatpush1.bf16.msra.mxu0 %v2489
  %2847 = vmatprep.subr.bf16.mxu0 %v2496
  %2848 = vmatpush1.bf16.msra.mxu0 %v2495
  %2849 = vmatprep.subr.bf16.mxu0 %v2502
  %2850 = vmatpush1.bf16.msra.mxu0 %v2501
  %2851 = vmatprep.subr.bf16.mxu0 %v2508
  %2852 = vmatpush1.bf16.msra.mxu0 %v2507
  %2853 = vmatprep.subr.bf16.mxu0 %v2514
  %2854 = vmatpush1.bf16.msra.mxu0 %v2513
  %2855 = vmatprep.subr.bf16.mxu0 %v2520
  %2856 = vmatpush1.bf16.msra.mxu0 %v2519
  %2857 = vmatprep.subr.bf16.mxu0 %v2526
  %2858 = vmatpush1.bf16.msra.mxu0 %v2525
  %2859 = vmatprep.subr.bf16.mxu0 %v2532
  %2860 = vmatpush1.bf16.msra.mxu0 %v2531
  %2861 = vmatprep.subr.bf16.mxu0 %v2538
  %2862 = vmatpush1.bf16.msra.mxu0 %v2537
  %2863 = vmatprep.subr.bf16.mxu0 %v2544
  %2864 = vmatpush1.bf16.msra.mxu0 %v2543
  %2865 = vmatprep.subr.bf16.mxu0 %v2550
  %2866 = vmatpush1.bf16.msra.mxu0 %v2549
  %2867 = vmatprep.subr.bf16.mxu0 %v2556
  %2868 = vmatpush1.bf16.msra.mxu0 %v2555
  %2869 = vmatprep.mubr.bf16.mxu0 %v2836
  %2870 = vmatmul.mubr.bf16.gmra.mrb[0].mxu0 %v2835
  %v2871 = vpop.f32.mrb[0].mxu0
  %v2872 = vadd.f32 0.0, %v2871
  %v2873 = vpop.f32.mrb[0].mxu0
  %v2874 = vadd.f32 0.0, %v2873
  %v2875 = vpop.f32.mrb[0].mxu0
  %v2876 = vpop.f32.mrb[0].mxu0
  %2877 = vdwg.mxu0
  %2878 = vmatprep.subr.bf16.mxu0 %v2468
  %2879 = vmatpush1.bf16.msra.mxu0 %v2467
  %2880 = vmatprep.subr.bf16.mxu0 %v2474
  %2881 = vmatpush1.bf16.msra.mxu0 %v2473
  %2882 = vmatprep.subr.bf16.mxu0 %v2480
  %2883 = vmatpush1.bf16.msra.mxu0 %v2479
  %2884 = vmatprep.subr.bf16.mxu0 %v2486
  %2885 = vmatpush1.bf16.msra.mxu0 %v2485
  %2886 = vmatprep.subr.bf16.mxu0 %v2492
  %2887 = vmatpush1.bf16.msra.mxu0 %v2491
  %2888 = vmatprep.subr.bf16.mxu0 %v2498
  %2889 = vmatpush1.bf16.msra.mxu0 %v2497
  %2890 = vmatprep.subr.bf16.mxu0 %v2504
  %2891 = vmatpush1.bf16.msra.mxu0 %v2503
  %2892 = vmatprep.subr.bf16.mxu0 %v2510
  %2893 = vmatpush1.bf16.msra.mxu0 %v2509
  %2894 = vmatprep.subr.bf16.mxu0 %v2516
  %2895 = vmatpush1.bf16.msra.mxu0 %v2515
  %2896 = vmatprep.subr.bf16.mxu0 %v2522
  %2897 = vmatpush1.bf16.msra.mxu0 %v2521
  %2898 = vmatprep.subr.bf16.mxu0 %v2528
  %2899 = vmatpush1.bf16.msra.mxu0 %v2527
  %2900 = vmatprep.subr.bf16.mxu0 %v2534
  %2901 = vmatpush1.bf16.msra.mxu0 %v2533
  %2902 = vmatprep.subr.bf16.mxu0 %v2540
  %2903 = vmatpush1.bf16.msra.mxu0 %v2539
  %2904 = vmatprep.subr.bf16.mxu0 %v2546
  %2905 = vmatpush1.bf16.msra.mxu0 %v2545
  %2906 = vmatprep.subr.bf16.mxu0 %v2552
  %2907 = vmatpush1.bf16.msra.mxu0 %v2551
  %2908 = vmatprep.subr.bf16.mxu0 %v2558
  %2909 = vmatpush1.bf16.msra.mxu0 %v2557
  %2910 = vmatprep.mubr.bf16.mxu0 %v2836
  %2911 = vmatmul.mubr.bf16.gmra.mrb[0].mxu0 %v2835
  %v2912 = vpop.f32.mrb[0].mxu0
  %v2913 = vadd.f32 0.0, %v2912
  %v2914 = vpop.f32.mrb[0].mxu0
  %v2915 = vadd.f32 0.0, %v2914
  %v2916 = vpop.f32.mrb[0].mxu0
  %v2917 = vpop.f32.mrb[0].mxu0
  %2918 = vdwg.mxu0
  %2919 = vmatprep.subr.bf16.mxu0 %v2470
  %2920 = vmatpush1.bf16.msra.mxu0 %v2469
  %2921 = vmatprep.subr.bf16.mxu0 %v2476
  %2922 = vmatpush1.bf16.msra.mxu0 %v2475
  %2923 = vmatprep.subr.bf16.mxu0 %v2482
  %2924 = vmatpush1.bf16.msra.mxu0 %v2481
  %2925 = vmatprep.subr.bf16.mxu0 %v2488
  %2926 = vmatpush1.bf16.msra.mxu0 %v2487
  %2927 = vmatprep.subr.bf16.mxu0 %v2494
  %2928 = vmatpush1.bf16.msra.mxu0 %v2493
  %2929 = vmatprep.subr.bf16.mxu0 %v2500
  %2930 = vmatpush1.bf16.msra.mxu0 %v2499
  %2931 = vmatprep.subr.bf16.mxu0 %v2506
  %2932 = vmatpush1.bf16.msra.mxu0 %v2505
  %2933 = vmatprep.subr.bf16.mxu0 %v2512
  %2934 = vmatpush1.bf16.msra.mxu0 %v2511
  %2935 = vmatprep.subr.bf16.mxu0 %v2518
  %2936 = vmatpush1.bf16.msra.mxu0 %v2517
  %2937 = vmatprep.subr.bf16.mxu0 %v2524
  %2938 = vmatpush1.bf16.msra.mxu0 %v2523
  %2939 = vmatprep.subr.bf16.mxu0 %v2530
  %2940 = vmatpush1.bf16.msra.mxu0 %v2529
  %2941 = vmatprep.subr.bf16.mxu0 %v2536
  %2942 = vmatpush1.bf16.msra.mxu0 %v2535
  %2943 = vmatprep.subr.bf16.mxu0 %v2542
  %2944 = vmatpush1.bf16.msra.mxu0 %v2541
  %2945 = vmatprep.subr.bf16.mxu0 %v2548
  %2946 = vmatpush1.bf16.msra.mxu0 %v2547
  %2947 = vmatprep.subr.bf16.mxu0 %v2554
  %2948 = vmatpush1.bf16.msra.mxu0 %v2553
  %2949 = vmatprep.subr.bf16.mxu0 %v2560
  %2950 = vmatpush1.bf16.msra.mxu0 %v2559
  %2951 = vmatprep.mubr.bf16.mxu0 %v2836
  %2952 = vmatmul.mubr.bf16.gmra.mrb[0].mxu0 %v2835
  %v2953 = vpop.f32.mrb[0].mxu0
  %v2954 = vadd.f32 0.0, %v2953
  %v2955 = vpop.f32.mrb[0].mxu0
  %v2956 = vadd.f32 0.0, %v2955
  %v2957 = vpop.f32.mrb[0].mxu0
  %v2958 = vpop.f32.mrb[0].mxu0
  %2959 = vdwg.mxu0
  %v2960 = vadd.f32 %v1900, %v2872
  %v2961 = vadd.f32 %v1902, %v2874
  %v2962 = vxor.u32 %v2960, 2147483648
  %v2963 = vxor.u32 %v2961, 2147483648
  %v2964 = vmul.f32 %v2962, 1.442695
  %v2965 = vpow.pop %v2964
  %v2966 = vmul.f32 %v2963, 1.442695
  %v2967 = vpow.pop %v2966
  %v2968 = vadd.f32 %v2965, 1.0
  %v2969 = vadd.f32 %v2967, 1.0
  %v2970 = vrcp.pop %v2968
  %v2971 = vmul.f32 1.0, %v2970
  %v2972 = vrcp.pop %v2969
  %v2973 = vmul.f32 1.0, %v2972
  %v2974 = vadd.f32 %v1973, %v2913
  %v2975 = vadd.f32 %v1975, %v2915
  %v2976 = vxor.u32 %v2974, 2147483648
  %v2977 = vxor.u32 %v2975, 2147483648
  %v2978 = vmul.f32 %v2976, 1.442695
  %v2979 = vpow.pop %v2978
  %v2980 = vmul.f32 %v2977, 1.442695
  %v2981 = vpow.pop %v2980
  %v2982 = vadd.f32 %v2979, 1.0
  %v2983 = vadd.f32 %v2981, 1.0
  %v2984 = vrcp.pop %v2982
  %v2985 = vmul.f32 1.0, %v2984
  %v2986 = vrcp.pop %v2983
  %v2987 = vmul.f32 1.0, %v2986
  %v2988 = vadd.f32 %v2954, %v2812
  %v2989 = vadd.f32 %v2956, %v2816
  %v2990 = vmul.f32 %v2971, %v2988
  %v2991 = vmul.f32 %v2973, %v2989
  %v2992 = vadd.f32 %v2046, %v2990
  %v2993 = vadd.f32 %v2048, %v2991
  %v2994 = vtanh.pop %v2992
  %v2995 = vtanh.pop %v2993
  %v2996 = vsub.f32 1.0, %v2985
  %v2997 = vsub.f32 1.0, %v2987
  %v2998 = vmul.f32 %v2996, %v2994
  %v2999 = vmul.f32 %v2997, %v2995
  %v3000 = vmul.f32 %v2985, %v2833
  %v3001 = vmul.f32 %v2987, %v2834
  %v3002 = vadd.f32 %v2998, %v3000
  %v3003 = vadd.f32 %v2999, %v3001
  %v3004 = vpack.c.bf16 %v3002, %v3002
  %v3005 = vpack.c.bf16 %v3003, %v3003
  %3006 = vmatprep.subr.bf16.mxu0 %v2466
  %3007 = vmatpush1.bf16.msra.mxu0 %v2465
  %3008 = vmatprep.subr.bf16.mxu0 %v2472
  %3009 = vmatpush1.bf16.msra.mxu0 %v2471
  %3010 = vmatprep.subr.bf16.mxu0 %v2478
  %3011 = vmatpush1.bf16.msra.mxu0 %v2477
  %3012 = vmatprep.subr.bf16.mxu0 %v2484
  %3013 = vmatpush1.bf16.msra.mxu0 %v2483
  %3014 = vmatprep.subr.bf16.mxu0 %v2490
  %3015 = vmatpush1.bf16.msra.mxu0 %v2489
  %3016 = vmatprep.subr.bf16.mxu0 %v2496
  %3017 = vmatpush1.bf16.msra.mxu0 %v2495
  %3018 = vmatprep.subr.bf16.mxu0 %v2502
  %3019 = vmatpush1.bf16.msra.mxu0 %v2501
  %3020 = vmatprep.subr.bf16.mxu0 %v2508
  %3021 = vmatpush1.bf16.msra.mxu0 %v2507
  %3022 = vmatprep.subr.bf16.mxu0 %v2514
  %3023 = vmatpush1.bf16.msra.mxu0 %v2513
  %3024 = vmatprep.subr.bf16.mxu0 %v2520
  %3025 = vmatpush1.bf16.msra.mxu0 %v2519
  %3026 = vmatprep.subr.bf16.mxu0 %v2526
  %3027 = vmatpush1.bf16.msra.mxu0 %v2525
  %3028 = vmatprep.subr.bf16.mxu0 %v2532
  %3029 = vmatpush1.bf16.msra.mxu0 %v2531
  %3030 = vmatprep.subr.bf16.mxu0 %v2538
  %3031 = vmatpush1.bf16.msra.mxu0 %v2537
  %3032 = vmatprep.subr.bf16.mxu0 %v2544
  %3033 = vmatpush1.bf16.msra.mxu0 %v2543
  %3034 = vmatprep.subr.bf16.mxu0 %v2550
  %3035 = vmatpush1.bf16.msra.mxu0 %v2549
  %3036 = vmatprep.subr.bf16.mxu0 %v2556
  %3037 = vmatpush1.bf16.msra.mxu0 %v2555
  %3038 = vmatprep.mubr.bf16.mxu0 %v3005
  %3039 = vmatmul.mubr.bf16.gmra.mrb[0].mxu0 %v3004
  %v3040 = vpop.f32.mrb[0].mxu0
  %v3041 = vadd.f32 0.0, %v3040
  %v3042 = vpop.f32.mrb[0].mxu0
  %v3043 = vadd.f32 0.0, %v3042
  %v3044 = vpop.f32.mrb[0].mxu0
  %v3045 = vpop.f32.mrb[0].mxu0
  %3046 = vdwg.mxu0
  %3047 = vmatprep.subr.bf16.mxu0 %v2468
  %3048 = vmatpush1.bf16.msra.mxu0 %v2467
  %3049 = vmatprep.subr.bf16.mxu0 %v2474
  %3050 = vmatpush1.bf16.msra.mxu0 %v2473
  %3051 = vmatprep.subr.bf16.mxu0 %v2480
  %3052 = vmatpush1.bf16.msra.mxu0 %v2479
  %3053 = vmatprep.subr.bf16.mxu0 %v2486
  %3054 = vmatpush1.bf16.msra.mxu0 %v2485
  %3055 = vmatprep.subr.bf16.mxu0 %v2492
  %3056 = vmatpush1.bf16.msra.mxu0 %v2491
  %3057 = vmatprep.subr.bf16.mxu0 %v2498
  %3058 = vmatpush1.bf16.msra.mxu0 %v2497
  %3059 = vmatprep.subr.bf16.mxu0 %v2504
  %3060 = vmatpush1.bf16.msra.mxu0 %v2503
  %3061 = vmatprep.subr.bf16.mxu0 %v2510
  %3062 = vmatpush1.bf16.msra.mxu0 %v2509
  %3063 = vmatprep.subr.bf16.mxu0 %v2516
  %3064 = vmatpush1.bf16.msra.mxu0 %v2515
  %3065 = vmatprep.subr.bf16.mxu0 %v2522
  %3066 = vmatpush1.bf16.msra.mxu0 %v2521
  %3067 = vmatprep.subr.bf16.mxu0 %v2528
  %3068 = vmatpush1.bf16.msra.mxu0 %v2527
  %3069 = vmatprep.subr.bf16.mxu0 %v2534
  %3070 = vmatpush1.bf16.msra.mxu0 %v2533
  %3071 = vmatprep.subr.bf16.mxu0 %v2540
  %3072 = vmatpush1.bf16.msra.mxu0 %v2539
  %3073 = vmatprep.subr.bf16.mxu0 %v2546
  %3074 = vmatpush1.bf16.msra.mxu0 %v2545
  %3075 = vmatprep.subr.bf16.mxu0 %v2552
  %3076 = vmatpush1.bf16.msra.mxu0 %v2551
  %3077 = vmatprep.subr.bf16.mxu0 %v2558
  %3078 = vmatpush1.bf16.msra.mxu0 %v2557
  %3079 = vmatprep.mubr.bf16.mxu0 %v3005
  %3080 = vmatmul.mubr.bf16.gmra.mrb[0].mxu0 %v3004
  %v3081 = vpop.f32.mrb[0].mxu0
  %v3082 = vadd.f32 0.0, %v3081
  %v3083 = vpop.f32.mrb[0].mxu0
  %v3084 = vadd.f32 0.0, %v3083
  %v3085 = vpop.f32.mrb[0].mxu0
  %v3086 = vpop.f32.mrb[0].mxu0
  %3087 = vdwg.mxu0
  %3088 = vmatprep.subr.bf16.mxu0 %v2470
  %3089 = vmatpush1.bf16.msra.mxu0 %v2469
  %3090 = vmatprep.subr.bf16.mxu0 %v2476
  %3091 = vmatpush1.bf16.msra.mxu0 %v2475
  %3092 = vmatprep.subr.bf16.mxu0 %v2482
  %3093 = vmatpush1.bf16.msra.mxu0 %v2481
  %3094 = vmatprep.subr.bf16.mxu0 %v2488
  %3095 = vmatpush1.bf16.msra.mxu0 %v2487
  %3096 = vmatprep.subr.bf16.mxu0 %v2494
  %3097 = vmatpush1.bf16.msra.mxu0 %v2493
  %3098 = vmatprep.subr.bf16.mxu0 %v2500
  %3099 = vmatpush1.bf16.msra.mxu0 %v2499
  %3100 = vmatprep.subr.bf16.mxu0 %v2506
  %3101 = vmatpush1.bf16.msra.mxu0 %v2505
  %3102 = vmatprep.subr.bf16.mxu0 %v2512
  %3103 = vmatpush1.bf16.msra.mxu0 %v2511
  %3104 = vmatprep.subr.bf16.mxu0 %v2518
  %3105 = vmatpush1.bf16.msra.mxu0 %v2517
  %3106 = vmatprep.subr.bf16.mxu0 %v2524
  %3107 = vmatpush1.bf16.msra.mxu0 %v2523
  %3108 = vmatprep.subr.bf16.mxu0 %v2530
  %3109 = vmatpush1.bf16.msra.mxu0 %v2529
  %3110 = vmatprep.subr.bf16.mxu0 %v2536
  %3111 = vmatpush1.bf16.msra.mxu0 %v2535
  %3112 = vmatprep.subr.bf16.mxu0 %v2542
  %3113 = vmatpush1.bf16.msra.mxu0 %v2541
  %3114 = vmatprep.subr.bf16.mxu0 %v2548
  %3115 = vmatpush1.bf16.msra.mxu0 %v2547
  %3116 = vmatprep.subr.bf16.mxu0 %v2554
  %3117 = vmatpush1.bf16.msra.mxu0 %v2553
  %3118 = vmatprep.subr.bf16.mxu0 %v2560
  %3119 = vmatpush1.bf16.msra.mxu0 %v2559
  %3120 = vmatprep.mubr.bf16.mxu0 %v3005
  %3121 = vmatmul.mubr.bf16.gmra.mrb[0].mxu0 %v3004
  %v3122 = vpop.f32.mrb[0].mxu0
  %v3123 = vadd.f32 0.0, %v3122
  %v3124 = vpop.f32.mrb[0].mxu0
  %v3125 = vadd.f32 0.0, %v3124
  %v3126 = vpop.f32.mrb[0].mxu0
  %v3127 = vpop.f32.mrb[0].mxu0
  %3128 = vdwg.mxu0
  %v3129 = vadd.f32 %v1906, %v3041
  %v3130 = vadd.f32 %v1908, %v3043
  %v3131 = vxor.u32 %v3129, 2147483648
  %v3132 = vxor.u32 %v3130, 2147483648
  %v3133 = vmul.f32 %v3131, 1.442695
  %v3134 = vpow.pop %v3133
  %v3135 = vmul.f32 %v3132, 1.442695
  %v3136 = vpow.pop %v3135
  %v3137 = vadd.f32 %v3134, 1.0
  %v3138 = vadd.f32 %v3136, 1.0
  %v3139 = vrcp.pop %v3137
  %v3140 = vmul.f32 1.0, %v3139
  %v3141 = vrcp.pop %v3138
  %v3142 = vmul.f32 1.0, %v3141
  %v3143 = vadd.f32 %v1979, %v3082
  %v3144 = vadd.f32 %v1981, %v3084
  %v3145 = vxor.u32 %v3143, 2147483648
  %v3146 = vxor.u32 %v3144, 2147483648
  %v3147 = vmul.f32 %v3145, 1.442695
  %v3148 = vpow.pop %v3147
  %v3149 = vmul.f32 %v3146, 1.442695
  %v3150 = vpow.pop %v3149
  %v3151 = vadd.f32 %v3148, 1.0
  %v3152 = vadd.f32 %v3150, 1.0
  %v3153 = vrcp.pop %v3151
  %v3154 = vmul.f32 1.0, %v3153
  %v3155 = vrcp.pop %v3152
  %v3156 = vmul.f32 1.0, %v3155
  %v3157 = vadd.f32 %v3123, %v2812
  %v3158 = vadd.f32 %v3125, %v2816
  %v3159 = vmul.f32 %v3140, %v3157
  %v3160 = vmul.f32 %v3142, %v3158
  %v3161 = vadd.f32 %v2052, %v3159
  %v3162 = vadd.f32 %v2054, %v3160
  %v3163 = vtanh.pop %v3161
  %v3164 = vtanh.pop %v3162
  %v3165 = vsub.f32 1.0, %v3154
  %v3166 = vsub.f32 1.0, %v3156
  %v3167 = vmul.f32 %v3165, %v3163
  %v3168 = vmul.f32 %v3166, %v3164
  %v3169 = vmul.f32 %v3154, %v3002
  %v3170 = vmul.f32 %v3156, %v3003
  %v3171 = vadd.f32 %v3167, %v3169
  %v3172 = vadd.f32 %v3168, %v3170
  %v3173 = vpack.c.bf16 %v3171, %v3171
  %v3174 = vpack.c.bf16 %v3172, %v3172
  %3175 = vmatprep.subr.bf16.mxu0 %v2466
  %3176 = vmatpush1.bf16.msra.mxu0 %v2465
  %3177 = vmatprep.subr.bf16.mxu0 %v2472
  %3178 = vmatpush1.bf16.msra.mxu0 %v2471
  %3179 = vmatprep.subr.bf16.mxu0 %v2478
  %3180 = vmatpush1.bf16.msra.mxu0 %v2477
  %3181 = vmatprep.subr.bf16.mxu0 %v2484
  %3182 = vmatpush1.bf16.msra.mxu0 %v2483
  %3183 = vmatprep.subr.bf16.mxu0 %v2490
  %3184 = vmatpush1.bf16.msra.mxu0 %v2489
  %3185 = vmatprep.subr.bf16.mxu0 %v2496
  %3186 = vmatpush1.bf16.msra.mxu0 %v2495
  %3187 = vmatprep.subr.bf16.mxu0 %v2502
  %3188 = vmatpush1.bf16.msra.mxu0 %v2501
  %3189 = vmatprep.subr.bf16.mxu0 %v2508
  %3190 = vmatpush1.bf16.msra.mxu0 %v2507
  %3191 = vmatprep.subr.bf16.mxu0 %v2514
  %3192 = vmatpush1.bf16.msra.mxu0 %v2513
  %3193 = vmatprep.subr.bf16.mxu0 %v2520
  %3194 = vmatpush1.bf16.msra.mxu0 %v2519
  %3195 = vmatprep.subr.bf16.mxu0 %v2526
  %3196 = vmatpush1.bf16.msra.mxu0 %v2525
  %3197 = vmatprep.subr.bf16.mxu0 %v2532
  %3198 = vmatpush1.bf16.msra.mxu0 %v2531
  %3199 = vmatprep.subr.bf16.mxu0 %v2538
  %3200 = vmatpush1.bf16.msra.mxu0 %v2537
  %3201 = vmatprep.subr.bf16.mxu0 %v2544
  %3202 = vmatpush1.bf16.msra.mxu0 %v2543
  %3203 = vmatprep.subr.bf16.mxu0 %v2550
  %3204 = vmatpush1.bf16.msra.mxu0 %v2549
  %3205 = vmatprep.subr.bf16.mxu0 %v2556
  %3206 = vmatpush1.bf16.msra.mxu0 %v2555
  %3207 = vmatprep.mubr.bf16.mxu0 %v3174
  %3208 = vmatmul.mubr.bf16.gmra.mrb[0].mxu0 %v3173
  %v3209 = vpop.f32.mrb[0].mxu0
  %v3210 = vadd.f32 0.0, %v3209
  %v3211 = vpop.f32.mrb[0].mxu0
  %v3212 = vadd.f32 0.0, %v3211
  %v3213 = vpop.f32.mrb[0].mxu0
  %v3214 = vpop.f32.mrb[0].mxu0
  %3215 = vdwg.mxu0
  %3216 = vmatprep.subr.bf16.mxu0 %v2468
  %3217 = vmatpush1.bf16.msra.mxu0 %v2467
  %3218 = vmatprep.subr.bf16.mxu0 %v2474
  %3219 = vmatpush1.bf16.msra.mxu0 %v2473
  %3220 = vmatprep.subr.bf16.mxu0 %v2480
  %3221 = vmatpush1.bf16.msra.mxu0 %v2479
  %3222 = vmatprep.subr.bf16.mxu0 %v2486
  %3223 = vmatpush1.bf16.msra.mxu0 %v2485
  %3224 = vmatprep.subr.bf16.mxu0 %v2492
  %3225 = vmatpush1.bf16.msra.mxu0 %v2491
  %3226 = vmatprep.subr.bf16.mxu0 %v2498
  %3227 = vmatpush1.bf16.msra.mxu0 %v2497
  %3228 = vmatprep.subr.bf16.mxu0 %v2504
  %3229 = vmatpush1.bf16.msra.mxu0 %v2503
  %3230 = vmatprep.subr.bf16.mxu0 %v2510
  %3231 = vmatpush1.bf16.msra.mxu0 %v2509
  %3232 = vmatprep.subr.bf16.mxu0 %v2516
  %3233 = vmatpush1.bf16.msra.mxu0 %v2515
  %3234 = vmatprep.subr.bf16.mxu0 %v2522
  %3235 = vmatpush1.bf16.msra.mxu0 %v2521
  %3236 = vmatprep.subr.bf16.mxu0 %v2528
  %3237 = vmatpush1.bf16.msra.mxu0 %v2527
  %3238 = vmatprep.subr.bf16.mxu0 %v2534
  %3239 = vmatpush1.bf16.msra.mxu0 %v2533
  %3240 = vmatprep.subr.bf16.mxu0 %v2540
  %3241 = vmatpush1.bf16.msra.mxu0 %v2539
  %3242 = vmatprep.subr.bf16.mxu0 %v2546
  %3243 = vmatpush1.bf16.msra.mxu0 %v2545
  %3244 = vmatprep.subr.bf16.mxu0 %v2552
  %3245 = vmatpush1.bf16.msra.mxu0 %v2551
  %3246 = vmatprep.subr.bf16.mxu0 %v2558
  %3247 = vmatpush1.bf16.msra.mxu0 %v2557
  %3248 = vmatprep.mubr.bf16.mxu0 %v3174
  %3249 = vmatmul.mubr.bf16.gmra.mrb[0].mxu0 %v3173
  %v3250 = vpop.f32.mrb[0].mxu0
  %v3251 = vadd.f32 0.0, %v3250
  %v3252 = vpop.f32.mrb[0].mxu0
  %v3253 = vadd.f32 0.0, %v3252
  %v3254 = vpop.f32.mrb[0].mxu0
  %v3255 = vpop.f32.mrb[0].mxu0
  %3256 = vdwg.mxu0
  %3257 = vmatprep.subr.bf16.mxu0 %v2470
  %3258 = vmatpush1.bf16.msra.mxu0 %v2469
  %3259 = vmatprep.subr.bf16.mxu0 %v2476
  %3260 = vmatpush1.bf16.msra.mxu0 %v2475
  %3261 = vmatprep.subr.bf16.mxu0 %v2482
  %3262 = vmatpush1.bf16.msra.mxu0 %v2481
  %3263 = vmatprep.subr.bf16.mxu0 %v2488
  %3264 = vmatpush1.bf16.msra.mxu0 %v2487
  %3265 = vmatprep.subr.bf16.mxu0 %v2494
  %3266 = vmatpush1.bf16.msra.mxu0 %v2493
  %3267 = vmatprep.subr.bf16.mxu0 %v2500
  %3268 = vmatpush1.bf16.msra.mxu0 %v2499
  %3269 = vmatprep.subr.bf16.mxu0 %v2506
  %3270 = vmatpush1.bf16.msra.mxu0 %v2505
  %3271 = vmatprep.subr.bf16.mxu0 %v2512
  %3272 = vmatpush1.bf16.msra.mxu0 %v2511
  %3273 = vmatprep.subr.bf16.mxu0 %v2518
  %3274 = vmatpush1.bf16.msra.mxu0 %v2517
  %3275 = vmatprep.subr.bf16.mxu0 %v2524
  %3276 = vmatpush1.bf16.msra.mxu0 %v2523
  %3277 = vmatprep.subr.bf16.mxu0 %v2530
  %3278 = vmatpush1.bf16.msra.mxu0 %v2529
  %3279 = vmatprep.subr.bf16.mxu0 %v2536
  %3280 = vmatpush1.bf16.msra.mxu0 %v2535
  %3281 = vmatprep.subr.bf16.mxu0 %v2542
  %3282 = vmatpush1.bf16.msra.mxu0 %v2541
  %3283 = vmatprep.subr.bf16.mxu0 %v2548
  %3284 = vmatpush1.bf16.msra.mxu0 %v2547
  %3285 = vmatprep.subr.bf16.mxu0 %v2554
  %3286 = vmatpush1.bf16.msra.mxu0 %v2553
  %3287 = vmatprep.subr.bf16.mxu0 %v2560
  %3288 = vmatpush1.bf16.msra.mxu0 %v2559
  %3289 = vmatprep.mubr.bf16.mxu0 %v3174
  %3290 = vmatmul.mubr.bf16.gmra.mrb[0].mxu0 %v3173
  %v3291 = vpop.f32.mrb[0].mxu0
  %v3292 = vadd.f32 0.0, %v3291
  %v3293 = vpop.f32.mrb[0].mxu0
  %v3294 = vadd.f32 0.0, %v3293
  %v3295 = vpop.f32.mrb[0].mxu0
  %v3296 = vpop.f32.mrb[0].mxu0
  %3297 = vdwg.mxu0
  %v3298 = vadd.f32 %v1910, %v3210
  %v3299 = vadd.f32 %v1912, %v3212
  %v3300 = vxor.u32 %v3298, 2147483648
  %v3301 = vxor.u32 %v3299, 2147483648
  %v3302 = vmul.f32 %v3300, 1.442695
  %v3303 = vpow.pop %v3302
  %v3304 = vmul.f32 %v3301, 1.442695
  %v3305 = vpow.pop %v3304
  %v3306 = vadd.f32 %v3303, 1.0
  %v3307 = vadd.f32 %v3305, 1.0
  %v3308 = vrcp.pop %v3306
  %v3309 = vmul.f32 1.0, %v3308
  %v3310 = vrcp.pop %v3307
  %v3311 = vmul.f32 1.0, %v3310
  %v3312 = vadd.f32 %v1983, %v3251
  %v3313 = vadd.f32 %v1985, %v3253
  %v3314 = vxor.u32 %v3312, 2147483648
  %v3315 = vxor.u32 %v3313, 2147483648
  %v3316 = vmul.f32 %v3314, 1.442695
  %v3317 = vpow.pop %v3316
  %v3318 = vmul.f32 %v3315, 1.442695
  %v3319 = vpow.pop %v3318
  %v3320 = vadd.f32 %v3317, 1.0
  %v3321 = vadd.f32 %v3319, 1.0
  %v3322 = vrcp.pop %v3320
  %v3323 = vmul.f32 1.0, %v3322
  %v3324 = vrcp.pop %v3321
  %v3325 = vmul.f32 1.0, %v3324
  %v3326 = vadd.f32 %v3292, %v2812
  %v3327 = vadd.f32 %v3294, %v2816
  %v3328 = vmul.f32 %v3309, %v3326
  %v3329 = vmul.f32 %v3311, %v3327
  %v3330 = vadd.f32 %v2056, %v3328
  %v3331 = vadd.f32 %v2058, %v3329
  %v3332 = vtanh.pop %v3330
  %v3333 = vtanh.pop %v3331
  %v3334 = vsub.f32 1.0, %v3323
  %v3335 = vsub.f32 1.0, %v3325
  %v3336 = vmul.f32 %v3334, %v3332
  %v3337 = vmul.f32 %v3335, %v3333
  %v3338 = vmul.f32 %v3323, %v3171
  %v3339 = vmul.f32 %v3325, %v3172
  %v3340 = vadd.f32 %v3336, %v3338
  %v3341 = vadd.f32 %v3337, %v3339
  %v3342 = vpack.c.bf16 %v3340, %v3340
  %v3343 = vpack.c.bf16 %v3341, %v3341
  %3344 = vmatprep.subr.bf16.mxu0 %v2466
  %3345 = vmatpush1.bf16.msra.mxu0 %v2465
  %3346 = vmatprep.subr.bf16.mxu0 %v2472
  %3347 = vmatpush1.bf16.msra.mxu0 %v2471
  %3348 = vmatprep.subr.bf16.mxu0 %v2478
  %3349 = vmatpush1.bf16.msra.mxu0 %v2477
  %3350 = vmatprep.subr.bf16.mxu0 %v2484
  %3351 = vmatpush1.bf16.msra.mxu0 %v2483
  %3352 = vmatprep.subr.bf16.mxu0 %v2490
  %3353 = vmatpush1.bf16.msra.mxu0 %v2489
  %3354 = vmatprep.subr.bf16.mxu0 %v2496
  %3355 = vmatpush1.bf16.msra.mxu0 %v2495
  %3356 = vmatprep.subr.bf16.mxu0 %v2502
  %3357 = vmatpush1.bf16.msra.mxu0 %v2501
  %3358 = vmatprep.subr.bf16.mxu0 %v2508
  %3359 = vmatpush1.bf16.msra.mxu0 %v2507
  %3360 = vmatprep.subr.bf16.mxu0 %v2514
  %3361 = vmatpush1.bf16.msra.mxu0 %v2513
  %3362 = vmatprep.subr.bf16.mxu0 %v2520
  %3363 = vmatpush1.bf16.msra.mxu0 %v2519
  %3364 = vmatprep.subr.bf16.mxu0 %v2526
  %3365 = vmatpush1.bf16.msra.mxu0 %v2525
  %3366 = vmatprep.subr.bf16.mxu0 %v2532
  %3367 = vmatpush1.bf16.msra.mxu0 %v2531
  %3368 = vmatprep.subr.bf16.mxu0 %v2538
  %3369 = vmatpush1.bf16.msra.mxu0 %v2537
  %3370 = vmatprep.subr.bf16.mxu0 %v2544
  %3371 = vmatpush1.bf16.msra.mxu0 %v2543
  %3372 = vmatprep.subr.bf16.mxu0 %v2550
  %3373 = vmatpush1.bf16.msra.mxu0 %v2549
  %3374 = vmatprep.subr.bf16.mxu0 %v2556
  %3375 = vmatpush1.bf16.msra.mxu0 %v2555
  %3376 = vmatprep.mubr.bf16.mxu0 %v3343
  %3377 = vmatmul.mubr.bf16.gmra.mrb[0].mxu0 %v3342
  %v3378 = vpop.f32.mrb[0].mxu0
  %v3379 = vadd.f32 0.0, %v3378
  %v3380 = vpop.f32.mrb[0].mxu0
  %v3381 = vadd.f32 0.0, %v3380
  %v3382 = vpop.f32.mrb[0].mxu0
  %v3383 = vpop.f32.mrb[0].mxu0
  %3384 = vdwg.mxu0
  %3385 = vmatprep.subr.bf16.mxu0 %v2468
  %3386 = vmatpush1.bf16.msra.mxu0 %v2467
  %3387 = vmatprep.subr.bf16.mxu0 %v2474
  %3388 = vmatpush1.bf16.msra.mxu0 %v2473
  %3389 = vmatprep.subr.bf16.mxu0 %v2480
  %3390 = vmatpush1.bf16.msra.mxu0 %v2479
  %3391 = vmatprep.subr.bf16.mxu0 %v2486
  %3392 = vmatpush1.bf16.msra.mxu0 %v2485
  %3393 = vmatprep.subr.bf16.mxu0 %v2492
  %3394 = vmatpush1.bf16.msra.mxu0 %v2491
  %3395 = vmatprep.subr.bf16.mxu0 %v2498
  %3396 = vmatpush1.bf16.msra.mxu0 %v2497
  %3397 = vmatprep.subr.bf16.mxu0 %v2504
  %3398 = vmatpush1.bf16.msra.mxu0 %v2503
  %3399 = vmatprep.subr.bf16.mxu0 %v2510
  %3400 = vmatpush1.bf16.msra.mxu0 %v2509
  %3401 = vmatprep.subr.bf16.mxu0 %v2516
  %3402 = vmatpush1.bf16.msra.mxu0 %v2515
  %3403 = vmatprep.subr.bf16.mxu0 %v2522
  %3404 = vmatpush1.bf16.msra.mxu0 %v2521
  %3405 = vmatprep.subr.bf16.mxu0 %v2528
  %3406 = vmatpush1.bf16.msra.mxu0 %v2527
  %3407 = vmatprep.subr.bf16.mxu0 %v2534
  %3408 = vmatpush1.bf16.msra.mxu0 %v2533
  %3409 = vmatprep.subr.bf16.mxu0 %v2540
  %3410 = vmatpush1.bf16.msra.mxu0 %v2539
  %3411 = vmatprep.subr.bf16.mxu0 %v2546
  %3412 = vmatpush1.bf16.msra.mxu0 %v2545
  %3413 = vmatprep.subr.bf16.mxu0 %v2552
  %3414 = vmatpush1.bf16.msra.mxu0 %v2551
  %3415 = vmatprep.subr.bf16.mxu0 %v2558
  %3416 = vmatpush1.bf16.msra.mxu0 %v2557
  %3417 = vmatprep.mubr.bf16.mxu0 %v3343
  %3418 = vmatmul.mubr.bf16.gmra.mrb[0].mxu0 %v3342
  %v3419 = vpop.f32.mrb[0].mxu0
  %v3420 = vadd.f32 0.0, %v3419
  %v3421 = vpop.f32.mrb[0].mxu0
  %v3422 = vadd.f32 0.0, %v3421
  %v3423 = vpop.f32.mrb[0].mxu0
  %v3424 = vpop.f32.mrb[0].mxu0
  %3425 = vdwg.mxu0
  %3426 = vmatprep.subr.bf16.mxu0 %v2470
  %3427 = vmatpush1.bf16.msra.mxu0 %v2469
  %3428 = vmatprep.subr.bf16.mxu0 %v2476
  %3429 = vmatpush1.bf16.msra.mxu0 %v2475
  %3430 = vmatprep.subr.bf16.mxu0 %v2482
  %3431 = vmatpush1.bf16.msra.mxu0 %v2481
  %3432 = vmatprep.subr.bf16.mxu0 %v2488
  %3433 = vmatpush1.bf16.msra.mxu0 %v2487
  %3434 = vmatprep.subr.bf16.mxu0 %v2494
  %3435 = vmatpush1.bf16.msra.mxu0 %v2493
  %3436 = vmatprep.subr.bf16.mxu0 %v2500
  %3437 = vmatpush1.bf16.msra.mxu0 %v2499
  %3438 = vmatprep.subr.bf16.mxu0 %v2506
  %3439 = vmatpush1.bf16.msra.mxu0 %v2505
  %3440 = vmatprep.subr.bf16.mxu0 %v2512
  %3441 = vmatpush1.bf16.msra.mxu0 %v2511
  %3442 = vmatprep.subr.bf16.mxu0 %v2518
  %3443 = vmatpush1.bf16.msra.mxu0 %v2517
  %3444 = vmatprep.subr.bf16.mxu0 %v2524
  %3445 = vmatpush1.bf16.msra.mxu0 %v2523
  %3446 = vmatprep.subr.bf16.mxu0 %v2530
  %3447 = vmatpush1.bf16.msra.mxu0 %v2529
  %3448 = vmatprep.subr.bf16.mxu0 %v2536
  %3449 = vmatpush1.bf16.msra.mxu0 %v2535
  %3450 = vmatprep.subr.bf16.mxu0 %v2542
  %3451 = vmatpush1.bf16.msra.mxu0 %v2541
  %3452 = vmatprep.subr.bf16.mxu0 %v2548
  %3453 = vmatpush1.bf16.msra.mxu0 %v2547
  %3454 = vmatprep.subr.bf16.mxu0 %v2554
  %3455 = vmatpush1.bf16.msra.mxu0 %v2553
  %3456 = vmatprep.subr.bf16.mxu0 %v2560
  %3457 = vmatpush1.bf16.msra.mxu0 %v2559
  %3458 = vmatprep.mubr.bf16.mxu0 %v3343
  %3459 = vmatmul.mubr.bf16.gmra.mrb[0].mxu0 %v3342
  %v3460 = vpop.f32.mrb[0].mxu0
  %v3461 = vadd.f32 0.0, %v3460
  %v3462 = vpop.f32.mrb[0].mxu0
  %v3463 = vadd.f32 0.0, %v3462
  %v3464 = vpop.f32.mrb[0].mxu0
  %v3465 = vpop.f32.mrb[0].mxu0
  %3466 = vdwg.mxu0
  %v3467 = vadd.f32 %v1916, %v3379
  %v3468 = vadd.f32 %v1918, %v3381
  %v3469 = vxor.u32 %v3467, 2147483648
  %v3470 = vxor.u32 %v3468, 2147483648
  %v3471 = vmul.f32 %v3469, 1.442695
  %v3472 = vpow.pop %v3471
  %v3473 = vmul.f32 %v3470, 1.442695
  %v3474 = vpow.pop %v3473
  %v3475 = vadd.f32 %v3472, 1.0
  %v3476 = vadd.f32 %v3474, 1.0
  %v3477 = vrcp.pop %v3475
  %v3478 = vmul.f32 1.0, %v3477
  %v3479 = vrcp.pop %v3476
  %v3480 = vmul.f32 1.0, %v3479
  %v3481 = vadd.f32 %v1989, %v3420
  %v3482 = vadd.f32 %v1991, %v3422
  %v3483 = vxor.u32 %v3481, 2147483648
  %v3484 = vxor.u32 %v3482, 2147483648
  %v3485 = vmul.f32 %v3483, 1.442695
  %v3486 = vpow.pop %v3485
  %v3487 = vmul.f32 %v3484, 1.442695
  %v3488 = vpow.pop %v3487
  %v3489 = vadd.f32 %v3486, 1.0
  %v3490 = vadd.f32 %v3488, 1.0
  %v3491 = vrcp.pop %v3489
  %v3492 = vmul.f32 1.0, %v3491
  %v3493 = vrcp.pop %v3490
  %v3494 = vmul.f32 1.0, %v3493
  %v3495 = vadd.f32 %v3461, %v2812
  %v3496 = vadd.f32 %v3463, %v2816
  %v3497 = vmul.f32 %v3478, %v3495
  %v3498 = vmul.f32 %v3480, %v3496
  %v3499 = vadd.f32 %v2062, %v3497
  %v3500 = vadd.f32 %v2064, %v3498
  %v3501 = vtanh.pop %v3499
  %v3502 = vtanh.pop %v3500
  %v3503 = vsub.f32 1.0, %v3492
  %v3504 = vsub.f32 1.0, %v3494
  %v3505 = vmul.f32 %v3503, %v3501
  %v3506 = vmul.f32 %v3504, %v3502
  %v3507 = vmul.f32 %v3492, %v3340
  %v3508 = vmul.f32 %v3494, %v3341
  %v3509 = vadd.f32 %v3505, %v3507
  %v3510 = vadd.f32 %v3506, %v3508
  %v3511 = vpack.c.bf16 %v3509, %v3509
  %v3512 = vpack.c.bf16 %v3510, %v3510
  %3513 = vmatprep.subr.bf16.mxu0 %v2466
  %3514 = vmatpush1.bf16.msra.mxu0 %v2465
  %3515 = vmatprep.subr.bf16.mxu0 %v2472
  %3516 = vmatpush1.bf16.msra.mxu0 %v2471
  %3517 = vmatprep.subr.bf16.mxu0 %v2478
  %3518 = vmatpush1.bf16.msra.mxu0 %v2477
  %3519 = vmatprep.subr.bf16.mxu0 %v2484
  %3520 = vmatpush1.bf16.msra.mxu0 %v2483
  %3521 = vmatprep.subr.bf16.mxu0 %v2490
  %3522 = vmatpush1.bf16.msra.mxu0 %v2489
  %3523 = vmatprep.subr.bf16.mxu0 %v2496
  %3524 = vmatpush1.bf16.msra.mxu0 %v2495
  %3525 = vmatprep.subr.bf16.mxu0 %v2502
  %3526 = vmatpush1.bf16.msra.mxu0 %v2501
  %3527 = vmatprep.subr.bf16.mxu0 %v2508
  %3528 = vmatpush1.bf16.msra.mxu0 %v2507
  %3529 = vmatprep.subr.bf16.mxu0 %v2514
  %3530 = vmatpush1.bf16.msra.mxu0 %v2513
  %3531 = vmatprep.subr.bf16.mxu0 %v2520
  %3532 = vmatpush1.bf16.msra.mxu0 %v2519
  %3533 = vmatprep.subr.bf16.mxu0 %v2526
  %3534 = vmatpush1.bf16.msra.mxu0 %v2525
  %3535 = vmatprep.subr.bf16.mxu0 %v2532
  %3536 = vmatpush1.bf16.msra.mxu0 %v2531
  %3537 = vmatprep.subr.bf16.mxu0 %v2538
  %3538 = vmatpush1.bf16.msra.mxu0 %v2537
  %3539 = vmatprep.subr.bf16.mxu0 %v2544
  %3540 = vmatpush1.bf16.msra.mxu0 %v2543
  %3541 = vmatprep.subr.bf16.mxu0 %v2550
  %3542 = vmatpush1.bf16.msra.mxu0 %v2549
  %3543 = vmatprep.subr.bf16.mxu0 %v2556
  %3544 = vmatpush1.bf16.msra.mxu0 %v2555
  %3545 = vmatprep.mubr.bf16.mxu0 %v3512
  %3546 = vmatmul.mubr.bf16.gmra.mrb[0].mxu0 %v3511
  %v3547 = vpop.f32.mrb[0].mxu0
  %v3548 = vadd.f32 0.0, %v3547
  %v3549 = vpop.f32.mrb[0].mxu0
  %v3550 = vadd.f32 0.0, %v3549
  %v3551 = vpop.f32.mrb[0].mxu0
  %v3552 = vpop.f32.mrb[0].mxu0
  %3553 = vdwg.mxu0
  %3554 = vmatprep.subr.bf16.mxu0 %v2468
  %3555 = vmatpush1.bf16.msra.mxu0 %v2467
  %3556 = vmatprep.subr.bf16.mxu0 %v2474
  %3557 = vmatpush1.bf16.msra.mxu0 %v2473
  %3558 = vmatprep.subr.bf16.mxu0 %v2480
  %3559 = vmatpush1.bf16.msra.mxu0 %v2479
  %3560 = vmatprep.subr.bf16.mxu0 %v2486
  %3561 = vmatpush1.bf16.msra.mxu0 %v2485
  %3562 = vmatprep.subr.bf16.mxu0 %v2492
  %3563 = vmatpush1.bf16.msra.mxu0 %v2491
  %3564 = vmatprep.subr.bf16.mxu0 %v2498
  %3565 = vmatpush1.bf16.msra.mxu0 %v2497
  %3566 = vmatprep.subr.bf16.mxu0 %v2504
  %3567 = vmatpush1.bf16.msra.mxu0 %v2503
  %3568 = vmatprep.subr.bf16.mxu0 %v2510
  %3569 = vmatpush1.bf16.msra.mxu0 %v2509
  %3570 = vmatprep.subr.bf16.mxu0 %v2516
  %3571 = vmatpush1.bf16.msra.mxu0 %v2515
  %3572 = vmatprep.subr.bf16.mxu0 %v2522
  %3573 = vmatpush1.bf16.msra.mxu0 %v2521
  %3574 = vmatprep.subr.bf16.mxu0 %v2528
  %3575 = vmatpush1.bf16.msra.mxu0 %v2527
  %3576 = vmatprep.subr.bf16.mxu0 %v2534
  %3577 = vmatpush1.bf16.msra.mxu0 %v2533
  %3578 = vmatprep.subr.bf16.mxu0 %v2540
  %3579 = vmatpush1.bf16.msra.mxu0 %v2539
  %3580 = vmatprep.subr.bf16.mxu0 %v2546
  %3581 = vmatpush1.bf16.msra.mxu0 %v2545
  %3582 = vmatprep.subr.bf16.mxu0 %v2552
  %3583 = vmatpush1.bf16.msra.mxu0 %v2551
  %3584 = vmatprep.subr.bf16.mxu0 %v2558
  %3585 = vmatpush1.bf16.msra.mxu0 %v2557
  %3586 = vmatprep.mubr.bf16.mxu0 %v3512
  %3587 = vmatmul.mubr.bf16.gmra.mrb[0].mxu0 %v3511
  %v3588 = vpop.f32.mrb[0].mxu0
  %v3589 = vadd.f32 0.0, %v3588
  %v3590 = vpop.f32.mrb[0].mxu0
  %v3591 = vadd.f32 0.0, %v3590
  %v3592 = vpop.f32.mrb[0].mxu0
  %v3593 = vpop.f32.mrb[0].mxu0
  %3594 = vdwg.mxu0
  %3595 = vmatprep.subr.bf16.mxu0 %v2470
  %3596 = vmatpush1.bf16.msra.mxu0 %v2469
  %3597 = vmatprep.subr.bf16.mxu0 %v2476
  %3598 = vmatpush1.bf16.msra.mxu0 %v2475
  %3599 = vmatprep.subr.bf16.mxu0 %v2482
  %3600 = vmatpush1.bf16.msra.mxu0 %v2481
  %3601 = vmatprep.subr.bf16.mxu0 %v2488
  %3602 = vmatpush1.bf16.msra.mxu0 %v2487
  %3603 = vmatprep.subr.bf16.mxu0 %v2494
  %3604 = vmatpush1.bf16.msra.mxu0 %v2493
  %3605 = vmatprep.subr.bf16.mxu0 %v2500
  %3606 = vmatpush1.bf16.msra.mxu0 %v2499
  %3607 = vmatprep.subr.bf16.mxu0 %v2506
  %3608 = vmatpush1.bf16.msra.mxu0 %v2505
  %3609 = vmatprep.subr.bf16.mxu0 %v2512
  %3610 = vmatpush1.bf16.msra.mxu0 %v2511
  %3611 = vmatprep.subr.bf16.mxu0 %v2518
  %3612 = vmatpush1.bf16.msra.mxu0 %v2517
  %3613 = vmatprep.subr.bf16.mxu0 %v2524
  %3614 = vmatpush1.bf16.msra.mxu0 %v2523
  %3615 = vmatprep.subr.bf16.mxu0 %v2530
  %3616 = vmatpush1.bf16.msra.mxu0 %v2529
  %3617 = vmatprep.subr.bf16.mxu0 %v2536
  %3618 = vmatpush1.bf16.msra.mxu0 %v2535
  %3619 = vmatprep.subr.bf16.mxu0 %v2542
  %3620 = vmatpush1.bf16.msra.mxu0 %v2541
  %3621 = vmatprep.subr.bf16.mxu0 %v2548
  %3622 = vmatpush1.bf16.msra.mxu0 %v2547
  %3623 = vmatprep.subr.bf16.mxu0 %v2554
  %3624 = vmatpush1.bf16.msra.mxu0 %v2553
  %3625 = vmatprep.subr.bf16.mxu0 %v2560
  %3626 = vmatpush1.bf16.msra.mxu0 %v2559
  %3627 = vmatprep.mubr.bf16.mxu0 %v3512
  %3628 = vmatmul.mubr.bf16.gmra.mrb[0].mxu0 %v3511
  %v3629 = vpop.f32.mrb[0].mxu0
  %v3630 = vadd.f32 0.0, %v3629
  %v3631 = vpop.f32.mrb[0].mxu0
  %v3632 = vadd.f32 0.0, %v3631
  %v3633 = vpop.f32.mrb[0].mxu0
  %v3634 = vpop.f32.mrb[0].mxu0
  %3635 = vdwg.mxu0
  %v3636 = vadd.f32 %v1920, %v3548
  %v3637 = vadd.f32 %v1922, %v3550
  %v3638 = vxor.u32 %v3636, 2147483648
  %v3639 = vxor.u32 %v3637, 2147483648
  %v3640 = vmul.f32 %v3638, 1.442695
  %v3641 = vpow.pop %v3640
  %v3642 = vmul.f32 %v3639, 1.442695
  %v3643 = vpow.pop %v3642
  %v3644 = vadd.f32 %v3641, 1.0
  %v3645 = vadd.f32 %v3643, 1.0
  %v3646 = vrcp.pop %v3644
  %v3647 = vmul.f32 1.0, %v3646
  %v3648 = vrcp.pop %v3645
  %v3649 = vmul.f32 1.0, %v3648
  %v3650 = vadd.f32 %v1993, %v3589
  %v3651 = vadd.f32 %v1995, %v3591
  %v3652 = vxor.u32 %v3650, 2147483648
  %v3653 = vxor.u32 %v3651, 2147483648
  %v3654 = vmul.f32 %v3652, 1.442695
  %v3655 = vpow.pop %v3654
  %v3656 = vmul.f32 %v3653, 1.442695
  %v3657 = vpow.pop %v3656
  %v3658 = vadd.f32 %v3655, 1.0
  %v3659 = vadd.f32 %v3657, 1.0
  %v3660 = vrcp.pop %v3658
  %v3661 = vmul.f32 1.0, %v3660
  %v3662 = vrcp.pop %v3659
  %v3663 = vmul.f32 1.0, %v3662
  %v3664 = vadd.f32 %v3630, %v2812
  %v3665 = vadd.f32 %v3632, %v2816
  %v3666 = vmul.f32 %v3647, %v3664
  %v3667 = vmul.f32 %v3649, %v3665
  %v3668 = vadd.f32 %v2066, %v3666
  %v3669 = vadd.f32 %v2068, %v3667
  %v3670 = vtanh.pop %v3668
  %v3671 = vtanh.pop %v3669
  %v3672 = vsub.f32 1.0, %v3661
  %v3673 = vsub.f32 1.0, %v3663
  %v3674 = vmul.f32 %v3672, %v3670
  %v3675 = vmul.f32 %v3673, %v3671
  %v3676 = vmul.f32 %v3661, %v3509
  %v3677 = vmul.f32 %v3663, %v3510
  %v3678 = vadd.f32 %v3674, %v3676
  %v3679 = vadd.f32 %v3675, %v3677
  %v3680 = vpack.c.bf16 %v3678, %v3678
  %v3681 = vpack.c.bf16 %v3679, %v3679
  %3682 = vmatprep.subr.bf16.mxu0 %v2466
  %3683 = vmatpush1.bf16.msra.mxu0 %v2465
  %3684 = vmatprep.subr.bf16.mxu0 %v2472
  %3685 = vmatpush1.bf16.msra.mxu0 %v2471
  %3686 = vmatprep.subr.bf16.mxu0 %v2478
  %3687 = vmatpush1.bf16.msra.mxu0 %v2477
  %3688 = vmatprep.subr.bf16.mxu0 %v2484
  %3689 = vmatpush1.bf16.msra.mxu0 %v2483
  %3690 = vmatprep.subr.bf16.mxu0 %v2490
  %3691 = vmatpush1.bf16.msra.mxu0 %v2489
  %3692 = vmatprep.subr.bf16.mxu0 %v2496
  %3693 = vmatpush1.bf16.msra.mxu0 %v2495
  %3694 = vmatprep.subr.bf16.mxu0 %v2502
  %3695 = vmatpush1.bf16.msra.mxu0 %v2501
  %3696 = vmatprep.subr.bf16.mxu0 %v2508
  %3697 = vmatpush1.bf16.msra.mxu0 %v2507
  %3698 = vmatprep.subr.bf16.mxu0 %v2514
  %3699 = vmatpush1.bf16.msra.mxu0 %v2513
  %3700 = vmatprep.subr.bf16.mxu0 %v2520
  %3701 = vmatpush1.bf16.msra.mxu0 %v2519
  %3702 = vmatprep.subr.bf16.mxu0 %v2526
  %3703 = vmatpush1.bf16.msra.mxu0 %v2525
  %3704 = vmatprep.subr.bf16.mxu0 %v2532
  %3705 = vmatpush1.bf16.msra.mxu0 %v2531
  %3706 = vmatprep.subr.bf16.mxu0 %v2538
  %3707 = vmatpush1.bf16.msra.mxu0 %v2537
  %3708 = vmatprep.subr.bf16.mxu0 %v2544
  %3709 = vmatpush1.bf16.msra.mxu0 %v2543
  %3710 = vmatprep.subr.bf16.mxu0 %v2550
  %3711 = vmatpush1.bf16.msra.mxu0 %v2549
  %3712 = vmatprep.subr.bf16.mxu0 %v2556
  %3713 = vmatpush1.bf16.msra.mxu0 %v2555
  %3714 = vmatprep.mubr.bf16.mxu0 %v3681
  %3715 = vmatmul.mubr.bf16.gmra.mrb[0].mxu0 %v3680
  %v3716 = vpop.f32.mrb[0].mxu0
  %v3717 = vadd.f32 0.0, %v3716
  %v3718 = vpop.f32.mrb[0].mxu0
  %v3719 = vadd.f32 0.0, %v3718
  %v3720 = vpop.f32.mrb[0].mxu0
  %v3721 = vpop.f32.mrb[0].mxu0
  %3722 = vdwg.mxu0
  %3723 = vmatprep.subr.bf16.mxu0 %v2468
  %3724 = vmatpush1.bf16.msra.mxu0 %v2467
  %3725 = vmatprep.subr.bf16.mxu0 %v2474
  %3726 = vmatpush1.bf16.msra.mxu0 %v2473
  %3727 = vmatprep.subr.bf16.mxu0 %v2480
  %3728 = vmatpush1.bf16.msra.mxu0 %v2479
  %3729 = vmatprep.subr.bf16.mxu0 %v2486
  %3730 = vmatpush1.bf16.msra.mxu0 %v2485
  %3731 = vmatprep.subr.bf16.mxu0 %v2492
  %3732 = vmatpush1.bf16.msra.mxu0 %v2491
  %3733 = vmatprep.subr.bf16.mxu0 %v2498
  %3734 = vmatpush1.bf16.msra.mxu0 %v2497
  %3735 = vmatprep.subr.bf16.mxu0 %v2504
  %3736 = vmatpush1.bf16.msra.mxu0 %v2503
  %3737 = vmatprep.subr.bf16.mxu0 %v2510
  %3738 = vmatpush1.bf16.msra.mxu0 %v2509
  %3739 = vmatprep.subr.bf16.mxu0 %v2516
  %3740 = vmatpush1.bf16.msra.mxu0 %v2515
  %3741 = vmatprep.subr.bf16.mxu0 %v2522
  %3742 = vmatpush1.bf16.msra.mxu0 %v2521
  %3743 = vmatprep.subr.bf16.mxu0 %v2528
  %3744 = vmatpush1.bf16.msra.mxu0 %v2527
  %3745 = vmatprep.subr.bf16.mxu0 %v2534
  %3746 = vmatpush1.bf16.msra.mxu0 %v2533
  %3747 = vmatprep.subr.bf16.mxu0 %v2540
  %3748 = vmatpush1.bf16.msra.mxu0 %v2539
  %3749 = vmatprep.subr.bf16.mxu0 %v2546
  %3750 = vmatpush1.bf16.msra.mxu0 %v2545
  %3751 = vmatprep.subr.bf16.mxu0 %v2552
  %3752 = vmatpush1.bf16.msra.mxu0 %v2551
  %3753 = vmatprep.subr.bf16.mxu0 %v2558
  %3754 = vmatpush1.bf16.msra.mxu0 %v2557
  %3755 = vmatprep.mubr.bf16.mxu0 %v3681
  %3756 = vmatmul.mubr.bf16.gmra.mrb[0].mxu0 %v3680
  %v3757 = vpop.f32.mrb[0].mxu0
  %v3758 = vadd.f32 0.0, %v3757
  %v3759 = vpop.f32.mrb[0].mxu0
  %v3760 = vadd.f32 0.0, %v3759
  %v3761 = vpop.f32.mrb[0].mxu0
  %v3762 = vpop.f32.mrb[0].mxu0
  %3763 = vdwg.mxu0
  %3764 = vmatprep.subr.bf16.mxu0 %v2470
  %3765 = vmatpush1.bf16.msra.mxu0 %v2469
  %3766 = vmatprep.subr.bf16.mxu0 %v2476
  %3767 = vmatpush1.bf16.msra.mxu0 %v2475
  %3768 = vmatprep.subr.bf16.mxu0 %v2482
  %3769 = vmatpush1.bf16.msra.mxu0 %v2481
  %3770 = vmatprep.subr.bf16.mxu0 %v2488
  %3771 = vmatpush1.bf16.msra.mxu0 %v2487
  %3772 = vmatprep.subr.bf16.mxu0 %v2494
  %3773 = vmatpush1.bf16.msra.mxu0 %v2493
  %3774 = vmatprep.subr.bf16.mxu0 %v2500
  %3775 = vmatpush1.bf16.msra.mxu0 %v2499
  %3776 = vmatprep.subr.bf16.mxu0 %v2506
  %3777 = vmatpush1.bf16.msra.mxu0 %v2505
  %3778 = vmatprep.subr.bf16.mxu0 %v2512
  %3779 = vmatpush1.bf16.msra.mxu0 %v2511
  %3780 = vmatprep.subr.bf16.mxu0 %v2518
  %3781 = vmatpush1.bf16.msra.mxu0 %v2517
  %3782 = vmatprep.subr.bf16.mxu0 %v2524
  %3783 = vmatpush1.bf16.msra.mxu0 %v2523
  %3784 = vmatprep.subr.bf16.mxu0 %v2530
  %3785 = vmatpush1.bf16.msra.mxu0 %v2529
  %3786 = vmatprep.subr.bf16.mxu0 %v2536
  %3787 = vmatpush1.bf16.msra.mxu0 %v2535
  %3788 = vmatprep.subr.bf16.mxu0 %v2542
  %3789 = vmatpush1.bf16.msra.mxu0 %v2541
  %3790 = vmatprep.subr.bf16.mxu0 %v2548
  %3791 = vmatpush1.bf16.msra.mxu0 %v2547
  %3792 = vmatprep.subr.bf16.mxu0 %v2554
  %3793 = vmatpush1.bf16.msra.mxu0 %v2553
  %3794 = vmatprep.subr.bf16.mxu0 %v2560
  %3795 = vmatpush1.bf16.msra.mxu0 %v2559
  %3796 = vmatprep.mubr.bf16.mxu0 %v3681
  %3797 = vmatmul.mubr.bf16.gmra.mrb[0].mxu0 %v3680
  %v3798 = vpop.f32.mrb[0].mxu0
  %v3799 = vadd.f32 0.0, %v3798
  %v3800 = vpop.f32.mrb[0].mxu0
  %v3801 = vadd.f32 0.0, %v3800
  %v3802 = vpop.f32.mrb[0].mxu0
  %v3803 = vpop.f32.mrb[0].mxu0
  %3804 = vdwg.mxu0
  %v3805 = vadd.f32 %v1926, %v3717
  %v3806 = vadd.f32 %v1928, %v3719
  %v3807 = vxor.u32 %v3805, 2147483648
  %v3808 = vxor.u32 %v3806, 2147483648
  %v3809 = vmul.f32 %v3807, 1.442695
  %v3810 = vpow.pop %v3809
  %v3811 = vmul.f32 %v3808, 1.442695
  %v3812 = vpow.pop %v3811
  %v3813 = vadd.f32 %v3810, 1.0
  %v3814 = vadd.f32 %v3812, 1.0
  %v3815 = vrcp.pop %v3813
  %v3816 = vmul.f32 1.0, %v3815
  %v3817 = vrcp.pop %v3814
  %v3818 = vmul.f32 1.0, %v3817
  %v3819 = vadd.f32 %v1999, %v3758
  %v3820 = vadd.f32 %v2001, %v3760
  %v3821 = vxor.u32 %v3819, 2147483648
  %v3822 = vxor.u32 %v3820, 2147483648
  %v3823 = vmul.f32 %v3821, 1.442695
  %v3824 = vpow.pop %v3823
  %v3825 = vmul.f32 %v3822, 1.442695
  %v3826 = vpow.pop %v3825
  %v3827 = vadd.f32 %v3824, 1.0
  %v3828 = vadd.f32 %v3826, 1.0
  %v3829 = vrcp.pop %v3827
  %v3830 = vmul.f32 1.0, %v3829
  %v3831 = vrcp.pop %v3828
  %v3832 = vmul.f32 1.0, %v3831
  %v3833 = vadd.f32 %v3799, %v2812
  %v3834 = vadd.f32 %v3801, %v2816
  %v3835 = vmul.f32 %v3816, %v3833
  %v3836 = vmul.f32 %v3818, %v3834
  %v3837 = vadd.f32 %v2072, %v3835
  %v3838 = vadd.f32 %v2074, %v3836
  %v3839 = vtanh.pop %v3837
  %v3840 = vtanh.pop %v3838
  %v3841 = vsub.f32 1.0, %v3830
  %v3842 = vsub.f32 1.0, %v3832
  %v3843 = vmul.f32 %v3841, %v3839
  %v3844 = vmul.f32 %v3842, %v3840
  %v3845 = vmul.f32 %v3830, %v3678
  %v3846 = vmul.f32 %v3832, %v3679
  %v3847 = vadd.f32 %v3843, %v3845
  %v3848 = vadd.f32 %v3844, %v3846
  %v3849 = vpack.c.bf16 %v3847, %v3847
  %v3850 = vpack.c.bf16 %v3848, %v3848
  %3851 = vmatprep.subr.bf16.mxu0 %v2466
  %3852 = vmatpush1.bf16.msra.mxu0 %v2465
  %3853 = vmatprep.subr.bf16.mxu0 %v2472
  %3854 = vmatpush1.bf16.msra.mxu0 %v2471
  %3855 = vmatprep.subr.bf16.mxu0 %v2478
  %3856 = vmatpush1.bf16.msra.mxu0 %v2477
  %3857 = vmatprep.subr.bf16.mxu0 %v2484
  %3858 = vmatpush1.bf16.msra.mxu0 %v2483
  %3859 = vmatprep.subr.bf16.mxu0 %v2490
  %3860 = vmatpush1.bf16.msra.mxu0 %v2489
  %3861 = vmatprep.subr.bf16.mxu0 %v2496
  %3862 = vmatpush1.bf16.msra.mxu0 %v2495
  %3863 = vmatprep.subr.bf16.mxu0 %v2502
  %3864 = vmatpush1.bf16.msra.mxu0 %v2501
  %3865 = vmatprep.subr.bf16.mxu0 %v2508
  %3866 = vmatpush1.bf16.msra.mxu0 %v2507
  %3867 = vmatprep.subr.bf16.mxu0 %v2514
  %3868 = vmatpush1.bf16.msra.mxu0 %v2513
  %3869 = vmatprep.subr.bf16.mxu0 %v2520
  %3870 = vmatpush1.bf16.msra.mxu0 %v2519
  %3871 = vmatprep.subr.bf16.mxu0 %v2526
  %3872 = vmatpush1.bf16.msra.mxu0 %v2525
  %3873 = vmatprep.subr.bf16.mxu0 %v2532
  %3874 = vmatpush1.bf16.msra.mxu0 %v2531
  %3875 = vmatprep.subr.bf16.mxu0 %v2538
  %3876 = vmatpush1.bf16.msra.mxu0 %v2537
  %3877 = vmatprep.subr.bf16.mxu0 %v2544
  %3878 = vmatpush1.bf16.msra.mxu0 %v2543
  %3879 = vmatprep.subr.bf16.mxu0 %v2550
  %3880 = vmatpush1.bf16.msra.mxu0 %v2549
  %3881 = vmatprep.subr.bf16.mxu0 %v2556
  %3882 = vmatpush1.bf16.msra.mxu0 %v2555
  %3883 = vmatprep.mubr.bf16.mxu0 %v3850
  %3884 = vmatmul.mubr.bf16.gmra.mrb[0].mxu0 %v3849
  %v3885 = vpop.f32.mrb[0].mxu0
  %v3886 = vadd.f32 0.0, %v3885
  %v3887 = vpop.f32.mrb[0].mxu0
  %v3888 = vadd.f32 0.0, %v3887
  %v3889 = vpop.f32.mrb[0].mxu0
  %v3890 = vpop.f32.mrb[0].mxu0
  %3891 = vdwg.mxu0
  %3892 = vmatprep.subr.bf16.mxu0 %v2468
  %3893 = vmatpush1.bf16.msra.mxu0 %v2467
  %3894 = vmatprep.subr.bf16.mxu0 %v2474
  %3895 = vmatpush1.bf16.msra.mxu0 %v2473
  %3896 = vmatprep.subr.bf16.mxu0 %v2480
  %3897 = vmatpush1.bf16.msra.mxu0 %v2479
  %3898 = vmatprep.subr.bf16.mxu0 %v2486
  %3899 = vmatpush1.bf16.msra.mxu0 %v2485
  %3900 = vmatprep.subr.bf16.mxu0 %v2492
  %3901 = vmatpush1.bf16.msra.mxu0 %v2491
  %3902 = vmatprep.subr.bf16.mxu0 %v2498
  %3903 = vmatpush1.bf16.msra.mxu0 %v2497
  %3904 = vmatprep.subr.bf16.mxu0 %v2504
  %3905 = vmatpush1.bf16.msra.mxu0 %v2503
  %3906 = vmatprep.subr.bf16.mxu0 %v2510
  %3907 = vmatpush1.bf16.msra.mxu0 %v2509
  %3908 = vmatprep.subr.bf16.mxu0 %v2516
  %3909 = vmatpush1.bf16.msra.mxu0 %v2515
  %3910 = vmatprep.subr.bf16.mxu0 %v2522
  %3911 = vmatpush1.bf16.msra.mxu0 %v2521
  %3912 = vmatprep.subr.bf16.mxu0 %v2528
  %3913 = vmatpush1.bf16.msra.mxu0 %v2527
  %3914 = vmatprep.subr.bf16.mxu0 %v2534
  %3915 = vmatpush1.bf16.msra.mxu0 %v2533
  %3916 = vmatprep.subr.bf16.mxu0 %v2540
  %3917 = vmatpush1.bf16.msra.mxu0 %v2539
  %3918 = vmatprep.subr.bf16.mxu0 %v2546
  %3919 = vmatpush1.bf16.msra.mxu0 %v2545
  %3920 = vmatprep.subr.bf16.mxu0 %v2552
  %3921 = vmatpush1.bf16.msra.mxu0 %v2551
  %3922 = vmatprep.subr.bf16.mxu0 %v2558
  %3923 = vmatpush1.bf16.msra.mxu0 %v2557
  %3924 = vmatprep.mubr.bf16.mxu0 %v3850
  %3925 = vmatmul.mubr.bf16.gmra.mrb[0].mxu0 %v3849
  %v3926 = vpop.f32.mrb[0].mxu0
  %v3927 = vadd.f32 0.0, %v3926
  %v3928 = vpop.f32.mrb[0].mxu0
  %v3929 = vadd.f32 0.0, %v3928
  %v3930 = vpop.f32.mrb[0].mxu0
  %v3931 = vpop.f32.mrb[0].mxu0
  %3932 = vdwg.mxu0
  %3933 = vmatprep.subr.bf16.mxu0 %v2470
  %3934 = vmatpush1.bf16.msra.mxu0 %v2469
  %3935 = vmatprep.subr.bf16.mxu0 %v2476
  %3936 = vmatpush1.bf16.msra.mxu0 %v2475
  %3937 = vmatprep.subr.bf16.mxu0 %v2482
  %3938 = vmatpush1.bf16.msra.mxu0 %v2481
  %3939 = vmatprep.subr.bf16.mxu0 %v2488
  %3940 = vmatpush1.bf16.msra.mxu0 %v2487
  %3941 = vmatprep.subr.bf16.mxu0 %v2494
  %3942 = vmatpush1.bf16.msra.mxu0 %v2493
  %3943 = vmatprep.subr.bf16.mxu0 %v2500
  %3944 = vmatpush1.bf16.msra.mxu0 %v2499
  %3945 = vmatprep.subr.bf16.mxu0 %v2506
  %3946 = vmatpush1.bf16.msra.mxu0 %v2505
  %3947 = vmatprep.subr.bf16.mxu0 %v2512
  %3948 = vmatpush1.bf16.msra.mxu0 %v2511
  %3949 = vmatprep.subr.bf16.mxu0 %v2518
  %3950 = vmatpush1.bf16.msra.mxu0 %v2517
  %3951 = vmatprep.subr.bf16.mxu0 %v2524
  %3952 = vmatpush1.bf16.msra.mxu0 %v2523
  %3953 = vmatprep.subr.bf16.mxu0 %v2530
  %3954 = vmatpush1.bf16.msra.mxu0 %v2529
  %3955 = vmatprep.subr.bf16.mxu0 %v2536
  %3956 = vmatpush1.bf16.msra.mxu0 %v2535
  %3957 = vmatprep.subr.bf16.mxu0 %v2542
  %3958 = vmatpush1.bf16.msra.mxu0 %v2541
  %3959 = vmatprep.subr.bf16.mxu0 %v2548
  %3960 = vmatpush1.bf16.msra.mxu0 %v2547
  %3961 = vmatprep.subr.bf16.mxu0 %v2554
  %3962 = vmatpush1.bf16.msra.mxu0 %v2553
  %3963 = vmatprep.subr.bf16.mxu0 %v2560
  %3964 = vmatpush1.bf16.msra.mxu0 %v2559
  %3965 = vmatprep.mubr.bf16.mxu0 %v3850
  %3966 = vmatmul.mubr.bf16.gmra.mrb[0].mxu0 %v3849
  %v3967 = vpop.f32.mrb[0].mxu0
  %v3968 = vadd.f32 0.0, %v3967
  %v3969 = vpop.f32.mrb[0].mxu0
  %v3970 = vadd.f32 0.0, %v3969
  %v3971 = vpop.f32.mrb[0].mxu0
  %v3972 = vpop.f32.mrb[0].mxu0
  %3973 = vdwg.mxu0
  %v3974 = vadd.f32 %v1930, %v3886
  %v3975 = vadd.f32 %v1932, %v3888
  %v3976 = vxor.u32 %v3974, 2147483648
  %v3977 = vxor.u32 %v3975, 2147483648
  %v3978 = vmul.f32 %v3976, 1.442695
  %v3979 = vpow.pop %v3978
  %v3980 = vmul.f32 %v3977, 1.442695
  %v3981 = vpow.pop %v3980
  %v3982 = vadd.f32 %v3979, 1.0
  %v3983 = vadd.f32 %v3981, 1.0
  %v3984 = vrcp.pop %v3982
  %v3985 = vmul.f32 1.0, %v3984
  %v3986 = vrcp.pop %v3983
  %v3987 = vmul.f32 1.0, %v3986
  %v3988 = vadd.f32 %v2003, %v3927
  %v3989 = vadd.f32 %v2005, %v3929
  %v3990 = vxor.u32 %v3988, 2147483648
  %v3991 = vxor.u32 %v3989, 2147483648
  %v3992 = vmul.f32 %v3990, 1.442695
  %v3993 = vpow.pop %v3992
  %v3994 = vmul.f32 %v3991, 1.442695
  %v3995 = vpow.pop %v3994
  %v3996 = vadd.f32 %v3993, 1.0
  %v3997 = vadd.f32 %v3995, 1.0
  %v3998 = vrcp.pop %v3996
  %v3999 = vmul.f32 1.0, %v3998
  %v4000 = vrcp.pop %v3997
  %v4001 = vmul.f32 1.0, %v4000
  %v4002 = vadd.f32 %v3968, %v2812
  %v4003 = vadd.f32 %v3970, %v2816
  %v4004 = vmul.f32 %v3985, %v4002
  %v4005 = vmul.f32 %v3987, %v4003
  %v4006 = vadd.f32 %v2076, %v4004
  %v4007 = vadd.f32 %v2078, %v4005
  %v4008 = vtanh.pop %v4006
  %v4009 = vtanh.pop %v4007
  %v4010 = vsub.f32 1.0, %v3999
  %v4011 = vsub.f32 1.0, %v4001
  %v4012 = vmul.f32 %v4010, %v4008
  %v4013 = vmul.f32 %v4011, %v4009
  %v4014 = vmul.f32 %v3999, %v3847
  %v4015 = vmul.f32 %v4001, %v3848
  %v4016 = vadd.f32 %v4012, %v4014
  %v4017 = vadd.f32 %v4013, %v4015
  %v4018 = vpack.c.bf16 %v3002, %v2833
  %v4019 = vpack.c.bf16 %v3003, %v2834
  %v4020 = vpack.c.bf16 %v3340, %v3171
  %v4021 = vpack.c.bf16 %v3341, %v3172
  %v4022 = vpack.c.bf16 %v3678, %v3509
  %v4023 = vpack.c.bf16 %v3679, %v3510
  %v4024 = vpack.c.bf16 %v4016, %v3847
  %v4025 = vpack.c.bf16 %v4017, %v3848
  %v4026 = vld [vmem:[%s9] sm:$0xff]
  %v4027 = vld [vmem:[%s9 + $0x8] sm:$0xff]
  %v4028 = vld [vmem:[%s9 + $0x10] sm:$0xff]
  %v4029 = vld [vmem:[%s9 + $0x18] sm:$0xff]
  %v4030 = vld [vmem:[%s9 + $0x20] sm:$0xff]
  %v4031 = vld [vmem:[%s9 + $0x28] sm:$0xff]
  %v4032 = vld [vmem:[%s9 + $0x30] sm:$0xff]
  %v4033 = vld [vmem:[%s9 + $0x38] sm:$0xff]
  %v4034 = vld [vmem:[%s9 + $0x40] sm:$0xff]
  %v4035 = vld [vmem:[%s9 + $0x48] sm:$0xff]
  %v4036 = vld [vmem:[%s9 + $0x50] sm:$0xff]
  %v4037 = vld [vmem:[%s9 + $0x58] sm:$0xff]
  %v4038 = vld [vmem:[%s9 + $0x60] sm:$0xff]
  %v4039 = vld [vmem:[%s9 + $0x68] sm:$0xff]
  %v4040 = vld [vmem:[%s9 + $0x70] sm:$0xff]
  %v4041 = vld [vmem:[%s9 + $0x78] sm:$0xff]
  %v4042 = vld [vmem:[%s9 + $0x80] sm:$0xff]
  %v4043 = vld [vmem:[%s9 + $0x88] sm:$0xff]
  %v4044 = vld [vmem:[%s9 + $0x90] sm:$0xff]
  %v4045 = vld [vmem:[%s9 + $0x98] sm:$0xff]
  %v4046 = vld [vmem:[%s9 + $0xa0] sm:$0xff]
  %v4047 = vld [vmem:[%s9 + $0xa8] sm:$0xff]
  %v4048 = vld [vmem:[%s9 + $0xb0] sm:$0xff]
  %v4049 = vld [vmem:[%s9 + $0xb8] sm:$0xff]
  %v4050 = vld [vmem:[%s9 + $0xc0] sm:$0xff]
  %v4051 = vld [vmem:[%s9 + $0xc8] sm:$0xff]
  %v4052 = vld [vmem:[%s9 + $0xd0] sm:$0xff]
  %v4053 = vld [vmem:[%s9 + $0xd8] sm:$0xff]
  %v4054 = vld [vmem:[%s9 + $0xe0] sm:$0xff]
  %v4055 = vld [vmem:[%s9 + $0xe8] sm:$0xff]
  %v4056 = vld [vmem:[%s9 + $0xf0] sm:$0xff]
  %v4057 = vld [vmem:[%s9 + $0xf8] sm:$0xff]
  %v4058 = vld [vmem:[%s10] sm:$0x3]
  %v4060 = vlaneseq
  %v4061 = vshrl.u32 %v4060, 7
  %v4062 = vsub.s32 0, %v4061
  %v4063 = vrot.slane %v4058, %v4062
  %v4064 = vlaneseq
  %v4065 = vshrl.u32 %v4064, 7
  %v4066 = vsub.s32 1, %v4065
  %v4067 = vrot.slane %v4058, %v4066
  %v4102 = vunpack.c.l.b16 %v4026
  %v4103 = vunpack.c.h.b16 %v4026
  %v4104 = vunpack.c.l.b16 %v4027
  %v4105 = vunpack.c.h.b16 %v4027
  %v4106 = vunpack.c.l.b16 %v4028
  %v4107 = vunpack.c.h.b16 %v4028
  %v4108 = vunpack.c.l.b16 %v4029
  %v4109 = vunpack.c.h.b16 %v4029
  %v4110 = vunpack.c.l.b16 %v4030
  %v4111 = vunpack.c.h.b16 %v4030
  %v4112 = vunpack.c.l.b16 %v4031
  %v4113 = vunpack.c.h.b16 %v4031
  %v4114 = vunpack.c.l.b16 %v4032
  %v4115 = vunpack.c.h.b16 %v4032
  %v4116 = vunpack.c.l.b16 %v4033
  %v4117 = vunpack.c.h.b16 %v4033
  %v4118 = vunpack.c.l.b16 %v4034
  %v4119 = vunpack.c.h.b16 %v4034
  %v4120 = vunpack.c.l.b16 %v4035
  %v4121 = vunpack.c.h.b16 %v4035
  %v4122 = vunpack.c.l.b16 %v4036
  %v4123 = vunpack.c.h.b16 %v4036
  %v4124 = vunpack.c.l.b16 %v4037
  %v4125 = vunpack.c.h.b16 %v4037
  %v4126 = vunpack.c.l.b16 %v4038
  %v4127 = vunpack.c.h.b16 %v4038
  %v4128 = vunpack.c.l.b16 %v4039
  %v4129 = vunpack.c.h.b16 %v4039
  %v4130 = vunpack.c.l.b16 %v4040
  %v4131 = vunpack.c.h.b16 %v4040
  %v4132 = vunpack.c.l.b16 %v4041
  %v4133 = vunpack.c.h.b16 %v4041
  %v4134 = vunpack.c.l.b16 %v4042
  %v4135 = vunpack.c.h.b16 %v4042
  %v4136 = vunpack.c.l.b16 %v4043
  %v4137 = vunpack.c.h.b16 %v4043
  %v4138 = vunpack.c.l.b16 %v4044
  %v4139 = vunpack.c.h.b16 %v4044
  %v4140 = vunpack.c.l.b16 %v4045
  %v4141 = vunpack.c.h.b16 %v4045
  %v4142 = vunpack.c.l.b16 %v4046
  %v4143 = vunpack.c.h.b16 %v4046
  %v4144 = vunpack.c.l.b16 %v4047
  %v4145 = vunpack.c.h.b16 %v4047
  %v4146 = vunpack.c.l.b16 %v4048
  %v4147 = vunpack.c.h.b16 %v4048
  %v4148 = vunpack.c.l.b16 %v4049
  %v4149 = vunpack.c.h.b16 %v4049
  %v4150 = vunpack.c.l.b16 %v4050
  %v4151 = vunpack.c.h.b16 %v4050
  %v4152 = vunpack.c.l.b16 %v4051
  %v4153 = vunpack.c.h.b16 %v4051
  %v4154 = vunpack.c.l.b16 %v4052
  %v4155 = vunpack.c.h.b16 %v4052
  %v4156 = vunpack.c.l.b16 %v4053
  %v4157 = vunpack.c.h.b16 %v4053
  %v4158 = vunpack.c.l.b16 %v4054
  %v4159 = vunpack.c.h.b16 %v4054
  %v4160 = vunpack.c.l.b16 %v4055
  %v4161 = vunpack.c.h.b16 %v4055
  %v4162 = vunpack.c.l.b16 %v4056
  %v4163 = vunpack.c.h.b16 %v4056
  %v4164 = vunpack.c.l.b16 %v4057
  %v4165 = vunpack.c.h.b16 %v4057
  %v4166 = vpack.c.b16 %v4104, %v4102
  %v4167 = vpack.c.b16 %v4105, %v4103
  %v4168 = vpack.c.b16 %v4108, %v4106
  %v4169 = vpack.c.b16 %v4109, %v4107
  %v4170 = vpack.c.b16 %v4112, %v4110
  %v4171 = vpack.c.b16 %v4113, %v4111
  %v4172 = vpack.c.b16 %v4116, %v4114
  %v4173 = vpack.c.b16 %v4117, %v4115
  %v4174 = vpack.c.b16 %v4120, %v4118
  %v4175 = vpack.c.b16 %v4121, %v4119
  %v4176 = vpack.c.b16 %v4124, %v4122
  %v4177 = vpack.c.b16 %v4125, %v4123
  %v4178 = vpack.c.b16 %v4128, %v4126
  %v4179 = vpack.c.b16 %v4129, %v4127
  %v4180 = vpack.c.b16 %v4132, %v4130
  %v4181 = vpack.c.b16 %v4133, %v4131
  %v4182 = vpack.c.b16 %v4136, %v4134
  %v4183 = vpack.c.b16 %v4137, %v4135
  %v4184 = vpack.c.b16 %v4140, %v4138
  %v4185 = vpack.c.b16 %v4141, %v4139
  %v4186 = vpack.c.b16 %v4144, %v4142
  %v4187 = vpack.c.b16 %v4145, %v4143
  %v4188 = vpack.c.b16 %v4148, %v4146
  %v4189 = vpack.c.b16 %v4149, %v4147
  %v4190 = vpack.c.b16 %v4152, %v4150
  %v4191 = vpack.c.b16 %v4153, %v4151
  %v4192 = vpack.c.b16 %v4156, %v4154
  %v4193 = vpack.c.b16 %v4157, %v4155
  %v4194 = vpack.c.b16 %v4160, %v4158
  %v4195 = vpack.c.b16 %v4161, %v4159
  %v4196 = vpack.c.b16 %v4164, %v4162
  %v4197 = vpack.c.b16 %v4165, %v4163
  %4230 = vmatprep.subr.bf16.mxu0 %v4167
  %4231 = vmatpush1.bf16.msra.mxu0 %v4166
  %4232 = vmatprep.subr.bf16.mxu0 %v4169
  %4233 = vmatpush1.bf16.msra.mxu0 %v4168
  %4234 = vmatprep.subr.bf16.mxu0 %v4171
  %4235 = vmatpush1.bf16.msra.mxu0 %v4170
  %4236 = vmatprep.subr.bf16.mxu0 %v4173
  %4237 = vmatpush1.bf16.msra.mxu0 %v4172
  %4238 = vmatprep.subr.bf16.mxu0 %v4175
  %4239 = vmatpush1.bf16.msra.mxu0 %v4174
  %4240 = vmatprep.subr.bf16.mxu0 %v4177
  %4241 = vmatpush1.bf16.msra.mxu0 %v4176
  %4242 = vmatprep.subr.bf16.mxu0 %v4179
  %4243 = vmatpush1.bf16.msra.mxu0 %v4178
  %4244 = vmatprep.subr.bf16.mxu0 %v4181
  %4245 = vmatpush1.bf16.msra.mxu0 %v4180
  %4246 = vmatprep.subr.bf16.mxu0 %v4183
  %4247 = vmatpush1.bf16.msra.mxu0 %v4182
  %4248 = vmatprep.subr.bf16.mxu0 %v4185
  %4249 = vmatpush1.bf16.msra.mxu0 %v4184
  %4250 = vmatprep.subr.bf16.mxu0 %v4187
  %4251 = vmatpush1.bf16.msra.mxu0 %v4186
  %4252 = vmatprep.subr.bf16.mxu0 %v4189
  %4253 = vmatpush1.bf16.msra.mxu0 %v4188
  %4254 = vmatprep.subr.bf16.mxu0 %v4191
  %4255 = vmatpush1.bf16.msra.mxu0 %v4190
  %4256 = vmatprep.subr.bf16.mxu0 %v4193
  %4257 = vmatpush1.bf16.msra.mxu0 %v4192
  %4258 = vmatprep.subr.bf16.mxu0 %v4195
  %4259 = vmatpush1.bf16.msra.mxu0 %v4194
  %4260 = vmatprep.subr.bf16.mxu0 %v4197
  %4261 = vmatpush1.bf16.msra.mxu0 %v4196
  %4262 = vmatprep.mubr.bf16.mxu0 %v4019
  %4263 = vmatmul.mubr.bf16.gmra.mrb[0].mxu0 %v4018
  %v4264 = vpop.f32.mrb[0].mxu0
  %v4265 = vadd.f32 %v4063, %v4264
  %v4266 = vpop.f32.mrb[0].mxu0
  %v4267 = vadd.f32 %v4067, %v4266
  %v4268 = vpop.f32.mrb[0].mxu0
  %v4269 = vadd.f32 %v4063, %v4268
  %v4270 = vpop.f32.mrb[0].mxu0
  %v4271 = vadd.f32 %v4067, %v4270
  %4272 = vmatprep.mubr.bf16.mxu0 %v4021
  %4273 = vmatmul.mubr.bf16.gmra.mrb[0].mxu0 %v4020
  %v4274 = vpop.f32.mrb[0].mxu0
  %v4275 = vadd.f32 %v4063, %v4274
  %v4276 = vpop.f32.mrb[0].mxu0
  %v4277 = vadd.f32 %v4067, %v4276
  %v4278 = vpop.f32.mrb[0].mxu0
  %v4279 = vadd.f32 %v4063, %v4278
  %v4280 = vpop.f32.mrb[0].mxu0
  %v4281 = vadd.f32 %v4067, %v4280
  %4282 = vmatprep.mubr.bf16.mxu0 %v4023
  %4283 = vmatmul.mubr.bf16.gmra.mrb[0].mxu0 %v4022
  %v4284 = vpop.f32.mrb[0].mxu0
  %v4285 = vadd.f32 %v4063, %v4284
  %v4286 = vpop.f32.mrb[0].mxu0
  %v4287 = vadd.f32 %v4067, %v4286
  %v4288 = vpop.f32.mrb[0].mxu0
  %v4289 = vadd.f32 %v4063, %v4288
  %v4290 = vpop.f32.mrb[0].mxu0
  %v4291 = vadd.f32 %v4067, %v4290
  %4292 = vmatprep.mubr.bf16.mxu0 %v4025
  %4293 = vmatmul.mubr.bf16.gmra.mrb[0].mxu0 %v4024
  %v4294 = vpop.f32.mrb[0].mxu0
  %v4295 = vadd.f32 %v4063, %v4294
  %v4296 = vpop.f32.mrb[0].mxu0
  %v4297 = vadd.f32 %v4067, %v4296
  %v4298 = vpop.f32.mrb[0].mxu0
  %v4299 = vadd.f32 %v4063, %v4298
  %v4300 = vpop.f32.mrb[0].mxu0
  %v4301 = vadd.f32 %v4067, %v4300
  %4302 = vdwg.mxu0
  %4303 = vst [vmem:[%s11] sm:$0xff] %v4265
  %4304 = vst [vmem:[%s11 + $0x8] sm:$0xff] %v4267
  %4305 = vst [vmem:[%s11 + $0x10] sm:$0xff] %v4269
  %4306 = vst [vmem:[%s11 + $0x18] sm:$0xff] %v4271
  %4307 = vst [vmem:[%s11 + $0x20] sm:$0xff] %v4275
  %4308 = vst [vmem:[%s11 + $0x28] sm:$0xff] %v4277
  %4309 = vst [vmem:[%s11 + $0x30] sm:$0xff] %v4279
  %4310 = vst [vmem:[%s11 + $0x38] sm:$0xff] %v4281
  %4311 = vst [vmem:[%s11 + $0x40] sm:$0xff] %v4285
  %4312 = vst [vmem:[%s11 + $0x48] sm:$0xff] %v4287
  %4313 = vst [vmem:[%s11 + $0x50] sm:$0xff] %v4289
  %4314 = vst [vmem:[%s11 + $0x58] sm:$0xff] %v4291
  %4315 = vst [vmem:[%s11 + $0x60] sm:$0xff] %v4295
  %4316 = vst [vmem:[%s11 + $0x68] sm:$0xff] %v4297
  %4317 = vst [vmem:[%s11 + $0x70] sm:$0xff] %v4299
  %4318 = vst [vmem:[%s11 + $0x78] sm:$0xff] %v4301
  // Predicated region
  $region46: #{nar_forward.1} parent=0 // pred_check
    _
  $region47: #{nar_forward.1} parent=0 // pred_check_branch
    %4320 = sbr.rel (0) target = $region49
  $region48: #{nar_forward.1} parent=0 // pred_region
    _
  $region49: #{nar_forward.1} parent=0 // pred_fallthru
    _
  // Predicated region
  $region50: #{nar_forward.1} parent=0 // pred_check
    _
  $region51: #{nar_forward.1} parent=0 // pred_check_branch
    %4322 = sbr.rel (0) target = $region53
  $region52: #{nar_forward.1} parent=0 // pred_region
    _
  $region53: #{nar_forward.1} parent=0 // pred_fallthru
    _

</llo_original>
